<compile_context>
chip_gen: v7x
topology: tpu7x:2x2x1
jax: 0.10.0
libtpu: 0.0.40
codegen_flags: <defaults>
</compile_context>

<pallas_src>
import functools
import math

import jax
import jax.numpy as jnp
from jax.experimental import pallas as pl
from jax.experimental.pallas import tpu as pltpu


_NEG_INF = -1e30
_LN_EPS = 1e-5


# ------------------------------------------------------------------
# Small helpers
# ------------------------------------------------------------------

@functools.lru_cache(maxsize=None)
def _vmem_limit():
    """Generation-aware scoped-VMEM budget (~25% headroom)."""
    try:
        info = pltpu.get_tpu_info()
        cap = getattr(info, "vmem_capacity_bytes", None)
        if cap:
            return int(cap) * 3 // 4
    except Exception:
        pass
    return 48 * 1024 * 1024  # safe on v5e / v6e / v7x


def _row_tile(m, target=512):
    if m <= target:
        return m
    for t in range(target, 7, -8):
        if m % t == 0:
            return t
    return target  # ragged last block handled by pallas (writes are clipped)


def _q_tile(n, row_bytes, target_bytes=8 << 20, max_rows=512):
    """Query-row tile: full n if it fits, else a multiple of 8 dividing n."""
    limit = max(8, min(max_rows, target_bytes // max(row_bytes, 1)))
    if n <= limit:
        return n
    t = limit - (limit % 8)
    while t >= 8:
        if n % t == 0:
            return t
        t -= 8
    return n


def _bf16(x):
    return x if x.dtype == jnp.bfloat16 else x.astype(jnp.bfloat16)


def _mdot(a, b):
    """MXU matmul: bf16 operands, f32 accumulate."""
    return jnp.dot(_bf16(a), _bf16(b), preferred_element_type=jnp.float32)


def _mdot_nt(a, b):
    """a @ b.T (contract last dims) without an in-kernel transpose."""
    return jax.lax.dot_general(_bf16(a), _bf16(b), (((1,), (1,)), ((), ())),
                               preferred_element_type=jnp.float32)


def _ln(x, gamma, beta, eps=_LN_EPS):
    mu = jnp.mean(x, axis=-1, keepdims=True)
    var = jnp.mean((x - mu) ** 2, axis=-1, keepdims=True)
    return (x - mu) * jax.lax.rsqrt(var + eps) * gamma + beta


# ------------------------------------------------------------------
# Tiled linear / 2-layer MLP kernels (projections, input encoder, output MLP,
# SE3 scalar net)
# ------------------------------------------------------------------

def _linear_kernel(x_ref, w_ref, b_ref, o_ref, *, activation):
    y = jnp.dot(_bf16(x_ref[...]), w_ref[...],
                preferred_element_type=jnp.float32) + b_ref[...]
    if activation == "relu":
        y = jnp.maximum(y, 0.0)
    elif activation == "silu":
        y = y * jax.nn.sigmoid(y)
    o_ref[...] = y


def pallas_linear(x, w, b, activation="none", max_tile=512):
    *lead, K = x.shape
    N = w.shape[1]
    x2 = x.reshape(-1, K)
    M = x2.shape[0]
    TM = _row_tile(M, max_tile)
    out = pl.pallas_call(
        functools.partial(_linear_kernel, activation=activation),
        out_shape=jax.ShapeDtypeStruct((M, N), jnp.float32),
        grid=(pl.cdiv(M, TM),),
        in_specs=[
            pl.BlockSpec((TM, K), lambda i: (i, 0)),
            pl.BlockSpec((K, N), lambda i: (0, 0)),
            pl.BlockSpec((1, N), lambda i: (0, 0)),
        ],
        out_specs=pl.BlockSpec((TM, N), lambda i: (i, 0)),
        compiler_params=pltpu.CompilerParams(dimension_semantics=("parallel",)),
    )(x2, w.astype(jnp.bfloat16), b.reshape(1, N))
    return out.reshape(*lead, N)


def _mlp2_kernel(x_ref, w1_ref, b1_ref, w2_ref, b2_ref, o_ref, *, activation):
    t = jnp.dot(_bf16(x_ref[...]), w1_ref[...],
                preferred_element_type=jnp.float32) + b1_ref[...]
    if activation == "relu":
        t = jnp.maximum(t, 0.0)
    elif activation == "silu":
        t = t * jax.nn.sigmoid(t)
    o_ref[...] = (jnp.dot(_bf16(t), w2_ref[...],
                          preferred_element_type=jnp.float32) + b2_ref[...])


def pallas_mlp2(x, w1, b1, w2, b2, activation="relu", max_tile=512):
    *lead, K = x.shape
    H1 = w1.shape[1]
    N = w2.shape[1]
    x2 = x.reshape(-1, K)
    M = x2.shape[0]
    TM = _row_tile(M, max_tile)
    out = pl.pallas_call(
        functools.partial(_mlp2_kernel, activation=activation),
        out_shape=jax.ShapeDtypeStruct((M, N), jnp.float32),
        grid=(pl.cdiv(M, TM),),
        in_specs=[
            pl.BlockSpec((TM, K), lambda i: (i, 0)),
            pl.BlockSpec((K, H1), lambda i: (0, 0)),
            pl.BlockSpec((1, H1), lambda i: (0, 0)),
            pl.BlockSpec((H1, N), lambda i: (0, 0)),
            pl.BlockSpec((1, N), lambda i: (0, 0)),
        ],
        out_specs=pl.BlockSpec((TM, N), lambda i: (i, 0)),
        compiler_params=pltpu.CompilerParams(dimension_semantics=("parallel",)),
    )(x2, w1.astype(jnp.bfloat16), b1.reshape(1, H1),
      w2.astype(jnp.bfloat16), b2.reshape(1, N))
    return out.reshape(*lead, N)


# ------------------------------------------------------------------
# GraphAttentionLayer: row-tiled attention kernel (grid = (B, N//TQ))
# ------------------------------------------------------------------

def _gat_attn_kernel(q_ref, kv_ref, hres_ref, f0_ref, f1_ref, f2_ref, f3_ref,
                     adj_ref, we1_ref, be1_ref, we2_ref, be2_ref, g_ref,
                     beta_ref, o_ref, acc_ref, *, num_heads, head_dim):
    D = num_heads * head_dim
    scale = 1.0 / math.sqrt(head_dim)

    q = q_ref[0]                      # (TQ, D)
    kv = kv_ref[0]                    # (N, 2D)
    k = kv[:, :D]
    v = kv[:, D:]
    TQ = q.shape[0]
    N = kv.shape[0]

    # edge-MLP layer 1 as 4 broadcast FMAs (K=4 matmul would waste MXU rows)
    we1 = we1_ref[...]                # (4, D) f32
    e1 = be1_ref[...].reshape(1, 1, D)
    for f_ref, row in ((f0_ref, 0), (f1_ref, 1), (f2_ref, 2), (f3_ref, 3)):
        e1 = e1 + f_ref[0][:, :, None] * we1[row:row + 1].reshape(1, 1, D)
    e1 = jnp.maximum(e1, 0.0)         # (TQ, N, D)
    # edge-MLP layer 2: dense matmul on the MXU (bf16 operands, f32 acc)
    ee = (_mdot(e1.reshape(TQ * N, D), we2_ref[...]).reshape(TQ, N, D)
          + be2_ref[...].reshape(1, 1, D))

    # q-weighted edge embeddings; per-head lane-group sums give the edge bias
    prod = ee * q[:, None, :]         # (TQ, N, D)

    mask = adj_ref[0] != 0.0          # hoisted out of the head loop

    for hh in range(num_heads):
        lo, hi = hh * head_dim, (hh + 1) * head_dim
        s = _mdot_nt(q[:, lo:hi], k[:, lo:hi]) * scale
        s = s + jnp.sum(prod[:, :, lo:hi], axis=-1)
        s = jnp.where(mask, s, _NEG_INF)
        s = s - jnp.max(s, axis=-1, keepdims=True)
        p = jnp.exp(s)
        p = p * pl.reciprocal(jnp.sum(p, axis=-1, keepdims=True), approx=True)
        acc_ref[:, lo:hi] = _mdot(p, v[:, lo:hi])   # lane-slice store, no concat

    out = acc_ref[...] + hres_ref[0]                # residual (in_dim == out_dim)
    o_ref[0] = _ln(out, g_ref[...], beta_ref[...])


def gat_forward(p, h, adjacency, edge_planes, num_heads):
    B, N, D = h.shape
    Dh = D // num_heads
    bond, dn, cosd, sind = edge_planes

    # Q / KV projections as pipelined tiled linears (row-parallel).
    q = pallas_linear(h, p["wq"], p["bq"])            # (B, N, D)
    kv = pallas_linear(h, p["wkv"], p["bkv"])          # (B, N, 2D)

    # row tile chosen so the three (TQ,N,D) f32 intermediates stay VMEM-bounded
    TQ = _q_tile(N, row_bytes=3 * N * D * 4)

    kernel = functools.partial(_gat_attn_kernel, num_heads=num_heads,
                               head_dim=Dh)
    return pl.pallas_call(
        kernel,
        out_shape=jax.ShapeDtypeStruct((B, N, D), jnp.float32),
        grid=(B, N // TQ),
        in_specs=[
            pl.BlockSpec((1, TQ, D), lambda b, i: (b, i, 0)),        # q rows
            pl.BlockSpec((1, N, 2 * D), lambda b, i: (b, 0, 0)),     # all keys/vals
            pl.BlockSpec((1, TQ, D), lambda b, i: (b, i, 0)),        # residual h
            pl.BlockSpec((1, TQ, N), lambda b, i: (b, i, 0)),        # bond
            pl.BlockSpec((1, TQ, N), lambda b, i: (b, i, 0)),        # dist/dmax
            pl.BlockSpec((1, TQ, N), lambda b, i: (b, i, 0)),        # cos(pi d)
            pl.BlockSpec((1, TQ, N), lambda b, i: (b, i, 0)),        # sin(pi d)
            pl.BlockSpec((1, TQ, N), lambda b, i: (b, i, 0)),        # adjacency
            pl.BlockSpec((4, D), lambda b, i: (0, 0)),               # we1 (f32)
            pl.BlockSpec((1, D), lambda b, i: (0, 0)),               # be1
            pl.BlockSpec((D, D), lambda b, i: (0, 0)),               # we2 (bf16)
            pl.BlockSpec((1, D), lambda b, i: (0, 0)),               # be2
            pl.BlockSpec((1, D), lambda b, i: (0, 0)),               # ln gamma
            pl.BlockSpec((1, D), lambda b, i: (0, 0)),               # ln beta
        ],
        out_specs=pl.BlockSpec((1, TQ, D), lambda b, i: (b, i, 0)),
        scratch_shapes=[pltpu.VMEM((TQ, D), jnp.float32)],
        compiler_params=pltpu.CompilerParams(
            dimension_semantics=("parallel", "parallel"),
            vmem_limit_bytes=_vmem_limit()),
    )(q, kv, h, bond, dn, cosd, sind, adjacency,
      p["we1"], p["be1"].reshape(1, D),
      p["we2"].astype(jnp.bfloat16), p["be2"].reshape(1, D),
      p["ng"].reshape(1, D), p["nb"].reshape(1, D))


# ------------------------------------------------------------------
# MultiheadAttention (fusion + global): row-tiled attention kernel
# ------------------------------------------------------------------

def _mha_core(q, kv, acc_ref, num_heads, head_dim):
    E = num_heads * head_dim
    scale = 1.0 / math.sqrt(head_dim)
    k = kv[:, :E]
    v = kv[:, E:]
    for hh in range(num_heads):
        lo, hi = hh * head_dim, (hh + 1) * head_dim
        s = _mdot_nt(q[:, lo:hi], k[:, lo:hi]) * scale
        s = s - jnp.max(s, axis=-1, keepdims=True)
        p = jnp.exp(s)
        p = p * pl.reciprocal(jnp.sum(p, axis=-1, keepdims=True), approx=True)
        acc_ref[:, lo:hi] = _mdot(p, v[:, lo:hi])   # lane-slice store, no concat


def _mha_kernel(q_ref, kv_ref, wo_ref, bo_ref, o_ref, acc_ref,
                *, num_heads, head_dim):
    _mha_core(q_ref[0], kv_ref[0], acc_ref, num_heads, head_dim)
    o_ref[0] = _mdot(acc_ref[...], wo_ref[...]) + bo_ref[...]


def _mha_res_ln_kernel(q_ref, kv_ref, res_ref, wo_ref, bo_ref, g_ref, b_ref,
                       o_ref, acc_ref, *, num_heads, head_dim):
    _mha_core(q_ref[0], kv_ref[0], acc_ref, num_heads, head_dim)
    y = _mdot(acc_ref[...], wo_ref[...]) + bo_ref[...] + res_ref[0]
    o_ref[0] = _ln(y, g_ref[...], b_ref[...])


def mha_forward(p, q_in, kv_in, num_heads, residual=None, ln=None):
    """nn.MultiheadAttention (batch_first=True, eval).  key == value tensor.
    If residual/ln are given, fuses the LN(residual + attn_out) epilogue."""
    B, Nq, E = q_in.shape
    Nk = kv_in.shape[1]
    Dh = E // num_heads

    q = pallas_linear(q_in, p["wq"], p["bq"])          # (B, Nq, E)
    kv = pallas_linear(kv_in, p["wkv"], p["bkv"])       # (B, Nk, 2E)

    TQ = _q_tile(Nq, row_bytes=(Nk + 4 * E) * 4)
    wo = p["wo"].astype(jnp.bfloat16)
    bo = p["bo"].reshape(1, E)

    qkv_specs = [pl.BlockSpec((1, TQ, E), lambda b, i: (b, i, 0)),
                 pl.BlockSpec((1, Nk, 2 * E), lambda b, i: (b, 0, 0))]
    w_specs = [pl.BlockSpec((E, E), lambda b, i: (0, 0)),
               pl.BlockSpec((1, E), lambda b, i: (0, 0))]

    if residual is not None:
        kernel = functools.partial(_mha_res_ln_kernel, num_heads=num_heads,
                                   head_dim=Dh)
        in_specs = (qkv_specs
                    + [pl.BlockSpec((1, TQ, E), lambda b, i: (b, i, 0))]
                    + w_specs
                    + [pl.BlockSpec((1, E), lambda b, i: (0, 0))] * 2)
        args = [q, kv, residual, wo, bo,
                ln[0].reshape(1, E), ln[1].reshape(1, E)]
    else:
        kernel = functools.partial(_mha_kernel, num_heads=num_heads,
                                   head_dim=Dh)
        in_specs = qkv_specs + w_specs
        args = [q, kv, wo, bo]

    return pl.pallas_call(
        kernel,
        out_shape=jax.ShapeDtypeStruct((B, Nq, E), jnp.float32),
        grid=(B, Nq // TQ),
        in_specs=in_specs,
        out_specs=pl.BlockSpec((1, TQ, E), lambda b, i: (b, i, 0)),
        scratch_shapes=[pltpu.VMEM((TQ, E), jnp.float32)],
        compiler_params=pltpu.CompilerParams(
            dimension_semantics=("parallel", "parallel"),
            vmem_limit_bytes=_vmem_limit()),
    )(*args)


# ------------------------------------------------------------------
# Encoder forward
# ------------------------------------------------------------------

def encoder_forward(params, node_features, coordinates, adjacency, bond_types,
                    atom_mask, num_heads):
    h = pallas_linear(node_features, params["inp"]["w"], params["inp"]["b"])

    # pairwise distances via the Gram trick (lane-dense, no (B,N,N,3) tensor)
    sq = jnp.sum(coordinates * coordinates, axis=-1)                 # (B, N)
    gram = jnp.einsum("bic,bjc->bij", coordinates, coordinates)      # (B, N, N)
    d2 = jnp.maximum(sq[:, :, None] + sq[:, None, :] - 2.0 * gram, 0.0)
    distances = jnp.sqrt(d2)

    # lane-dense edge-feature planes, computed once (as in the reference)
    dn = distances / (jnp.max(distances) + 1e-6)
    cosd = jnp.cos(distances * math.pi)
    sind = jnp.sin(distances * math.pi)
    edge_planes = (bond_types, dn, cosd, sind)

    for lp in params["layers"]:
        # SE3 layer: only the scalar branch is live -- the vector branch feeds
        # vector_magnitude, which the reference slices away via
        # enhanced_geometric[..., :hidden].
        geo_scalar = pallas_mlp2(h, lp["se3"]["ws1"], lp["se3"]["bs1"],
                                 lp["se3"]["ws2"], lp["se3"]["bs2"],
                                 activation="silu")
        topo = gat_forward(lp["gat"], h, adjacency, edge_planes, num_heads)
        # fused: h = LayerNorm(h + MHA(geo_scalar, topo, topo))
        h = mha_forward(lp["fusion"], geo_scalar, topo, num_heads,
                        residual=h, ln=(lp["ln_g"], lp["ln_b"]))

    h = pallas_mlp2(h, params["op"]["w1"], params["op"]["b1"],
                    params["op"]["w2"], params["op"]["b2"], activation="relu")

    global_repr = mha_forward(params["global"], h, h, num_heads)

    mask_exp = atom_mask[..., None].astype(jnp.float32)
    counts = jnp.sum(atom_mask.astype(jnp.float32), axis=1, keepdims=True)
    return jnp.sum(global_repr * mask_exp, axis=1) / (counts + 1e-8)


# ------------------------------------------------------------------
# Deterministic parameter initialization (synthetic, no checkpoint)
# ------------------------------------------------------------------

class _KeyGen:
    def __init__(self, key):
        self._key = key

    def __call__(self):
        self._key, sub = jax.random.split(self._key)
        return sub


def init_params(key, input_dim, hidden, output_dim, num_layers):
    kg = _KeyGen(key)

    def lin(din, dout):
        w = jax.random.normal(kg(), (din, dout), jnp.float32) / math.sqrt(din)
        return w, jnp.zeros((dout,), jnp.float32)

    wi, bi = lin(input_dim, hidden)
    params = {"inp": {"w": wi, "b": bi}, "layers": []}

    for _ in range(num_layers):
        # SE3: only the (live) scalar net.  vector_net / attention_net feed the
        # vector branch that the encoder forward discards.
        ws1, bs1 = lin(hidden, hidden)
        ws2, bs2 = lin(hidden, hidden)
        se3 = {"ws1": ws1, "bs1": bs1, "ws2": ws2, "bs2": bs2}

        wq, bq = lin(hidden, hidden)
        wk, bk = lin(hidden, hidden)
        wv, bv = lin(hidden, hidden)
        we1, be1 = lin(4, hidden)
        we2, be2 = lin(hidden, hidden)
        gat = {"wq": wq, "bq": bq,
               "wkv": jnp.concatenate([wk, wv], axis=1),
               "bkv": jnp.concatenate([bk, bv], axis=0),
               "we1": we1, "be1": be1, "we2": we2, "be2": be2,
               "ng": jnp.ones((hidden,), jnp.float32),
               "nb": jnp.zeros((hidden,), jnp.float32)}

        fwq, fbq = lin(hidden, hidden)
        fwk, fbk = lin(hidden, hidden)
        fwv, fbv = lin(hidden, hidden)
        fwo, fbo = lin(hidden, hidden)
        fusion = {"wq": fwq, "bq": fbq,
                  "wkv": jnp.concatenate([fwk, fwv], axis=1),
                  "bkv": jnp.concatenate([fbk, fbv], axis=0),
                  "wo": fwo, "bo": fbo}

        params["layers"].append({"se3": se3, "gat": gat, "fusion": fusion,
                                 "ln_g": jnp.ones((hidden,), jnp.float32),
                                 "ln_b": jnp.zeros((hidden,), jnp.float32)})

    w1, b1 = lin(hidden, hidden)
    w2, b2 = lin(hidden, output_dim)
    params["op"] = {"w1": w1, "b1": b1, "w2": w2, "b2": b2}

    gwq, gbq = lin(output_dim, output_dim)
    gwk, gbk = lin(output_dim, output_dim)
    gwv, gbv = lin(output_dim, output_dim)
    gwo, gbo = lin(output_dim, output_dim)
    params["global"] = {"wq": gwq, "bq": gbq,
                        "wkv": jnp.concatenate([gwk, gwv], axis=1),
                        "bkv": jnp.concatenate([gbk, gbv], axis=0),
                        "wo": gwo, "bo": gbo}
    return params


# ------------------------------------------------------------------
# Demo
# ------------------------------------------------------------------

if __name__ == "__main__":
    B, N = 2, 8
    input_dim, hidden_dim, output_dim = 32, 32, 32
    num_layers, num_heads = 2, 4

    root = jax.random.PRNGKey(0)
    k_p, k_nf, k_co, k_ad, k_bt = jax.random.split(root, 5)

    params = init_params(k_p, input_dim, hidden_dim, output_dim, num_layers)

    node_features = jax.random.normal(k_nf, (B, N, input_dim), jnp.float32)
    coordinates = jax.random.normal(k_co, (B, N, 3), jnp.float32)

    adj = (jax.random.uniform(k_ad, (B, N, N)) > 0.5).astype(jnp.float32)
    adj = jnp.maximum(adj, jnp.transpose(adj, (0, 2, 1)))
    adjacency = jnp.maximum(adj, jnp.eye(N, dtype=jnp.float32)[None])  # self-loops

    bond_types = jnp.floor(
        jax.random.uniform(k_bt, (B, N, N)) * 3.0).astype(jnp.float32)
    atom_mask = jnp.array([[1.0] * N, [1.0] * 6 + [0.0] * 2], dtype=jnp.float32)

    fwd = jax.jit(functools.partial(encoder_forward, num_heads=num_heads))
    out = fwd(params, node_features, coordinates, adjacency, bond_types,
              atom_mask)
    jax.block_until_ready(out)
    assert out.shape == (B, output_dim)
    assert bool(jnp.all(jnp.isfinite(out)))
    # TODO(synk): dropout layers are treated as eval-mode identities (no RNG drop).
    print("KERNEL_OK")
</pallas_src>

<mosaic_0001>
module attributes {stable_mosaic.version = 11 : i64} {
  func.func @_gat_attn_kernel(%arg0: i32, %arg1: i32, %arg2: memref<1x8x32xf32, #tpu.memory_space<vmem>>, %arg3: memref<1x8x64xf32, #tpu.memory_space<vmem>>, %arg4: memref<1x8x32xf32, #tpu.memory_space<vmem>>, %arg5: memref<1x8x8xf32, #tpu.memory_space<vmem>>, %arg6: memref<1x8x8xf32, #tpu.memory_space<vmem>>, %arg7: memref<1x8x8xf32, #tpu.memory_space<vmem>>, %arg8: memref<1x8x8xf32, #tpu.memory_space<vmem>>, %arg9: memref<1x8x8xf32, #tpu.memory_space<vmem>>, %arg10: memref<4x32xf32, #tpu.memory_space<vmem>>, %arg11: memref<1x32xf32, #tpu.memory_space<vmem>>, %arg12: memref<32x32xbf16, #tpu.memory_space<vmem>>, %arg13: memref<1x32xf32, #tpu.memory_space<vmem>>, %arg14: memref<1x32xf32, #tpu.memory_space<vmem>>, %arg15: memref<1x32xf32, #tpu.memory_space<vmem>>, %arg16: memref<1x8x32xf32, #tpu.memory_space<vmem>>, %arg17: memref<8x32xf32, #tpu.memory_space<vmem>>) attributes {dimension_semantics = [#tpu.dimension_semantics<parallel>, #tpu.dimension_semantics<parallel>], iteration_bounds = array<i64: 2, 1>, scalar_prefetch = 0 : i64, scratch_operands = 1 : i64, tpu.core_type = #tpu.core_type<tc>, window_params = [{transform_indices = @transform_0, window_bounds = array<i64: 1, 8, 32>}, {transform_indices = @transform_1, window_bounds = array<i64: 1, 8, 64>}, {transform_indices = @transform_2, window_bounds = array<i64: 1, 8, 32>}, {transform_indices = @transform_3, window_bounds = array<i64: 1, 8, 8>}, {transform_indices = @transform_4, window_bounds = array<i64: 1, 8, 8>}, {transform_indices = @transform_5, window_bounds = array<i64: 1, 8, 8>}, {transform_indices = @transform_6, window_bounds = array<i64: 1, 8, 8>}, {transform_indices = @transform_7, window_bounds = array<i64: 1, 8, 8>}, {pipeline_mode = #tpu.pipeline_mode<synchronous>, transform_indices = @transform_8, window_bounds = array<i64: 4, 32>}, {pipeline_mode = #tpu.pipeline_mode<synchronous>, transform_indices = @transform_9, window_bounds = array<i64: 1, 32>}, {pipeline_mode = #tpu.pipeline_mode<synchronous>, transform_indices = @transform_10, window_bounds = array<i64: 32, 32>}, {pipeline_mode = #tpu.pipeline_mode<synchronous>, transform_indices = @transform_11, window_bounds = array<i64: 1, 32>}, {pipeline_mode = #tpu.pipeline_mode<synchronous>, transform_indices = @transform_12, window_bounds = array<i64: 1, 32>}, {pipeline_mode = #tpu.pipeline_mode<synchronous>, transform_indices = @transform_13, window_bounds = array<i64: 1, 32>}, {transform_indices = @transform_14, window_bounds = array<i64: 1, 8, 32>}]} {
    %c0 = arith.constant 0 : index
    %c0_0 = arith.constant 0 : index
    %c0_1 = arith.constant 0 : index
    %0 = vector.load %arg2[%c0, %c0_0, %c0_1] : memref<1x8x32xf32, #tpu.memory_space<vmem>>, vector<1x8x32xf32>
    %1 = vector.shape_cast %0 : vector<1x8x32xf32> to vector<8x32xf32>
    %c0_2 = arith.constant 0 : index
    %c0_3 = arith.constant 0 : index
    %c0_4 = arith.constant 0 : index
    %2 = vector.load %arg3[%c0_2, %c0_3, %c0_4] : memref<1x8x64xf32, #tpu.memory_space<vmem>>, vector<1x8x64xf32>
    %3 = vector.shape_cast %2 : vector<1x8x64xf32> to vector<8x64xf32>
    %4 = vector.extract_strided_slice %3 {offsets = [0, 0], sizes = [8, 32], strides = [1, 1]} : vector<8x64xf32> to vector<8x32xf32>
    %5 = vector.extract_strided_slice %3 {offsets = [0, 32], sizes = [8, 32], strides = [1, 1]} : vector<8x64xf32> to vector<8x32xf32>
    %c0_5 = arith.constant 0 : index
    %c0_6 = arith.constant 0 : index
    %6 = vector.load %arg10[%c0_5, %c0_6] : memref<4x32xf32, #tpu.memory_space<vmem>>, vector<4x32xf32>
    %c0_7 = arith.constant 0 : index
    %c0_8 = arith.constant 0 : index
    %7 = vector.load %arg11[%c0_7, %c0_8] : memref<1x32xf32, #tpu.memory_space<vmem>>, vector<1x32xf32>
    %8 = vector.shape_cast %7 : vector<1x32xf32> to vector<1x1x32xf32>
    %c0_9 = arith.constant 0 : index
    %c0_10 = arith.constant 0 : index
    %c0_11 = arith.constant 0 : index
    %9 = vector.load %arg5[%c0_9, %c0_10, %c0_11] : memref<1x8x8xf32, #tpu.memory_space<vmem>>, vector<1x8x8xf32>
    %10 = vector.shape_cast %9 : vector<1x8x8xf32> to vector<8x8xf32>
    %11 = vector.shape_cast %10 : vector<8x8xf32> to vector<8x8x1xf32>
    %12 = vector.extract_strided_slice %6 {offsets = [0, 0], sizes = [1, 32], strides = [1, 1]} : vector<4x32xf32> to vector<1x32xf32>
    %13 = vector.shape_cast %12 : vector<1x32xf32> to vector<1x1x32xf32>
    %14 = vector.broadcast %11 : vector<8x8x1xf32> to vector<8x8x32xf32>
    %15 = vector.broadcast %13 : vector<1x1x32xf32> to vector<8x8x32xf32>
    %16 = arith.mulf %14, %15 : vector<8x8x32xf32>
    %17 = vector.broadcast %8 : vector<1x1x32xf32> to vector<8x8x32xf32>
    %18 = arith.addf %17, %16 : vector<8x8x32xf32>
    %c0_12 = arith.constant 0 : index
    %c0_13 = arith.constant 0 : index
    %c0_14 = arith.constant 0 : index
    %19 = vector.load %arg6[%c0_12, %c0_13, %c0_14] : memref<1x8x8xf32, #tpu.memory_space<vmem>>, vector<1x8x8xf32>
    %20 = vector.shape_cast %19 : vector<1x8x8xf32> to vector<8x8xf32>
    %21 = vector.shape_cast %20 : vector<8x8xf32> to vector<8x8x1xf32>
    %22 = vector.extract_strided_slice %6 {offsets = [1, 0], sizes = [1, 32], strides = [1, 1]} : vector<4x32xf32> to vector<1x32xf32>
    %23 = vector.shape_cast %22 : vector<1x32xf32> to vector<1x1x32xf32>
    %24 = vector.broadcast %21 : vector<8x8x1xf32> to vector<8x8x32xf32>
    %25 = vector.broadcast %23 : vector<1x1x32xf32> to vector<8x8x32xf32>
    %26 = arith.mulf %24, %25 : vector<8x8x32xf32>
    %27 = arith.addf %18, %26 : vector<8x8x32xf32>
    %c0_15 = arith.constant 0 : index
    %c0_16 = arith.constant 0 : index
    %c0_17 = arith.constant 0 : index
    %28 = vector.load %arg7[%c0_15, %c0_16, %c0_17] : memref<1x8x8xf32, #tpu.memory_space<vmem>>, vector<1x8x8xf32>
    %29 = vector.shape_cast %28 : vector<1x8x8xf32> to vector<8x8xf32>
    %30 = vector.shape_cast %29 : vector<8x8xf32> to vector<8x8x1xf32>
    %31 = vector.extract_strided_slice %6 {offsets = [2, 0], sizes = [1, 32], strides = [1, 1]} : vector<4x32xf32> to vector<1x32xf32>
    %32 = vector.shape_cast %31 : vector<1x32xf32> to vector<1x1x32xf32>
    %33 = vector.broadcast %30 : vector<8x8x1xf32> to vector<8x8x32xf32>
    %34 = vector.broadcast %32 : vector<1x1x32xf32> to vector<8x8x32xf32>
    %35 = arith.mulf %33, %34 : vector<8x8x32xf32>
    %36 = arith.addf %27, %35 : vector<8x8x32xf32>
    %c0_18 = arith.constant 0 : index
    %c0_19 = arith.constant 0 : index
    %c0_20 = arith.constant 0 : index
    %37 = vector.load %arg8[%c0_18, %c0_19, %c0_20] : memref<1x8x8xf32, #tpu.memory_space<vmem>>, vector<1x8x8xf32>
    %38 = vector.shape_cast %37 : vector<1x8x8xf32> to vector<8x8xf32>
    %39 = vector.shape_cast %38 : vector<8x8xf32> to vector<8x8x1xf32>
    %40 = vector.extract_strided_slice %6 {offsets = [3, 0], sizes = [1, 32], strides = [1, 1]} : vector<4x32xf32> to vector<1x32xf32>
    %41 = vector.shape_cast %40 : vector<1x32xf32> to vector<1x1x32xf32>
    %42 = vector.broadcast %39 : vector<8x8x1xf32> to vector<8x8x32xf32>
    %43 = vector.broadcast %41 : vector<1x1x32xf32> to vector<8x8x32xf32>
    %44 = arith.mulf %42, %43 : vector<8x8x32xf32>
    %45 = arith.addf %36, %44 : vector<8x8x32xf32>
    %cst = arith.constant 0.000000e+00 : f32
    %46 = vector.broadcast %cst : f32 to vector<8x8x32xf32>
    %47 = arith.maximumf %45, %46 : vector<8x8x32xf32>
    %48 = vector.shape_cast %47 : vector<8x8x32xf32> to vector<64x32xf32>
    %c0_21 = arith.constant 0 : index
    %c0_22 = arith.constant 0 : index
    %49 = vector.load %arg12[%c0_21, %c0_22] : memref<32x32xbf16, #tpu.memory_space<vmem>>, vector<32x32xbf16>
    %50 = arith.truncf %48 : vector<64x32xf32> to vector<64x32xbf16>
    %cst_23 = arith.constant dense<0.000000e+00> : vector<64x32xf32>
    %51 = tpu.matmul %50, %49, %cst_23 {dimension_numbers = #tpu.dot_dimension_numbers<[1], [0], [0], [1], [0, 0, 1, 1], [], []>} : vector<64x32xbf16>, vector<32x32xbf16>, vector<64x32xf32> -> vector<64x32xf32>
    %52 = vector.shape_cast %51 : vector<64x32xf32> to vector<8x8x32xf32>
    %c0_24 = arith.constant 0 : index
    %c0_25 = arith.constant 0 : index
    %53 = vector.load %arg13[%c0_24, %c0_25] : memref<1x32xf32, #tpu.memory_space<vmem>>, vector<1x32xf32>
    %54 = vector.shape_cast %53 : vector<1x32xf32> to vector<1x1x32xf32>
    %55 = vector.broadcast %54 : vector<1x1x32xf32> to vector<8x8x32xf32>
    %56 = arith.addf %52, %55 : vector<8x8x32xf32>
    %57 = vector.shape_cast %1 : vector<8x32xf32> to vector<8x1x32xf32>
    %58 = vector.broadcast %57 : vector<8x1x32xf32> to vector<8x8x32xf32>
    %59 = arith.mulf %56, %58 : vector<8x8x32xf32>
    %c0_26 = arith.constant 0 : index
    %c0_27 = arith.constant 0 : index
    %c0_28 = arith.constant 0 : index
    %60 = vector.load %arg9[%c0_26, %c0_27, %c0_28] : memref<1x8x8xf32, #tpu.memory_space<vmem>>, vector<1x8x8xf32>
    %61 = vector.shape_cast %60 : vector<1x8x8xf32> to vector<8x8xf32>
    %cst_29 = arith.constant 0.000000e+00 : f32
    %62 = vector.broadcast %cst_29 : f32 to vector<8x8xf32>
    %63 = arith.cmpf one, %61, %62 : vector<8x8xf32>
    %64 = vector.extract_strided_slice %1 {offsets = [0, 0], sizes = [8, 8], strides = [1, 1]} : vector<8x32xf32> to vector<8x8xf32>
    %65 = vector.extract_strided_slice %4 {offsets = [0, 0], sizes = [8, 8], strides = [1, 1]} : vector<8x32xf32> to vector<8x8xf32>
    %66 = arith.truncf %64 : vector<8x8xf32> to vector<8x8xbf16>
    %67 = arith.truncf %65 : vector<8x8xf32> to vector<8x8xbf16>
    %cst_30 = arith.constant dense<0.000000e+00> : vector<8x8xf32>
    %68 = tpu.matmul %66, %67, %cst_30 {dimension_numbers = #tpu.dot_dimension_numbers<[1], [1], [0], [0], [0, 0, 1, 0], [], []>} : vector<8x8xbf16>, vector<8x8xbf16>, vector<8x8xf32> -> vector<8x8xf32>
    %cst_31 = arith.constant 0.353553385 : f32
    %69 = vector.broadcast %cst_31 : f32 to vector<8x8xf32>
    %70 = arith.mulf %68, %69 : vector<8x8xf32>
    %71 = vector.extract_strided_slice %59 {offsets = [0, 0, 0], sizes = [8, 8, 8], strides = [1, 1, 1]} : vector<8x8x32xf32> to vector<8x8x8xf32>
    %cst_32 = arith.constant dense<0.000000e+00> : vector<8x8xf32>
    %72 = vector.multi_reduction <add>, %71, %cst_32 [2] : vector<8x8x8xf32> to vector<8x8xf32>
    %73 = arith.addf %70, %72 : vector<8x8xf32>
    %cst_33 = arith.constant -1.000000e+30 : f32
    %74 = vector.broadcast %cst_33 : f32 to vector<8x8xf32>
    %75 = arith.select %63, %73, %74 : vector<8x8xi1>, vector<8x8xf32>
    %cst_34 = arith.constant dense<0xFF800000> : vector<8xf32>
    %76 = vector.multi_reduction <maximumf>, %75, %cst_34 [1] : vector<8x8xf32> to vector<8xf32>
    %77 = vector.shape_cast %76 : vector<8xf32> to vector<8x1xf32>
    %78 = vector.broadcast %77 : vector<8x1xf32> to vector<8x8xf32>
    %79 = arith.subf %75, %78 : vector<8x8xf32>
    %80 = math.exp %79 : vector<8x8xf32>
    %cst_35 = arith.constant dense<0.000000e+00> : vector<8xf32>
    %81 = vector.multi_reduction <add>, %80, %cst_35 [1] : vector<8x8xf32> to vector<8xf32>
    %82 = vector.shape_cast %81 : vector<8xf32> to vector<8x1xf32>
    %83 = tpu.reciprocal %82 {approx = true} : vector<8x1xf32> -> vector<8x1xf32>
    %84 = vector.broadcast %83 : vector<8x1xf32> to vector<8x8xf32>
    %85 = arith.mulf %80, %84 : vector<8x8xf32>
    %86 = vector.extract_strided_slice %5 {offsets = [0, 0], sizes = [8, 8], strides = [1, 1]} : vector<8x32xf32> to vector<8x8xf32>
    %87 = arith.truncf %85 : vector<8x8xf32> to vector<8x8xbf16>
    %88 = arith.truncf %86 : vector<8x8xf32> to vector<8x8xbf16>
    %cst_36 = arith.constant dense<0.000000e+00> : vector<8x8xf32>
    %89 = tpu.matmul %87, %88, %cst_36 {dimension_numbers = #tpu.dot_dimension_numbers<[1], [0], [0], [1], [0, 0, 1, 1], [], []>} : vector<8x8xbf16>, vector<8x8xbf16>, vector<8x8xf32> -> vector<8x8xf32>
    %c0_37 = arith.constant 0 : index
    %c0_38 = arith.constant 0 : index
    %90 = vector.load %arg17[%c0_37, %c0_38] : memref<8x32xf32, #tpu.memory_space<vmem>>, vector<8x8xf32>
    tpu.vector_store %arg17[%c0_37, %c0_38], %89 {strides = array<i32>} : memref<8x32xf32, #tpu.memory_space<vmem>>, vector<8x8xf32>,
    %91 = vector.extract_strided_slice %1 {offsets = [0, 8], sizes = [8, 8], strides = [1, 1]} : vector<8x32xf32> to vector<8x8xf32>
    %92 = vector.extract_strided_slice %4 {offsets = [0, 8], sizes = [8, 8], strides = [1, 1]} : vector<8x32xf32> to vector<8x8xf32>
    %93 = arith.truncf %91 : vector<8x8xf32> to vector<8x8xbf16>
    %94 = arith.truncf %92 : vector<8x8xf32> to vector<8x8xbf16>
    %cst_39 = arith.constant dense<0.000000e+00> : vector<8x8xf32>
    %95 = tpu.matmul %93, %94, %cst_39 {dimension_numbers = #tpu.dot_dimension_numbers<[1], [1], [0], [0], [0, 0, 1, 0], [], []>} : vector<8x8xbf16>, vector<8x8xbf16>, vector<8x8xf32> -> vector<8x8xf32>
    %cst_40 = arith.constant 0.353553385 : f32
    %96 = vector.broadcast %cst_40 : f32 to vector<8x8xf32>
    %97 = arith.mulf %95, %96 : vector<8x8xf32>
    %98 = vector.extract_strided_slice %59 {offsets = [0, 0, 8], sizes = [8, 8, 8], strides = [1, 1, 1]} : vector<8x8x32xf32> to vector<8x8x8xf32>
    %cst_41 = arith.constant dense<0.000000e+00> : vector<8x8xf32>
    %99 = vector.multi_reduction <add>, %98, %cst_41 [2] : vector<8x8x8xf32> to vector<8x8xf32>
    %100 = arith.addf %97, %99 : vector<8x8xf32>
    %cst_42 = arith.constant -1.000000e+30 : f32
    %101 = vector.broadcast %cst_42 : f32 to vector<8x8xf32>
    %102 = arith.select %63, %100, %101 : vector<8x8xi1>, vector<8x8xf32>
    %cst_43 = arith.constant dense<0xFF800000> : vector<8xf32>
    %103 = vector.multi_reduction <maximumf>, %102, %cst_43 [1] : vector<8x8xf32> to vector<8xf32>
    %104 = vector.shape_cast %103 : vector<8xf32> to vector<8x1xf32>
    %105 = vector.broadcast %104 : vector<8x1xf32> to vector<8x8xf32>
    %106 = arith.subf %102, %105 : vector<8x8xf32>
    %107 = math.exp %106 : vector<8x8xf32>
    %cst_44 = arith.constant dense<0.000000e+00> : vector<8xf32>
    %108 = vector.multi_reduction <add>, %107, %cst_44 [1] : vector<8x8xf32> to vector<8xf32>
    %109 = vector.shape_cast %108 : vector<8xf32> to vector<8x1xf32>
    %110 = tpu.reciprocal %109 {approx = true} : vector<8x1xf32> -> vector<8x1xf32>
    %111 = vector.broadcast %110 : vector<8x1xf32> to vector<8x8xf32>
    %112 = arith.mulf %107, %111 : vector<8x8xf32>
    %113 = vector.extract_strided_slice %5 {offsets = [0, 8], sizes = [8, 8], strides = [1, 1]} : vector<8x32xf32> to vector<8x8xf32>
    %114 = arith.truncf %112 : vector<8x8xf32> to vector<8x8xbf16>
    %115 = arith.truncf %113 : vector<8x8xf32> to vector<8x8xbf16>
    %cst_45 = arith.constant dense<0.000000e+00> : vector<8x8xf32>
    %116 = tpu.matmul %114, %115, %cst_45 {dimension_numbers = #tpu.dot_dimension_numbers<[1], [0], [0], [1], [0, 0, 1, 1], [], []>} : vector<8x8xbf16>, vector<8x8xbf16>, vector<8x8xf32> -> vector<8x8xf32>
    %c0_46 = arith.constant 0 : index
    %c8 = arith.constant 8 : index
    %117 = vector.load %arg17[%c0_46, %c8] : memref<8x32xf32, #tpu.memory_space<vmem>>, vector<8x8xf32>
    tpu.vector_store %arg17[%c0_46, %c8], %116 {strides = array<i32>} : memref<8x32xf32, #tpu.memory_space<vmem>>, vector<8x8xf32>,
    %118 = vector.extract_strided_slice %1 {offsets = [0, 16], sizes = [8, 8], strides = [1, 1]} : vector<8x32xf32> to vector<8x8xf32>
    %119 = vector.extract_strided_slice %4 {offsets = [0, 16], sizes = [8, 8], strides = [1, 1]} : vector<8x32xf32> to vector<8x8xf32>
    %120 = arith.truncf %118 : vector<8x8xf32> to vector<8x8xbf16>
    %121 = arith.truncf %119 : vector<8x8xf32> to vector<8x8xbf16>
    %cst_47 = arith.constant dense<0.000000e+00> : vector<8x8xf32>
    %122 = tpu.matmul %120, %121, %cst_47 {dimension_numbers = #tpu.dot_dimension_numbers<[1], [1], [0], [0], [0, 0, 1, 0], [], []>} : vector<8x8xbf16>, vector<8x8xbf16>, vector<8x8xf32> -> vector<8x8xf32>
    %cst_48 = arith.constant 0.353553385 : f32
    %123 = vector.broadcast %cst_48 : f32 to vector<8x8xf32>
    %124 = arith.mulf %122, %123 : vector<8x8xf32>
    %125 = vector.extract_strided_slice %59 {offsets = [0, 0, 16], sizes = [8, 8, 8], strides = [1, 1, 1]} : vector<8x8x32xf32> to vector<8x8x8xf32>
    %cst_49 = arith.constant dense<0.000000e+00> : vector<8x8xf32>
    %126 = vector.multi_reduction <add>, %125, %cst_49 [2] : vector<8x8x8xf32> to vector<8x8xf32>
    %127 = arith.addf %124, %126 : vector<8x8xf32>
    %cst_50 = arith.constant -1.000000e+30 : f32
    %128 = vector.broadcast %cst_50 : f32 to vector<8x8xf32>
    %129 = arith.select %63, %127, %128 : vector<8x8xi1>, vector<8x8xf32>
    %cst_51 = arith.constant dense<0xFF800000> : vector<8xf32>
    %130 = vector.multi_reduction <maximumf>, %129, %cst_51 [1] : vector<8x8xf32> to vector<8xf32>
    %131 = vector.shape_cast %130 : vector<8xf32> to vector<8x1xf32>
    %132 = vector.broadcast %131 : vector<8x1xf32> to vector<8x8xf32>
    %133 = arith.subf %129, %132 : vector<8x8xf32>
    %134 = math.exp %133 : vector<8x8xf32>
    %cst_52 = arith.constant dense<0.000000e+00> : vector<8xf32>
    %135 = vector.multi_reduction <add>, %134, %cst_52 [1] : vector<8x8xf32> to vector<8xf32>
    %136 = vector.shape_cast %135 : vector<8xf32> to vector<8x1xf32>
    %137 = tpu.reciprocal %136 {approx = true} : vector<8x1xf32> -> vector<8x1xf32>
    %138 = vector.broadcast %137 : vector<8x1xf32> to vector<8x8xf32>
    %139 = arith.mulf %134, %138 : vector<8x8xf32>
    %140 = vector.extract_strided_slice %5 {offsets = [0, 16], sizes = [8, 8], strides = [1, 1]} : vector<8x32xf32> to vector<8x8xf32>
    %141 = arith.truncf %139 : vector<8x8xf32> to vector<8x8xbf16>
    %142 = arith.truncf %140 : vector<8x8xf32> to vector<8x8xbf16>
    %cst_53 = arith.constant dense<0.000000e+00> : vector<8x8xf32>
    %143 = tpu.matmul %141, %142, %cst_53 {dimension_numbers = #tpu.dot_dimension_numbers<[1], [0], [0], [1], [0, 0, 1, 1], [], []>} : vector<8x8xbf16>, vector<8x8xbf16>, vector<8x8xf32> -> vector<8x8xf32>
    %c0_54 = arith.constant 0 : index
    %c16 = arith.constant 16 : index
    %144 = vector.load %arg17[%c0_54, %c16] : memref<8x32xf32, #tpu.memory_space<vmem>>, vector<8x8xf32>
    tpu.vector_store %arg17[%c0_54, %c16], %143 {strides = array<i32>} : memref<8x32xf32, #tpu.memory_space<vmem>>, vector<8x8xf32>,
    %145 = vector.extract_strided_slice %1 {offsets = [0, 24], sizes = [8, 8], strides = [1, 1]} : vector<8x32xf32> to vector<8x8xf32>
    %146 = vector.extract_strided_slice %4 {offsets = [0, 24], sizes = [8, 8], strides = [1, 1]} : vector<8x32xf32> to vector<8x8xf32>
    %147 = arith.truncf %145 : vector<8x8xf32> to vector<8x8xbf16>
    %148 = arith.truncf %146 : vector<8x8xf32> to vector<8x8xbf16>
    %cst_55 = arith.constant dense<0.000000e+00> : vector<8x8xf32>
    %149 = tpu.matmul %147, %148, %cst_55 {dimension_numbers = #tpu.dot_dimension_numbers<[1], [1], [0], [0], [0, 0, 1, 0], [], []>} : vector<8x8xbf16>, vector<8x8xbf16>, vector<8x8xf32> -> vector<8x8xf32>
    %cst_56 = arith.constant 0.353553385 : f32
    %150 = vector.broadcast %cst_56 : f32 to vector<8x8xf32>
    %151 = arith.mulf %149, %150 : vector<8x8xf32>
    %152 = vector.extract_strided_slice %59 {offsets = [0, 0, 24], sizes = [8, 8, 8], strides = [1, 1, 1]} : vector<8x8x32xf32> to vector<8x8x8xf32>
    %cst_57 = arith.constant dense<0.000000e+00> : vector<8x8xf32>
    %153 = vector.multi_reduction <add>, %152, %cst_57 [2] : vector<8x8x8xf32> to vector<8x8xf32>
    %154 = arith.addf %151, %153 : vector<8x8xf32>
    %cst_58 = arith.constant -1.000000e+30 : f32
    %155 = vector.broadcast %cst_58 : f32 to vector<8x8xf32>
    %156 = arith.select %63, %154, %155 : vector<8x8xi1>, vector<8x8xf32>
    %cst_59 = arith.constant dense<0xFF800000> : vector<8xf32>
    %157 = vector.multi_reduction <maximumf>, %156, %cst_59 [1] : vector<8x8xf32> to vector<8xf32>
    %158 = vector.shape_cast %157 : vector<8xf32> to vector<8x1xf32>
    %159 = vector.broadcast %158 : vector<8x1xf32> to vector<8x8xf32>
    %160 = arith.subf %156, %159 : vector<8x8xf32>
    %161 = math.exp %160 : vector<8x8xf32>
    %cst_60 = arith.constant dense<0.000000e+00> : vector<8xf32>
    %162 = vector.multi_reduction <add>, %161, %cst_60 [1] : vector<8x8xf32> to vector<8xf32>
    %163 = vector.shape_cast %162 : vector<8xf32> to vector<8x1xf32>
    %164 = tpu.reciprocal %163 {approx = true} : vector<8x1xf32> -> vector<8x1xf32>
    %165 = vector.broadcast %164 : vector<8x1xf32> to vector<8x8xf32>
    %166 = arith.mulf %161, %165 : vector<8x8xf32>
    %167 = vector.extract_strided_slice %5 {offsets = [0, 24], sizes = [8, 8], strides = [1, 1]} : vector<8x32xf32> to vector<8x8xf32>
    %168 = arith.truncf %166 : vector<8x8xf32> to vector<8x8xbf16>
    %169 = arith.truncf %167 : vector<8x8xf32> to vector<8x8xbf16>
    %cst_61 = arith.constant dense<0.000000e+00> : vector<8x8xf32>
    %170 = tpu.matmul %168, %169, %cst_61 {dimension_numbers = #tpu.dot_dimension_numbers<[1], [0], [0], [1], [0, 0, 1, 1], [], []>} : vector<8x8xbf16>, vector<8x8xbf16>, vector<8x8xf32> -> vector<8x8xf32>
    %c0_62 = arith.constant 0 : index
    %c24 = arith.constant 24 : index
    %171 = vector.load %arg17[%c0_62, %c24] : memref<8x32xf32, #tpu.memory_space<vmem>>, vector<8x8xf32>
    tpu.vector_store %arg17[%c0_62, %c24], %170 {strides = array<i32>} : memref<8x32xf32, #tpu.memory_space<vmem>>, vector<8x8xf32>,
    %c0_63 = arith.constant 0 : index
    %c0_64 = arith.constant 0 : index
    %172 = vector.load %arg17[%c0_63, %c0_64] : memref<8x32xf32, #tpu.memory_space<vmem>>, vector<8x32xf32>
    %c0_65 = arith.constant 0 : index
    %c0_66 = arith.constant 0 : index
    %c0_67 = arith.constant 0 : index
    %173 = vector.load %arg4[%c0_65, %c0_66, %c0_67] : memref<1x8x32xf32, #tpu.memory_space<vmem>>, vector<1x8x32xf32>
    %174 = vector.shape_cast %173 : vector<1x8x32xf32> to vector<8x32xf32>
    %175 = arith.addf %172, %174 : vector<8x32xf32>
    %c0_68 = arith.constant 0 : index
    %c0_69 = arith.constant 0 : index
    %176 = vector.load %arg14[%c0_68, %c0_69] : memref<1x32xf32, #tpu.memory_space<vmem>>, vector<1x32xf32>
    %c0_70 = arith.constant 0 : index
    %c0_71 = arith.constant 0 : index
    %177 = vector.load %arg15[%c0_70, %c0_71] : memref<1x32xf32, #tpu.memory_space<vmem>>, vector<1x32xf32>
    %cst_72 = arith.constant dense<0.000000e+00> : vector<8xf32>
    %178 = vector.multi_reduction <add>, %175, %cst_72 [1] : vector<8x32xf32> to vector<8xf32>
    %179 = vector.shape_cast %178 : vector<8xf32> to vector<8x1xf32>
    %cst_73 = arith.constant 3.200000e+01 : f32
    %180 = vector.broadcast %cst_73 : f32 to vector<8x1xf32>
    %181 = arith.divf %179, %180 : vector<8x1xf32>
    %182 = vector.broadcast %181 : vector<8x1xf32> to vector<8x32xf32>
    %183 = arith.subf %175, %182 : vector<8x32xf32>
    %184 = arith.mulf %183, %183 : vector<8x32xf32>
    %cst_74 = arith.constant dense<0.000000e+00> : vector<8xf32>
    %185 = vector.multi_reduction <add>, %184, %cst_74 [1] : vector<8x32xf32> to vector<8xf32>
    %186 = vector.shape_cast %185 : vector<8xf32> to vector<8x1xf32>
    %cst_75 = arith.constant 3.200000e+01 : f32
    %187 = vector.broadcast %cst_75 : f32 to vector<8x1xf32>
    %188 = arith.divf %186, %187 : vector<8x1xf32>
    %189 = vector.broadcast %181 : vector<8x1xf32> to vector<8x32xf32>
    %190 = arith.subf %175, %189 : vector<8x32xf32>
    %cst_76 = arith.constant 9.99999974E-6 : f32
    %191 = vector.broadcast %cst_76 : f32 to vector<8x1xf32>
    %192 = arith.addf %188, %191 : vector<8x1xf32>
    %193 = math.rsqrt %192 : vector<8x1xf32>
    %194 = vector.broadcast %193 : vector<8x1xf32> to vector<8x32xf32>
    %195 = arith.mulf %190, %194 : vector<8x32xf32>
    %196 = vector.broadcast %176 : vector<1x32xf32> to vector<8x32xf32>
    %197 = arith.mulf %195, %196 : vector<8x32xf32>
    %198 = vector.broadcast %177 : vector<1x32xf32> to vector<8x32xf32>
    %199 = arith.addf %197, %198 : vector<8x32xf32>
    %c0_77 = arith.constant 0 : index
    %c0_78 = arith.constant 0 : index
    %c0_79 = arith.constant 0 : index
    %200 = vector.load %arg16[%c0_77, %c0_78, %c0_79] : memref<1x8x32xf32, #tpu.memory_space<vmem>>, vector<1x8x32xf32>
    %201 = vector.shape_cast %200 : vector<1x8x32xf32> to vector<8x32xf32>
    %202 = vector.shape_cast %199 : vector<8x32xf32> to vector<1x8x32xf32>
    tpu.vector_store %arg16[%c0_77, %c0_78, %c0_79], %202 {strides = array<i32>} : memref<1x8x32xf32, #tpu.memory_space<vmem>>, vector<1x8x32xf32>,
    return
  }
  func.func @transform_0(%arg0: i32, %arg1: i32) -> (i32, i32, i32) {
    %c0_i32 = arith.constant 0 : i32
    %c0_i32_0 = arith.constant 0 : i32
    return %arg0, %arg1, %c0_i32 : i32, i32, i32
  }
  func.func @transform_1(%arg0: i32, %arg1: i32) -> (i32, i32, i32) {
    %c0_i32 = arith.constant 0 : i32
    %c0_i32_0 = arith.constant 0 : i32
    %c0_i32_1 = arith.constant 0 : i32
    return %arg0, %c0_i32, %c0_i32_0 : i32, i32, i32
  }
  func.func @transform_2(%arg0: i32, %arg1: i32) -> (i32, i32, i32) {
    %c0_i32 = arith.constant 0 : i32
    %c0_i32_0 = arith.constant 0 : i32
    return %arg0, %arg1, %c0_i32 : i32, i32, i32
  }
  func.func @transform_3(%arg0: i32, %arg1: i32) -> (i32, i32, i32) {
    %c0_i32 = arith.constant 0 : i32
    %c0_i32_0 = arith.constant 0 : i32
    return %arg0, %arg1, %c0_i32 : i32, i32, i32
  }
  func.func @transform_4(%arg0: i32, %arg1: i32) -> (i32, i32, i32) {
    %c0_i32 = arith.constant 0 : i32
    %c0_i32_0 = arith.constant 0 : i32
    return %arg0, %arg1, %c0_i32 : i32, i32, i32
  }
  func.func @transform_5(%arg0: i32, %arg1: i32) -> (i32, i32, i32) {
    %c0_i32 = arith.constant 0 : i32
    %c0_i32_0 = arith.constant 0 : i32
    return %arg0, %arg1, %c0_i32 : i32, i32, i32
  }
  func.func @transform_6(%arg0: i32, %arg1: i32) -> (i32, i32, i32) {
    %c0_i32 = arith.constant 0 : i32
    %c0_i32_0 = arith.constant 0 : i32
    return %arg0, %arg1, %c0_i32 : i32, i32, i32
  }
  func.func @transform_7(%arg0: i32, %arg1: i32) -> (i32, i32, i32) {
    %c0_i32 = arith.constant 0 : i32
    %c0_i32_0 = arith.constant 0 : i32
    return %arg0, %arg1, %c0_i32 : i32, i32, i32
  }
  func.func @transform_8(%arg0: i32, %arg1: i32) -> (i32, i32) {
    %c0_i32 = arith.constant 0 : i32
    %c0_i32_0 = arith.constant 0 : i32
    %c0_i32_1 = arith.constant 0 : i32
    return %c0_i32, %c0_i32_0 : i32, i32
  }
  func.func @transform_9(%arg0: i32, %arg1: i32) -> (i32, i32) {
    %c0_i32 = arith.constant 0 : i32
    %c0_i32_0 = arith.constant 0 : i32
    %c0_i32_1 = arith.constant 0 : i32
    return %c0_i32, %c0_i32_0 : i32, i32
  }
  func.func @transform_10(%arg0: i32, %arg1: i32) -> (i32, i32) {
    %c0_i32 = arith.constant 0 : i32
    %c0_i32_0 = arith.constant 0 : i32
    %c0_i32_1 = arith.constant 0 : i32
    return %c0_i32, %c0_i32_0 : i32, i32
  }
  func.func @transform_11(%arg0: i32, %arg1: i32) -> (i32, i32) {
    %c0_i32 = arith.constant 0 : i32
    %c0_i32_0 = arith.constant 0 : i32
    %c0_i32_1 = arith.constant 0 : i32
    return %c0_i32, %c0_i32_0 : i32, i32
  }
  func.func @transform_12(%arg0: i32, %arg1: i32) -> (i32, i32) {
    %c0_i32 = arith.constant 0 : i32
    %c0_i32_0 = arith.constant 0 : i32
    %c0_i32_1 = arith.constant 0 : i32
    return %c0_i32, %c0_i32_0 : i32, i32
  }
  func.func @transform_13(%arg0: i32, %arg1: i32) -> (i32, i32) {
    %c0_i32 = arith.constant 0 : i32
    %c0_i32_0 = arith.constant 0 : i32
    %c0_i32_1 = arith.constant 0 : i32
    return %c0_i32, %c0_i32_0 : i32, i32
  }
  func.func @transform_14(%arg0: i32, %arg1: i32) -> (i32, i32, i32) {
    %c0_i32 = arith.constant 0 : i32
    %c0_i32_0 = arith.constant 0 : i32
    return %arg0, %arg1, %c0_i32 : i32, i32, i32
  }
}

module attributes {stable_mosaic.version = 11 : i64} {
  func.func @_linear_kernel(%arg0: i32, %arg1: memref<16x32xf32, #tpu.memory_space<vmem>>, %arg2: memref<32x64xbf16, #tpu.memory_space<vmem>>, %arg3: memref<1x64xf32, #tpu.memory_space<vmem>>, %arg4: memref<16x64xf32, #tpu.memory_space<vmem>>) attributes {dimension_semantics = [#tpu.dimension_semantics<parallel>], iteration_bounds = array<i64: 1>, scalar_prefetch = 0 : i64, scratch_operands = 0 : i64, tpu.core_type = #tpu.core_type<tc>, window_params = [{transform_indices = @transform_0, window_bounds = array<i64: 16, 32>}, {pipeline_mode = #tpu.pipeline_mode<synchronous>, transform_indices = @transform_1, window_bounds = array<i64: 32, 64>}, {pipeline_mode = #tpu.pipeline_mode<synchronous>, transform_indices = @transform_2, window_bounds = array<i64: 1, 64>}, {transform_indices = @transform_3, window_bounds = array<i64: 16, 64>}]} {
    %c0 = arith.constant 0 : index
    %c0_0 = arith.constant 0 : index
    %0 = vector.load %arg1[%c0, %c0_0] : memref<16x32xf32, #tpu.memory_space<vmem>>, vector<16x32xf32>
    %1 = arith.truncf %0 : vector<16x32xf32> to vector<16x32xbf16>
    %c0_1 = arith.constant 0 : index
    %c0_2 = arith.constant 0 : index
    %2 = vector.load %arg2[%c0_1, %c0_2] : memref<32x64xbf16, #tpu.memory_space<vmem>>, vector<32x64xbf16>
    %cst = arith.constant dense<0.000000e+00> : vector<16x64xf32>
    %3 = tpu.matmul %1, %2, %cst {dimension_numbers = #tpu.dot_dimension_numbers<[1], [0], [0], [1], [0, 0, 1, 1], [], []>} : vector<16x32xbf16>, vector<32x64xbf16>, vector<16x64xf32> -> vector<16x64xf32>
    %c0_3 = arith.constant 0 : index
    %c0_4 = arith.constant 0 : index
    %4 = vector.load %arg3[%c0_3, %c0_4] : memref<1x64xf32, #tpu.memory_space<vmem>>, vector<1x64xf32>
    %5 = vector.broadcast %4 : vector<1x64xf32> to vector<16x64xf32>
    %6 = arith.addf %3, %5 : vector<16x64xf32>
    %c0_5 = arith.constant 0 : index
    %c0_6 = arith.constant 0 : index
    %7 = vector.load %arg4[%c0_5, %c0_6] : memref<16x64xf32, #tpu.memory_space<vmem>>, vector<16x64xf32>
    tpu.vector_store %arg4[%c0_5, %c0_6], %6 {strides = array<i32>} : memref<16x64xf32, #tpu.memory_space<vmem>>, vector<16x64xf32>,
    return
  }
  func.func @transform_0(%arg0: i32) -> (i32, i32) {
    %c0_i32 = arith.constant 0 : i32
    %c0_i32_0 = arith.constant 0 : i32
    return %arg0, %c0_i32 : i32, i32
  }
  func.func @transform_1(%arg0: i32) -> (i32, i32) {
    %c0_i32 = arith.constant 0 : i32
    %c0_i32_0 = arith.constant 0 : i32
    %c0_i32_1 = arith.constant 0 : i32
    return %c0_i32, %c0_i32_0 : i32, i32
  }
  func.func @transform_2(%arg0: i32) -> (i32, i32) {
    %c0_i32 = arith.constant 0 : i32
    %c0_i32_0 = arith.constant 0 : i32
    %c0_i32_1 = arith.constant 0 : i32
    return %c0_i32, %c0_i32_0 : i32, i32
  }
  func.func @transform_3(%arg0: i32) -> (i32, i32) {
    %c0_i32 = arith.constant 0 : i32
    %c0_i32_0 = arith.constant 0 : i32
    return %arg0, %c0_i32 : i32, i32
  }
}

module attributes {stable_mosaic.version = 11 : i64} {
  func.func @_linear_kernel(%arg0: i32, %arg1: memref<16x32xf32, #tpu.memory_space<vmem>>, %arg2: memref<32x32xbf16, #tpu.memory_space<vmem>>, %arg3: memref<1x32xf32, #tpu.memory_space<vmem>>, %arg4: memref<16x32xf32, #tpu.memory_space<vmem>>) attributes {dimension_semantics = [#tpu.dimension_semantics<parallel>], iteration_bounds = array<i64: 1>, scalar_prefetch = 0 : i64, scratch_operands = 0 : i64, tpu.core_type = #tpu.core_type<tc>, window_params = [{transform_indices = @transform_0, window_bounds = array<i64: 16, 32>}, {pipeline_mode = #tpu.pipeline_mode<synchronous>, transform_indices = @transform_1, window_bounds = array<i64: 32, 32>}, {pipeline_mode = #tpu.pipeline_mode<synchronous>, transform_indices = @transform_2, window_bounds = array<i64: 1, 32>}, {transform_indices = @transform_3, window_bounds = array<i64: 16, 32>}]} {
    %c0 = arith.constant 0 : index
    %c0_0 = arith.constant 0 : index
    %0 = vector.load %arg1[%c0, %c0_0] : memref<16x32xf32, #tpu.memory_space<vmem>>, vector<16x32xf32>
    %1 = arith.truncf %0 : vector<16x32xf32> to vector<16x32xbf16>
    %c0_1 = arith.constant 0 : index
    %c0_2 = arith.constant 0 : index
    %2 = vector.load %arg2[%c0_1, %c0_2] : memref<32x32xbf16, #tpu.memory_space<vmem>>, vector<32x32xbf16>
    %cst = arith.constant dense<0.000000e+00> : vector<16x32xf32>
    %3 = tpu.matmul %1, %2, %cst {dimension_numbers = #tpu.dot_dimension_numbers<[1], [0], [0], [1], [0, 0, 1, 1], [], []>} : vector<16x32xbf16>, vector<32x32xbf16>, vector<16x32xf32> -> vector<16x32xf32>
    %c0_3 = arith.constant 0 : index
    %c0_4 = arith.constant 0 : index
    %4 = vector.load %arg3[%c0_3, %c0_4] : memref<1x32xf32, #tpu.memory_space<vmem>>, vector<1x32xf32>
    %5 = vector.broadcast %4 : vector<1x32xf32> to vector<16x32xf32>
    %6 = arith.addf %3, %5 : vector<16x32xf32>
    %c0_5 = arith.constant 0 : index
    %c0_6 = arith.constant 0 : index
    %7 = vector.load %arg4[%c0_5, %c0_6] : memref<16x32xf32, #tpu.memory_space<vmem>>, vector<16x32xf32>
    tpu.vector_store %arg4[%c0_5, %c0_6], %6 {strides = array<i32>} : memref<16x32xf32, #tpu.memory_space<vmem>>, vector<16x32xf32>,
    return
  }
  func.func @transform_0(%arg0: i32) -> (i32, i32) {
    %c0_i32 = arith.constant 0 : i32
    %c0_i32_0 = arith.constant 0 : i32
    return %arg0, %c0_i32 : i32, i32
  }
  func.func @transform_1(%arg0: i32) -> (i32, i32) {
    %c0_i32 = arith.constant 0 : i32
    %c0_i32_0 = arith.constant 0 : i32
    %c0_i32_1 = arith.constant 0 : i32
    return %c0_i32, %c0_i32_0 : i32, i32
  }
  func.func @transform_2(%arg0: i32) -> (i32, i32) {
    %c0_i32 = arith.constant 0 : i32
    %c0_i32_0 = arith.constant 0 : i32
    %c0_i32_1 = arith.constant 0 : i32
    return %c0_i32, %c0_i32_0 : i32, i32
  }
  func.func @transform_3(%arg0: i32) -> (i32, i32) {
    %c0_i32 = arith.constant 0 : i32
    %c0_i32_0 = arith.constant 0 : i32
    return %arg0, %c0_i32 : i32, i32
  }
}

module attributes {stable_mosaic.version = 11 : i64} {
  func.func @_mlp2_kernel(%arg0: i32, %arg1: memref<16x32xf32, #tpu.memory_space<vmem>>, %arg2: memref<32x32xbf16, #tpu.memory_space<vmem>>, %arg3: memref<1x32xf32, #tpu.memory_space<vmem>>, %arg4: memref<32x32xbf16, #tpu.memory_space<vmem>>, %arg5: memref<1x32xf32, #tpu.memory_space<vmem>>, %arg6: memref<16x32xf32, #tpu.memory_space<vmem>>) attributes {dimension_semantics = [#tpu.dimension_semantics<parallel>], iteration_bounds = array<i64: 1>, scalar_prefetch = 0 : i64, scratch_operands = 0 : i64, tpu.core_type = #tpu.core_type<tc>, window_params = [{transform_indices = @transform_0, window_bounds = array<i64: 16, 32>}, {pipeline_mode = #tpu.pipeline_mode<synchronous>, transform_indices = @transform_1, window_bounds = array<i64: 32, 32>}, {pipeline_mode = #tpu.pipeline_mode<synchronous>, transform_indices = @transform_2, window_bounds = array<i64: 1, 32>}, {pipeline_mode = #tpu.pipeline_mode<synchronous>, transform_indices = @transform_3, window_bounds = array<i64: 32, 32>}, {pipeline_mode = #tpu.pipeline_mode<synchronous>, transform_indices = @transform_4, window_bounds = array<i64: 1, 32>}, {transform_indices = @transform_5, window_bounds = array<i64: 16, 32>}]} {
    %c0 = arith.constant 0 : index
    %c0_0 = arith.constant 0 : index
    %0 = vector.load %arg1[%c0, %c0_0] : memref<16x32xf32, #tpu.memory_space<vmem>>, vector<16x32xf32>
    %1 = arith.truncf %0 : vector<16x32xf32> to vector<16x32xbf16>
    %c0_1 = arith.constant 0 : index
    %c0_2 = arith.constant 0 : index
    %2 = vector.load %arg2[%c0_1, %c0_2] : memref<32x32xbf16, #tpu.memory_space<vmem>>, vector<32x32xbf16>
    %cst = arith.constant dense<0.000000e+00> : vector<16x32xf32>
    %3 = tpu.matmul %1, %2, %cst {dimension_numbers = #tpu.dot_dimension_numbers<[1], [0], [0], [1], [0, 0, 1, 1], [], []>} : vector<16x32xbf16>, vector<32x32xbf16>, vector<16x32xf32> -> vector<16x32xf32>
    %c0_3 = arith.constant 0 : index
    %c0_4 = arith.constant 0 : index
    %4 = vector.load %arg3[%c0_3, %c0_4] : memref<1x32xf32, #tpu.memory_space<vmem>>, vector<1x32xf32>
    %5 = vector.broadcast %4 : vector<1x32xf32> to vector<16x32xf32>
    %6 = arith.addf %3, %5 : vector<16x32xf32>
    %7 = arith.negf %6 : vector<16x32xf32>
    %8 = math.exp %7 : vector<16x32xf32>
    %cst_5 = arith.constant 1.000000e+00 : f32
    %9 = vector.broadcast %cst_5 : f32 to vector<16x32xf32>
    %10 = arith.addf %9, %8 : vector<16x32xf32>
    %11 = arith.divf %9, %10 : vector<16x32xf32>
    %12 = arith.mulf %6, %11 : vector<16x32xf32>
    %13 = arith.truncf %12 : vector<16x32xf32> to vector<16x32xbf16>
    %c0_6 = arith.constant 0 : index
    %c0_7 = arith.constant 0 : index
    %14 = vector.load %arg4[%c0_6, %c0_7] : memref<32x32xbf16, #tpu.memory_space<vmem>>, vector<32x32xbf16>
    %cst_8 = arith.constant dense<0.000000e+00> : vector<16x32xf32>
    %15 = tpu.matmul %13, %14, %cst_8 {dimension_numbers = #tpu.dot_dimension_numbers<[1], [0], [0], [1], [0, 0, 1, 1], [], []>} : vector<16x32xbf16>, vector<32x32xbf16>, vector<16x32xf32> -> vector<16x32xf32>
    %c0_9 = arith.constant 0 : index
    %c0_10 = arith.constant 0 : index
    %16 = vector.load %arg5[%c0_9, %c0_10] : memref<1x32xf32, #tpu.memory_space<vmem>>, vector<1x32xf32>
    %17 = vector.broadcast %16 : vector<1x32xf32> to vector<16x32xf32>
    %18 = arith.addf %15, %17 : vector<16x32xf32>
    %c0_11 = arith.constant 0 : index
    %c0_12 = arith.constant 0 : index
    %19 = vector.load %arg6[%c0_11, %c0_12] : memref<16x32xf32, #tpu.memory_space<vmem>>, vector<16x32xf32>
    tpu.vector_store %arg6[%c0_11, %c0_12], %18 {strides = array<i32>} : memref<16x32xf32, #tpu.memory_space<vmem>>, vector<16x32xf32>,
    return
  }
  func.func @transform_0(%arg0: i32) -> (i32, i32) {
    %c0_i32 = arith.constant 0 : i32
    %c0_i32_0 = arith.constant 0 : i32
    return %arg0, %c0_i32 : i32, i32
  }
  func.func @transform_1(%arg0: i32) -> (i32, i32) {
    %c0_i32 = arith.constant 0 : i32
    %c0_i32_0 = arith.constant 0 : i32
    %c0_i32_1 = arith.constant 0 : i32
    return %c0_i32, %c0_i32_0 : i32, i32
  }
  func.func @transform_2(%arg0: i32) -> (i32, i32) {
    %c0_i32 = arith.constant 0 : i32
    %c0_i32_0 = arith.constant 0 : i32
    %c0_i32_1 = arith.constant 0 : i32
    return %c0_i32, %c0_i32_0 : i32, i32
  }
  func.func @transform_3(%arg0: i32) -> (i32, i32) {
    %c0_i32 = arith.constant 0 : i32
    %c0_i32_0 = arith.constant 0 : i32
    %c0_i32_1 = arith.constant 0 : i32
    return %c0_i32, %c0_i32_0 : i32, i32
  }
  func.func @transform_4(%arg0: i32) -> (i32, i32) {
    %c0_i32 = arith.constant 0 : i32
    %c0_i32_0 = arith.constant 0 : i32
    %c0_i32_1 = arith.constant 0 : i32
    return %c0_i32, %c0_i32_0 : i32, i32
  }
  func.func @transform_5(%arg0: i32) -> (i32, i32) {
    %c0_i32 = arith.constant 0 : i32
    %c0_i32_0 = arith.constant 0 : i32
    return %arg0, %c0_i32 : i32, i32
  }
}

module attributes {stable_mosaic.version = 11 : i64} {
  func.func @_mlp2_kernel(%arg0: i32, %arg1: memref<16x32xf32, #tpu.memory_space<vmem>>, %arg2: memref<32x32xbf16, #tpu.memory_space<vmem>>, %arg3: memref<1x32xf32, #tpu.memory_space<vmem>>, %arg4: memref<32x32xbf16, #tpu.memory_space<vmem>>, %arg5: memref<1x32xf32, #tpu.memory_space<vmem>>, %arg6: memref<16x32xf32, #tpu.memory_space<vmem>>) attributes {dimension_semantics = [#tpu.dimension_semantics<parallel>], iteration_bounds = array<i64: 1>, scalar_prefetch = 0 : i64, scratch_operands = 0 : i64, tpu.core_type = #tpu.core_type<tc>, window_params = [{transform_indices = @transform_0, window_bounds = array<i64: 16, 32>}, {pipeline_mode = #tpu.pipeline_mode<synchronous>, transform_indices = @transform_1, window_bounds = array<i64: 32, 32>}, {pipeline_mode = #tpu.pipeline_mode<synchronous>, transform_indices = @transform_2, window_bounds = array<i64: 1, 32>}, {pipeline_mode = #tpu.pipeline_mode<synchronous>, transform_indices = @transform_3, window_bounds = array<i64: 32, 32>}, {pipeline_mode = #tpu.pipeline_mode<synchronous>, transform_indices = @transform_4, window_bounds = array<i64: 1, 32>}, {transform_indices = @transform_5, window_bounds = array<i64: 16, 32>}]} {
    %c0 = arith.constant 0 : index
    %c0_0 = arith.constant 0 : index
    %0 = vector.load %arg1[%c0, %c0_0] : memref<16x32xf32, #tpu.memory_space<vmem>>, vector<16x32xf32>
    %1 = arith.truncf %0 : vector<16x32xf32> to vector<16x32xbf16>
    %c0_1 = arith.constant 0 : index
    %c0_2 = arith.constant 0 : index
    %2 = vector.load %arg2[%c0_1, %c0_2] : memref<32x32xbf16, #tpu.memory_space<vmem>>, vector<32x32xbf16>
    %cst = arith.constant dense<0.000000e+00> : vector<16x32xf32>
    %3 = tpu.matmul %1, %2, %cst {dimension_numbers = #tpu.dot_dimension_numbers<[1], [0], [0], [1], [0, 0, 1, 1], [], []>} : vector<16x32xbf16>, vector<32x32xbf16>, vector<16x32xf32> -> vector<16x32xf32>
    %c0_3 = arith.constant 0 : index
    %c0_4 = arith.constant 0 : index
    %4 = vector.load %arg3[%c0_3, %c0_4] : memref<1x32xf32, #tpu.memory_space<vmem>>, vector<1x32xf32>
    %5 = vector.broadcast %4 : vector<1x32xf32> to vector<16x32xf32>
    %6 = arith.addf %3, %5 : vector<16x32xf32>
    %cst_5 = arith.constant 0.000000e+00 : f32
    %7 = vector.broadcast %cst_5 : f32 to vector<16x32xf32>
    %8 = arith.maximumf %6, %7 : vector<16x32xf32>
    %9 = arith.truncf %8 : vector<16x32xf32> to vector<16x32xbf16>
    %c0_6 = arith.constant 0 : index
    %c0_7 = arith.constant 0 : index
    %10 = vector.load %arg4[%c0_6, %c0_7] : memref<32x32xbf16, #tpu.memory_space<vmem>>, vector<32x32xbf16>
    %cst_8 = arith.constant dense<0.000000e+00> : vector<16x32xf32>
    %11 = tpu.matmul %9, %10, %cst_8 {dimension_numbers = #tpu.dot_dimension_numbers<[1], [0], [0], [1], [0, 0, 1, 1], [], []>} : vector<16x32xbf16>, vector<32x32xbf16>, vector<16x32xf32> -> vector<16x32xf32>
    %c0_9 = arith.constant 0 : index
    %c0_10 = arith.constant 0 : index
    %12 = vector.load %arg5[%c0_9, %c0_10] : memref<1x32xf32, #tpu.memory_space<vmem>>, vector<1x32xf32>
    %13 = vector.broadcast %12 : vector<1x32xf32> to vector<16x32xf32>
    %14 = arith.addf %11, %13 : vector<16x32xf32>
    %c0_11 = arith.constant 0 : index
    %c0_12 = arith.constant 0 : index
    %15 = vector.load %arg6[%c0_11, %c0_12] : memref<16x32xf32, #tpu.memory_space<vmem>>, vector<16x32xf32>
    tpu.vector_store %arg6[%c0_11, %c0_12], %14 {strides = array<i32>} : memref<16x32xf32, #tpu.memory_space<vmem>>, vector<16x32xf32>,
    return
  }
  func.func @transform_0(%arg0: i32) -> (i32, i32) {
    %c0_i32 = arith.constant 0 : i32
    %c0_i32_0 = arith.constant 0 : i32
    return %arg0, %c0_i32 : i32, i32
  }
  func.func @transform_1(%arg0: i32) -> (i32, i32) {
    %c0_i32 = arith.constant 0 : i32
    %c0_i32_0 = arith.constant 0 : i32
    %c0_i32_1 = arith.constant 0 : i32
    return %c0_i32, %c0_i32_0 : i32, i32
  }
  func.func @transform_2(%arg0: i32) -> (i32, i32) {
    %c0_i32 = arith.constant 0 : i32
    %c0_i32_0 = arith.constant 0 : i32
    %c0_i32_1 = arith.constant 0 : i32
    return %c0_i32, %c0_i32_0 : i32, i32
  }
  func.func @transform_3(%arg0: i32) -> (i32, i32) {
    %c0_i32 = arith.constant 0 : i32
    %c0_i32_0 = arith.constant 0 : i32
    %c0_i32_1 = arith.constant 0 : i32
    return %c0_i32, %c0_i32_0 : i32, i32
  }
  func.func @transform_4(%arg0: i32) -> (i32, i32) {
    %c0_i32 = arith.constant 0 : i32
    %c0_i32_0 = arith.constant 0 : i32
    %c0_i32_1 = arith.constant 0 : i32
    return %c0_i32, %c0_i32_0 : i32, i32
  }
  func.func @transform_5(%arg0: i32) -> (i32, i32) {
    %c0_i32 = arith.constant 0 : i32
    %c0_i32_0 = arith.constant 0 : i32
    return %arg0, %c0_i32 : i32, i32
  }
}

module attributes {stable_mosaic.version = 11 : i64} {
  func.func @_mha_res_ln_kernel(%arg0: i32, %arg1: i32, %arg2: memref<1x8x32xf32, #tpu.memory_space<vmem>>, %arg3: memref<1x8x64xf32, #tpu.memory_space<vmem>>, %arg4: memref<1x8x32xf32, #tpu.memory_space<vmem>>, %arg5: memref<32x32xbf16, #tpu.memory_space<vmem>>, %arg6: memref<1x32xf32, #tpu.memory_space<vmem>>, %arg7: memref<1x32xf32, #tpu.memory_space<vmem>>, %arg8: memref<1x32xf32, #tpu.memory_space<vmem>>, %arg9: memref<1x8x32xf32, #tpu.memory_space<vmem>>, %arg10: memref<8x32xf32, #tpu.memory_space<vmem>>) attributes {dimension_semantics = [#tpu.dimension_semantics<parallel>, #tpu.dimension_semantics<parallel>], iteration_bounds = array<i64: 2, 1>, scalar_prefetch = 0 : i64, scratch_operands = 1 : i64, tpu.core_type = #tpu.core_type<tc>, window_params = [{transform_indices = @transform_0, window_bounds = array<i64: 1, 8, 32>}, {transform_indices = @transform_1, window_bounds = array<i64: 1, 8, 64>}, {transform_indices = @transform_2, window_bounds = array<i64: 1, 8, 32>}, {pipeline_mode = #tpu.pipeline_mode<synchronous>, transform_indices = @transform_3, window_bounds = array<i64: 32, 32>}, {pipeline_mode = #tpu.pipeline_mode<synchronous>, transform_indices = @transform_4, window_bounds = array<i64: 1, 32>}, {pipeline_mode = #tpu.pipeline_mode<synchronous>, transform_indices = @transform_5, window_bounds = array<i64: 1, 32>}, {pipeline_mode = #tpu.pipeline_mode<synchronous>, transform_indices = @transform_6, window_bounds = array<i64: 1, 32>}, {transform_indices = @transform_7, window_bounds = array<i64: 1, 8, 32>}]} {
    %c0 = arith.constant 0 : index
    %c0_0 = arith.constant 0 : index
    %c0_1 = arith.constant 0 : index
    %0 = vector.load %arg2[%c0, %c0_0, %c0_1] : memref<1x8x32xf32, #tpu.memory_space<vmem>>, vector<1x8x32xf32>
    %1 = vector.shape_cast %0 : vector<1x8x32xf32> to vector<8x32xf32>
    %c0_2 = arith.constant 0 : index
    %c0_3 = arith.constant 0 : index
    %c0_4 = arith.constant 0 : index
    %2 = vector.load %arg3[%c0_2, %c0_3, %c0_4] : memref<1x8x64xf32, #tpu.memory_space<vmem>>, vector<1x8x64xf32>
    %3 = vector.shape_cast %2 : vector<1x8x64xf32> to vector<8x64xf32>
    %4 = vector.extract_strided_slice %3 {offsets = [0, 0], sizes = [8, 32], strides = [1, 1]} : vector<8x64xf32> to vector<8x32xf32>
    %5 = vector.extract_strided_slice %3 {offsets = [0, 32], sizes = [8, 32], strides = [1, 1]} : vector<8x64xf32> to vector<8x32xf32>
    %6 = vector.extract_strided_slice %1 {offsets = [0, 0], sizes = [8, 8], strides = [1, 1]} : vector<8x32xf32> to vector<8x8xf32>
    %7 = vector.extract_strided_slice %4 {offsets = [0, 0], sizes = [8, 8], strides = [1, 1]} : vector<8x32xf32> to vector<8x8xf32>
    %8 = arith.truncf %6 : vector<8x8xf32> to vector<8x8xbf16>
    %9 = arith.truncf %7 : vector<8x8xf32> to vector<8x8xbf16>
    %cst = arith.constant dense<0.000000e+00> : vector<8x8xf32>
    %10 = tpu.matmul %8, %9, %cst {dimension_numbers = #tpu.dot_dimension_numbers<[1], [1], [0], [0], [0, 0, 1, 0], [], []>} : vector<8x8xbf16>, vector<8x8xbf16>, vector<8x8xf32> -> vector<8x8xf32>
    %cst_5 = arith.constant 0.353553385 : f32
    %11 = vector.broadcast %cst_5 : f32 to vector<8x8xf32>
    %12 = arith.mulf %10, %11 : vector<8x8xf32>
    %cst_6 = arith.constant dense<0xFF800000> : vector<8xf32>
    %13 = vector.multi_reduction <maximumf>, %12, %cst_6 [1] : vector<8x8xf32> to vector<8xf32>
    %14 = vector.shape_cast %13 : vector<8xf32> to vector<8x1xf32>
    %15 = vector.broadcast %14 : vector<8x1xf32> to vector<8x8xf32>
    %16 = arith.subf %12, %15 : vector<8x8xf32>
    %17 = math.exp %16 : vector<8x8xf32>
    %cst_7 = arith.constant dense<0.000000e+00> : vector<8xf32>
    %18 = vector.multi_reduction <add>, %17, %cst_7 [1] : vector<8x8xf32> to vector<8xf32>
    %19 = vector.shape_cast %18 : vector<8xf32> to vector<8x1xf32>
    %20 = tpu.reciprocal %19 {approx = true} : vector<8x1xf32> -> vector<8x1xf32>
    %21 = vector.broadcast %20 : vector<8x1xf32> to vector<8x8xf32>
    %22 = arith.mulf %17, %21 : vector<8x8xf32>
    %23 = vector.extract_strided_slice %5 {offsets = [0, 0], sizes = [8, 8], strides = [1, 1]} : vector<8x32xf32> to vector<8x8xf32>
    %24 = arith.truncf %22 : vector<8x8xf32> to vector<8x8xbf16>
    %25 = arith.truncf %23 : vector<8x8xf32> to vector<8x8xbf16>
    %cst_8 = arith.constant dense<0.000000e+00> : vector<8x8xf32>
    %26 = tpu.matmul %24, %25, %cst_8 {dimension_numbers = #tpu.dot_dimension_numbers<[1], [0], [0], [1], [0, 0, 1, 1], [], []>} : vector<8x8xbf16>, vector<8x8xbf16>, vector<8x8xf32> -> vector<8x8xf32>
    %c0_9 = arith.constant 0 : index
    %c0_10 = arith.constant 0 : index
    %27 = vector.load %arg10[%c0_9, %c0_10] : memref<8x32xf32, #tpu.memory_space<vmem>>, vector<8x8xf32>
    tpu.vector_store %arg10[%c0_9, %c0_10], %26 {strides = array<i32>} : memref<8x32xf32, #tpu.memory_space<vmem>>, vector<8x8xf32>,
    %28 = vector.extract_strided_slice %1 {offsets = [0, 8], sizes = [8, 8], strides = [1, 1]} : vector<8x32xf32> to vector<8x8xf32>
    %29 = vector.extract_strided_slice %4 {offsets = [0, 8], sizes = [8, 8], strides = [1, 1]} : vector<8x32xf32> to vector<8x8xf32>
    %30 = arith.truncf %28 : vector<8x8xf32> to vector<8x8xbf16>
    %31 = arith.truncf %29 : vector<8x8xf32> to vector<8x8xbf16>
    %cst_11 = arith.constant dense<0.000000e+00> : vector<8x8xf32>
    %32 = tpu.matmul %30, %31, %cst_11 {dimension_numbers = #tpu.dot_dimension_numbers<[1], [1], [0], [0], [0, 0, 1, 0], [], []>} : vector<8x8xbf16>, vector<8x8xbf16>, vector<8x8xf32> -> vector<8x8xf32>
    %cst_12 = arith.constant 0.353553385 : f32
    %33 = vector.broadcast %cst_12 : f32 to vector<8x8xf32>
    %34 = arith.mulf %32, %33 : vector<8x8xf32>
    %cst_13 = arith.constant dense<0xFF800000> : vector<8xf32>
    %35 = vector.multi_reduction <maximumf>, %34, %cst_13 [1] : vector<8x8xf32> to vector<8xf32>
    %36 = vector.shape_cast %35 : vector<8xf32> to vector<8x1xf32>
    %37 = vector.broadcast %36 : vector<8x1xf32> to vector<8x8xf32>
    %38 = arith.subf %34, %37 : vector<8x8xf32>
    %39 = math.exp %38 : vector<8x8xf32>
    %cst_14 = arith.constant dense<0.000000e+00> : vector<8xf32>
    %40 = vector.multi_reduction <add>, %39, %cst_14 [1] : vector<8x8xf32> to vector<8xf32>
    %41 = vector.shape_cast %40 : vector<8xf32> to vector<8x1xf32>
    %42 = tpu.reciprocal %41 {approx = true} : vector<8x1xf32> -> vector<8x1xf32>
    %43 = vector.broadcast %42 : vector<8x1xf32> to vector<8x8xf32>
    %44 = arith.mulf %39, %43 : vector<8x8xf32>
    %45 = vector.extract_strided_slice %5 {offsets = [0, 8], sizes = [8, 8], strides = [1, 1]} : vector<8x32xf32> to vector<8x8xf32>
    %46 = arith.truncf %44 : vector<8x8xf32> to vector<8x8xbf16>
    %47 = arith.truncf %45 : vector<8x8xf32> to vector<8x8xbf16>
    %cst_15 = arith.constant dense<0.000000e+00> : vector<8x8xf32>
    %48 = tpu.matmul %46, %47, %cst_15 {dimension_numbers = #tpu.dot_dimension_numbers<[1], [0], [0], [1], [0, 0, 1, 1], [], []>} : vector<8x8xbf16>, vector<8x8xbf16>, vector<8x8xf32> -> vector<8x8xf32>
    %c0_16 = arith.constant 0 : index
    %c8 = arith.constant 8 : index
    %49 = vector.load %arg10[%c0_16, %c8] : memref<8x32xf32, #tpu.memory_space<vmem>>, vector<8x8xf32>
    tpu.vector_store %arg10[%c0_16, %c8], %48 {strides = array<i32>} : memref<8x32xf32, #tpu.memory_space<vmem>>, vector<8x8xf32>,
    %50 = vector.extract_strided_slice %1 {offsets = [0, 16], sizes = [8, 8], strides = [1, 1]} : vector<8x32xf32> to vector<8x8xf32>
    %51 = vector.extract_strided_slice %4 {offsets = [0, 16], sizes = [8, 8], strides = [1, 1]} : vector<8x32xf32> to vector<8x8xf32>
    %52 = arith.truncf %50 : vector<8x8xf32> to vector<8x8xbf16>
    %53 = arith.truncf %51 : vector<8x8xf32> to vector<8x8xbf16>
    %cst_17 = arith.constant dense<0.000000e+00> : vector<8x8xf32>
    %54 = tpu.matmul %52, %53, %cst_17 {dimension_numbers = #tpu.dot_dimension_numbers<[1], [1], [0], [0], [0, 0, 1, 0], [], []>} : vector<8x8xbf16>, vector<8x8xbf16>, vector<8x8xf32> -> vector<8x8xf32>
    %cst_18 = arith.constant 0.353553385 : f32
    %55 = vector.broadcast %cst_18 : f32 to vector<8x8xf32>
    %56 = arith.mulf %54, %55 : vector<8x8xf32>
    %cst_19 = arith.constant dense<0xFF800000> : vector<8xf32>
    %57 = vector.multi_reduction <maximumf>, %56, %cst_19 [1] : vector<8x8xf32> to vector<8xf32>
    %58 = vector.shape_cast %57 : vector<8xf32> to vector<8x1xf32>
    %59 = vector.broadcast %58 : vector<8x1xf32> to vector<8x8xf32>
    %60 = arith.subf %56, %59 : vector<8x8xf32>
    %61 = math.exp %60 : vector<8x8xf32>
    %cst_20 = arith.constant dense<0.000000e+00> : vector<8xf32>
    %62 = vector.multi_reduction <add>, %61, %cst_20 [1] : vector<8x8xf32> to vector<8xf32>
    %63 = vector.shape_cast %62 : vector<8xf32> to vector<8x1xf32>
    %64 = tpu.reciprocal %63 {approx = true} : vector<8x1xf32> -> vector<8x1xf32>
    %65 = vector.broadcast %64 : vector<8x1xf32> to vector<8x8xf32>
    %66 = arith.mulf %61, %65 : vector<8x8xf32>
    %67 = vector.extract_strided_slice %5 {offsets = [0, 16], sizes = [8, 8], strides = [1, 1]} : vector<8x32xf32> to vector<8x8xf32>
    %68 = arith.truncf %66 : vector<8x8xf32> to vector<8x8xbf16>
    %69 = arith.truncf %67 : vector<8x8xf32> to vector<8x8xbf16>
    %cst_21 = arith.constant dense<0.000000e+00> : vector<8x8xf32>
    %70 = tpu.matmul %68, %69, %cst_21 {dimension_numbers = #tpu.dot_dimension_numbers<[1], [0], [0], [1], [0, 0, 1, 1], [], []>} : vector<8x8xbf16>, vector<8x8xbf16>, vector<8x8xf32> -> vector<8x8xf32>
    %c0_22 = arith.constant 0 : index
    %c16 = arith.constant 16 : index
    %71 = vector.load %arg10[%c0_22, %c16] : memref<8x32xf32, #tpu.memory_space<vmem>>, vector<8x8xf32>
    tpu.vector_store %arg10[%c0_22, %c16], %70 {strides = array<i32>} : memref<8x32xf32, #tpu.memory_space<vmem>>, vector<8x8xf32>,
    %72 = vector.extract_strided_slice %1 {offsets = [0, 24], sizes = [8, 8], strides = [1, 1]} : vector<8x32xf32> to vector<8x8xf32>
    %73 = vector.extract_strided_slice %4 {offsets = [0, 24], sizes = [8, 8], strides = [1, 1]} : vector<8x32xf32> to vector<8x8xf32>
    %74 = arith.truncf %72 : vector<8x8xf32> to vector<8x8xbf16>
    %75 = arith.truncf %73 : vector<8x8xf32> to vector<8x8xbf16>
    %cst_23 = arith.constant dense<0.000000e+00> : vector<8x8xf32>
    %76 = tpu.matmul %74, %75, %cst_23 {dimension_numbers = #tpu.dot_dimension_numbers<[1], [1], [0], [0], [0, 0, 1, 0], [], []>} : vector<8x8xbf16>, vector<8x8xbf16>, vector<8x8xf32> -> vector<8x8xf32>
    %cst_24 = arith.constant 0.353553385 : f32
    %77 = vector.broadcast %cst_24 : f32 to vector<8x8xf32>
    %78 = arith.mulf %76, %77 : vector<8x8xf32>
    %cst_25 = arith.constant dense<0xFF800000> : vector<8xf32>
    %79 = vector.multi_reduction <maximumf>, %78, %cst_25 [1] : vector<8x8xf32> to vector<8xf32>
    %80 = vector.shape_cast %79 : vector<8xf32> to vector<8x1xf32>
    %81 = vector.broadcast %80 : vector<8x1xf32> to vector<8x8xf32>
    %82 = arith.subf %78, %81 : vector<8x8xf32>
    %83 = math.exp %82 : vector<8x8xf32>
    %cst_26 = arith.constant dense<0.000000e+00> : vector<8xf32>
    %84 = vector.multi_reduction <add>, %83, %cst_26 [1] : vector<8x8xf32> to vector<8xf32>
    %85 = vector.shape_cast %84 : vector<8xf32> to vector<8x1xf32>
    %86 = tpu.reciprocal %85 {approx = true} : vector<8x1xf32> -> vector<8x1xf32>
    %87 = vector.broadcast %86 : vector<8x1xf32> to vector<8x8xf32>
    %88 = arith.mulf %83, %87 : vector<8x8xf32>
    %89 = vector.extract_strided_slice %5 {offsets = [0, 24], sizes = [8, 8], strides = [1, 1]} : vector<8x32xf32> to vector<8x8xf32>
    %90 = arith.truncf %88 : vector<8x8xf32> to vector<8x8xbf16>
    %91 = arith.truncf %89 : vector<8x8xf32> to vector<8x8xbf16>
    %cst_27 = arith.constant dense<0.000000e+00> : vector<8x8xf32>
    %92 = tpu.matmul %90, %91, %cst_27 {dimension_numbers = #tpu.dot_dimension_numbers<[1], [0], [0], [1], [0, 0, 1, 1], [], []>} : vector<8x8xbf16>, vector<8x8xbf16>, vector<8x8xf32> -> vector<8x8xf32>
    %c0_28 = arith.constant 0 : index
    %c24 = arith.constant 24 : index
    %93 = vector.load %arg10[%c0_28, %c24] : memref<8x32xf32, #tpu.memory_space<vmem>>, vector<8x8xf32>
    tpu.vector_store %arg10[%c0_28, %c24], %92 {strides = array<i32>} : memref<8x32xf32, #tpu.memory_space<vmem>>, vector<8x8xf32>,
    %c0_29 = arith.constant 0 : index
    %c0_30 = arith.constant 0 : index
    %94 = vector.load %arg10[%c0_29, %c0_30] : memref<8x32xf32, #tpu.memory_space<vmem>>, vector<8x32xf32>
    %c0_31 = arith.constant 0 : index
    %c0_32 = arith.constant 0 : index
    %95 = vector.load %arg5[%c0_31, %c0_32] : memref<32x32xbf16, #tpu.memory_space<vmem>>, vector<32x32xbf16>
    %96 = arith.truncf %94 : vector<8x32xf32> to vector<8x32xbf16>
    %cst_33 = arith.constant dense<0.000000e+00> : vector<8x32xf32>
    %97 = tpu.matmul %96, %95, %cst_33 {dimension_numbers = #tpu.dot_dimension_numbers<[1], [0], [0], [1], [0, 0, 1, 1], [], []>} : vector<8x32xbf16>, vector<32x32xbf16>, vector<8x32xf32> -> vector<8x32xf32>
    %c0_34 = arith.constant 0 : index
    %c0_35 = arith.constant 0 : index
    %98 = vector.load %arg6[%c0_34, %c0_35] : memref<1x32xf32, #tpu.memory_space<vmem>>, vector<1x32xf32>
    %99 = vector.broadcast %98 : vector<1x32xf32> to vector<8x32xf32>
    %100 = arith.addf %97, %99 : vector<8x32xf32>
    %c0_36 = arith.constant 0 : index
    %c0_37 = arith.constant 0 : index
    %c0_38 = arith.constant 0 : index
    %101 = vector.load %arg4[%c0_36, %c0_37, %c0_38] : memref<1x8x32xf32, #tpu.memory_space<vmem>>, vector<1x8x32xf32>
    %102 = vector.shape_cast %101 : vector<1x8x32xf32> to vector<8x32xf32>
    %103 = arith.addf %100, %102 : vector<8x32xf32>
    %c0_39 = arith.constant 0 : index
    %c0_40 = arith.constant 0 : index
    %104 = vector.load %arg7[%c0_39, %c0_40] : memref<1x32xf32, #tpu.memory_space<vmem>>, vector<1x32xf32>
    %c0_41 = arith.constant 0 : index
    %c0_42 = arith.constant 0 : index
    %105 = vector.load %arg8[%c0_41, %c0_42] : memref<1x32xf32, #tpu.memory_space<vmem>>, vector<1x32xf32>
    %cst_43 = arith.constant dense<0.000000e+00> : vector<8xf32>
    %106 = vector.multi_reduction <add>, %103, %cst_43 [1] : vector<8x32xf32> to vector<8xf32>
    %107 = vector.shape_cast %106 : vector<8xf32> to vector<8x1xf32>
    %cst_44 = arith.constant 3.200000e+01 : f32
    %108 = vector.broadcast %cst_44 : f32 to vector<8x1xf32>
    %109 = arith.divf %107, %108 : vector<8x1xf32>
    %110 = vector.broadcast %109 : vector<8x1xf32> to vector<8x32xf32>
    %111 = arith.subf %103, %110 : vector<8x32xf32>
    %112 = arith.mulf %111, %111 : vector<8x32xf32>
    %cst_45 = arith.constant dense<0.000000e+00> : vector<8xf32>
    %113 = vector.multi_reduction <add>, %112, %cst_45 [1] : vector<8x32xf32> to vector<8xf32>
    %114 = vector.shape_cast %113 : vector<8xf32> to vector<8x1xf32>
    %cst_46 = arith.constant 3.200000e+01 : f32
    %115 = vector.broadcast %cst_46 : f32 to vector<8x1xf32>
    %116 = arith.divf %114, %115 : vector<8x1xf32>
    %117 = vector.broadcast %109 : vector<8x1xf32> to vector<8x32xf32>
    %118 = arith.subf %103, %117 : vector<8x32xf32>
    %cst_47 = arith.constant 9.99999974E-6 : f32
    %119 = vector.broadcast %cst_47 : f32 to vector<8x1xf32>
    %120 = arith.addf %116, %119 : vector<8x1xf32>
    %121 = math.rsqrt %120 : vector<8x1xf32>
    %122 = vector.broadcast %121 : vector<8x1xf32> to vector<8x32xf32>
    %123 = arith.mulf %118, %122 : vector<8x32xf32>
    %124 = vector.broadcast %104 : vector<1x32xf32> to vector<8x32xf32>
    %125 = arith.mulf %123, %124 : vector<8x32xf32>
    %126 = vector.broadcast %105 : vector<1x32xf32> to vector<8x32xf32>
    %127 = arith.addf %125, %126 : vector<8x32xf32>
    %c0_48 = arith.constant 0 : index
    %c0_49 = arith.constant 0 : index
    %c0_50 = arith.constant 0 : index
    %128 = vector.load %arg9[%c0_48, %c0_49, %c0_50] : memref<1x8x32xf32, #tpu.memory_space<vmem>>, vector<1x8x32xf32>
    %129 = vector.shape_cast %128 : vector<1x8x32xf32> to vector<8x32xf32>
    %130 = vector.shape_cast %127 : vector<8x32xf32> to vector<1x8x32xf32>
    tpu.vector_store %arg9[%c0_48, %c0_49, %c0_50], %130 {strides = array<i32>} : memref<1x8x32xf32, #tpu.memory_space<vmem>>, vector<1x8x32xf32>,
    return
  }
  func.func @transform_0(%arg0: i32, %arg1: i32) -> (i32, i32, i32) {
    %c0_i32 = arith.constant 0 : i32
    %c0_i32_0 = arith.constant 0 : i32
    return %arg0, %arg1, %c0_i32 : i32, i32, i32
  }
  func.func @transform_1(%arg0: i32, %arg1: i32) -> (i32, i32, i32) {
    %c0_i32 = arith.constant 0 : i32
    %c0_i32_0 = arith.constant 0 : i32
    %c0_i32_1 = arith.constant 0 : i32
    return %arg0, %c0_i32, %c0_i32_0 : i32, i32, i32
  }
  func.func @transform_2(%arg0: i32, %arg1: i32) -> (i32, i32, i32) {
    %c0_i32 = arith.constant 0 : i32
    %c0_i32_0 = arith.constant 0 : i32
    return %arg0, %arg1, %c0_i32 : i32, i32, i32
  }
  func.func @transform_3(%arg0: i32, %arg1: i32) -> (i32, i32) {
    %c0_i32 = arith.constant 0 : i32
    %c0_i32_0 = arith.constant 0 : i32
    %c0_i32_1 = arith.constant 0 : i32
    return %c0_i32, %c0_i32_0 : i32, i32
  }
  func.func @transform_4(%arg0: i32, %arg1: i32) -> (i32, i32) {
    %c0_i32 = arith.constant 0 : i32
    %c0_i32_0 = arith.constant 0 : i32
    %c0_i32_1 = arith.constant 0 : i32
    return %c0_i32, %c0_i32_0 : i32, i32
  }
  func.func @transform_5(%arg0: i32, %arg1: i32) -> (i32, i32) {
    %c0_i32 = arith.constant 0 : i32
    %c0_i32_0 = arith.constant 0 : i32
    %c0_i32_1 = arith.constant 0 : i32
    return %c0_i32, %c0_i32_0 : i32, i32
  }
  func.func @transform_6(%arg0: i32, %arg1: i32) -> (i32, i32) {
    %c0_i32 = arith.constant 0 : i32
    %c0_i32_0 = arith.constant 0 : i32
    %c0_i32_1 = arith.constant 0 : i32
    return %c0_i32, %c0_i32_0 : i32, i32
  }
  func.func @transform_7(%arg0: i32, %arg1: i32) -> (i32, i32, i32) {
    %c0_i32 = arith.constant 0 : i32
    %c0_i32_0 = arith.constant 0 : i32
    return %arg0, %arg1, %c0_i32 : i32, i32, i32
  }
}

module attributes {stable_mosaic.version = 11 : i64} {
  func.func @_mha_kernel(%arg0: i32, %arg1: i32, %arg2: memref<1x8x32xf32, #tpu.memory_space<vmem>>, %arg3: memref<1x8x64xf32, #tpu.memory_space<vmem>>, %arg4: memref<32x32xbf16, #tpu.memory_space<vmem>>, %arg5: memref<1x32xf32, #tpu.memory_space<vmem>>, %arg6: memref<1x8x32xf32, #tpu.memory_space<vmem>>, %arg7: memref<8x32xf32, #tpu.memory_space<vmem>>) attributes {dimension_semantics = [#tpu.dimension_semantics<parallel>, #tpu.dimension_semantics<parallel>], iteration_bounds = array<i64: 2, 1>, scalar_prefetch = 0 : i64, scratch_operands = 1 : i64, tpu.core_type = #tpu.core_type<tc>, window_params = [{transform_indices = @transform_0, window_bounds = array<i64: 1, 8, 32>}, {transform_indices = @transform_1, window_bounds = array<i64: 1, 8, 64>}, {pipeline_mode = #tpu.pipeline_mode<synchronous>, transform_indices = @transform_2, window_bounds = array<i64: 32, 32>}, {pipeline_mode = #tpu.pipeline_mode<synchronous>, transform_indices = @transform_3, window_bounds = array<i64: 1, 32>}, {transform_indices = @transform_4, window_bounds = array<i64: 1, 8, 32>}]} {
    %c0 = arith.constant 0 : index
    %c0_0 = arith.constant 0 : index
    %c0_1 = arith.constant 0 : index
    %0 = vector.load %arg2[%c0, %c0_0, %c0_1] : memref<1x8x32xf32, #tpu.memory_space<vmem>>, vector<1x8x32xf32>
    %1 = vector.shape_cast %0 : vector<1x8x32xf32> to vector<8x32xf32>
    %c0_2 = arith.constant 0 : index
    %c0_3 = arith.constant 0 : index
    %c0_4 = arith.constant 0 : index
    %2 = vector.load %arg3[%c0_2, %c0_3, %c0_4] : memref<1x8x64xf32, #tpu.memory_space<vmem>>, vector<1x8x64xf32>
    %3 = vector.shape_cast %2 : vector<1x8x64xf32> to vector<8x64xf32>
    %4 = vector.extract_strided_slice %3 {offsets = [0, 0], sizes = [8, 32], strides = [1, 1]} : vector<8x64xf32> to vector<8x32xf32>
    %5 = vector.extract_strided_slice %3 {offsets = [0, 32], sizes = [8, 32], strides = [1, 1]} : vector<8x64xf32> to vector<8x32xf32>
    %6 = vector.extract_strided_slice %1 {offsets = [0, 0], sizes = [8, 8], strides = [1, 1]} : vector<8x32xf32> to vector<8x8xf32>
    %7 = vector.extract_strided_slice %4 {offsets = [0, 0], sizes = [8, 8], strides = [1, 1]} : vector<8x32xf32> to vector<8x8xf32>
    %8 = arith.truncf %6 : vector<8x8xf32> to vector<8x8xbf16>
    %9 = arith.truncf %7 : vector<8x8xf32> to vector<8x8xbf16>
    %cst = arith.constant dense<0.000000e+00> : vector<8x8xf32>
    %10 = tpu.matmul %8, %9, %cst {dimension_numbers = #tpu.dot_dimension_numbers<[1], [1], [0], [0], [0, 0, 1, 0], [], []>} : vector<8x8xbf16>, vector<8x8xbf16>, vector<8x8xf32> -> vector<8x8xf32>
    %cst_5 = arith.constant 0.353553385 : f32
    %11 = vector.broadcast %cst_5 : f32 to vector<8x8xf32>
    %12 = arith.mulf %10, %11 : vector<8x8xf32>
    %cst_6 = arith.constant dense<0xFF800000> : vector<8xf32>
    %13 = vector.multi_reduction <maximumf>, %12, %cst_6 [1] : vector<8x8xf32> to vector<8xf32>
    %14 = vector.shape_cast %13 : vector<8xf32> to vector<8x1xf32>
    %15 = vector.broadcast %14 : vector<8x1xf32> to vector<8x8xf32>
    %16 = arith.subf %12, %15 : vector<8x8xf32>
    %17 = math.exp %16 : vector<8x8xf32>
    %cst_7 = arith.constant dense<0.000000e+00> : vector<8xf32>
    %18 = vector.multi_reduction <add>, %17, %cst_7 [1] : vector<8x8xf32> to vector<8xf32>
    %19 = vector.shape_cast %18 : vector<8xf32> to vector<8x1xf32>
    %20 = tpu.reciprocal %19 {approx = true} : vector<8x1xf32> -> vector<8x1xf32>
    %21 = vector.broadcast %20 : vector<8x1xf32> to vector<8x8xf32>
    %22 = arith.mulf %17, %21 : vector<8x8xf32>
    %23 = vector.extract_strided_slice %5 {offsets = [0, 0], sizes = [8, 8], strides = [1, 1]} : vector<8x32xf32> to vector<8x8xf32>
    %24 = arith.truncf %22 : vector<8x8xf32> to vector<8x8xbf16>
    %25 = arith.truncf %23 : vector<8x8xf32> to vector<8x8xbf16>
    %cst_8 = arith.constant dense<0.000000e+00> : vector<8x8xf32>
    %26 = tpu.matmul %24, %25, %cst_8 {dimension_numbers = #tpu.dot_dimension_numbers<[1], [0], [0], [1], [0, 0, 1, 1], [], []>} : vector<8x8xbf16>, vector<8x8xbf16>, vector<8x8xf32> -> vector<8x8xf32>
    %c0_9 = arith.constant 0 : index
    %c0_10 = arith.constant 0 : index
    %27 = vector.load %arg7[%c0_9, %c0_10] : memref<8x32xf32, #tpu.memory_space<vmem>>, vector<8x8xf32>
    tpu.vector_store %arg7[%c0_9, %c0_10], %26 {strides = array<i32>} : memref<8x32xf32, #tpu.memory_space<vmem>>, vector<8x8xf32>,
    %28 = vector.extract_strided_slice %1 {offsets = [0, 8], sizes = [8, 8], strides = [1, 1]} : vector<8x32xf32> to vector<8x8xf32>
    %29 = vector.extract_strided_slice %4 {offsets = [0, 8], sizes = [8, 8], strides = [1, 1]} : vector<8x32xf32> to vector<8x8xf32>
    %30 = arith.truncf %28 : vector<8x8xf32> to vector<8x8xbf16>
    %31 = arith.truncf %29 : vector<8x8xf32> to vector<8x8xbf16>
    %cst_11 = arith.constant dense<0.000000e+00> : vector<8x8xf32>
    %32 = tpu.matmul %30, %31, %cst_11 {dimension_numbers = #tpu.dot_dimension_numbers<[1], [1], [0], [0], [0, 0, 1, 0], [], []>} : vector<8x8xbf16>, vector<8x8xbf16>, vector<8x8xf32> -> vector<8x8xf32>
    %cst_12 = arith.constant 0.353553385 : f32
    %33 = vector.broadcast %cst_12 : f32 to vector<8x8xf32>
    %34 = arith.mulf %32, %33 : vector<8x8xf32>
    %cst_13 = arith.constant dense<0xFF800000> : vector<8xf32>
    %35 = vector.multi_reduction <maximumf>, %34, %cst_13 [1] : vector<8x8xf32> to vector<8xf32>
    %36 = vector.shape_cast %35 : vector<8xf32> to vector<8x1xf32>
    %37 = vector.broadcast %36 : vector<8x1xf32> to vector<8x8xf32>
    %38 = arith.subf %34, %37 : vector<8x8xf32>
    %39 = math.exp %38 : vector<8x8xf32>
    %cst_14 = arith.constant dense<0.000000e+00> : vector<8xf32>
    %40 = vector.multi_reduction <add>, %39, %cst_14 [1] : vector<8x8xf32> to vector<8xf32>
    %41 = vector.shape_cast %40 : vector<8xf32> to vector<8x1xf32>
    %42 = tpu.reciprocal %41 {approx = true} : vector<8x1xf32> -> vector<8x1xf32>
    %43 = vector.broadcast %42 : vector<8x1xf32> to vector<8x8xf32>
    %44 = arith.mulf %39, %43 : vector<8x8xf32>
    %45 = vector.extract_strided_slice %5 {offsets = [0, 8], sizes = [8, 8], strides = [1, 1]} : vector<8x32xf32> to vector<8x8xf32>
    %46 = arith.truncf %44 : vector<8x8xf32> to vector<8x8xbf16>
    %47 = arith.truncf %45 : vector<8x8xf32> to vector<8x8xbf16>
    %cst_15 = arith.constant dense<0.000000e+00> : vector<8x8xf32>
    %48 = tpu.matmul %46, %47, %cst_15 {dimension_numbers = #tpu.dot_dimension_numbers<[1], [0], [0], [1], [0, 0, 1, 1], [], []>} : vector<8x8xbf16>, vector<8x8xbf16>, vector<8x8xf32> -> vector<8x8xf32>
    %c0_16 = arith.constant 0 : index
    %c8 = arith.constant 8 : index
    %49 = vector.load %arg7[%c0_16, %c8] : memref<8x32xf32, #tpu.memory_space<vmem>>, vector<8x8xf32>
    tpu.vector_store %arg7[%c0_16, %c8], %48 {strides = array<i32>} : memref<8x32xf32, #tpu.memory_space<vmem>>, vector<8x8xf32>,
    %50 = vector.extract_strided_slice %1 {offsets = [0, 16], sizes = [8, 8], strides = [1, 1]} : vector<8x32xf32> to vector<8x8xf32>
    %51 = vector.extract_strided_slice %4 {offsets = [0, 16], sizes = [8, 8], strides = [1, 1]} : vector<8x32xf32> to vector<8x8xf32>
    %52 = arith.truncf %50 : vector<8x8xf32> to vector<8x8xbf16>
    %53 = arith.truncf %51 : vector<8x8xf32> to vector<8x8xbf16>
    %cst_17 = arith.constant dense<0.000000e+00> : vector<8x8xf32>
    %54 = tpu.matmul %52, %53, %cst_17 {dimension_numbers = #tpu.dot_dimension_numbers<[1], [1], [0], [0], [0, 0, 1, 0], [], []>} : vector<8x8xbf16>, vector<8x8xbf16>, vector<8x8xf32> -> vector<8x8xf32>
    %cst_18 = arith.constant 0.353553385 : f32
    %55 = vector.broadcast %cst_18 : f32 to vector<8x8xf32>
    %56 = arith.mulf %54, %55 : vector<8x8xf32>
    %cst_19 = arith.constant dense<0xFF800000> : vector<8xf32>
    %57 = vector.multi_reduction <maximumf>, %56, %cst_19 [1] : vector<8x8xf32> to vector<8xf32>
    %58 = vector.shape_cast %57 : vector<8xf32> to vector<8x1xf32>
    %59 = vector.broadcast %58 : vector<8x1xf32> to vector<8x8xf32>
    %60 = arith.subf %56, %59 : vector<8x8xf32>
    %61 = math.exp %60 : vector<8x8xf32>
    %cst_20 = arith.constant dense<0.000000e+00> : vector<8xf32>
    %62 = vector.multi_reduction <add>, %61, %cst_20 [1] : vector<8x8xf32> to vector<8xf32>
    %63 = vector.shape_cast %62 : vector<8xf32> to vector<8x1xf32>
    %64 = tpu.reciprocal %63 {approx = true} : vector<8x1xf32> -> vector<8x1xf32>
    %65 = vector.broadcast %64 : vector<8x1xf32> to vector<8x8xf32>
    %66 = arith.mulf %61, %65 : vector<8x8xf32>
    %67 = vector.extract_strided_slice %5 {offsets = [0, 16], sizes = [8, 8], strides = [1, 1]} : vector<8x32xf32> to vector<8x8xf32>
    %68 = arith.truncf %66 : vector<8x8xf32> to vector<8x8xbf16>
    %69 = arith.truncf %67 : vector<8x8xf32> to vector<8x8xbf16>
    %cst_21 = arith.constant dense<0.000000e+00> : vector<8x8xf32>
    %70 = tpu.matmul %68, %69, %cst_21 {dimension_numbers = #tpu.dot_dimension_numbers<[1], [0], [0], [1], [0, 0, 1, 1], [], []>} : vector<8x8xbf16>, vector<8x8xbf16>, vector<8x8xf32> -> vector<8x8xf32>
    %c0_22 = arith.constant 0 : index
    %c16 = arith.constant 16 : index
    %71 = vector.load %arg7[%c0_22, %c16] : memref<8x32xf32, #tpu.memory_space<vmem>>, vector<8x8xf32>
    tpu.vector_store %arg7[%c0_22, %c16], %70 {strides = array<i32>} : memref<8x32xf32, #tpu.memory_space<vmem>>, vector<8x8xf32>,
    %72 = vector.extract_strided_slice %1 {offsets = [0, 24], sizes = [8, 8], strides = [1, 1]} : vector<8x32xf32> to vector<8x8xf32>
    %73 = vector.extract_strided_slice %4 {offsets = [0, 24], sizes = [8, 8], strides = [1, 1]} : vector<8x32xf32> to vector<8x8xf32>
    %74 = arith.truncf %72 : vector<8x8xf32> to vector<8x8xbf16>
    %75 = arith.truncf %73 : vector<8x8xf32> to vector<8x8xbf16>
    %cst_23 = arith.constant dense<0.000000e+00> : vector<8x8xf32>
    %76 = tpu.matmul %74, %75, %cst_23 {dimension_numbers = #tpu.dot_dimension_numbers<[1], [1], [0], [0], [0, 0, 1, 0], [], []>} : vector<8x8xbf16>, vector<8x8xbf16>, vector<8x8xf32> -> vector<8x8xf32>
    %cst_24 = arith.constant 0.353553385 : f32
    %77 = vector.broadcast %cst_24 : f32 to vector<8x8xf32>
    %78 = arith.mulf %76, %77 : vector<8x8xf32>
    %cst_25 = arith.constant dense<0xFF800000> : vector<8xf32>
    %79 = vector.multi_reduction <maximumf>, %78, %cst_25 [1] : vector<8x8xf32> to vector<8xf32>
    %80 = vector.shape_cast %79 : vector<8xf32> to vector<8x1xf32>
    %81 = vector.broadcast %80 : vector<8x1xf32> to vector<8x8xf32>
    %82 = arith.subf %78, %81 : vector<8x8xf32>
    %83 = math.exp %82 : vector<8x8xf32>
    %cst_26 = arith.constant dense<0.000000e+00> : vector<8xf32>
    %84 = vector.multi_reduction <add>, %83, %cst_26 [1] : vector<8x8xf32> to vector<8xf32>
    %85 = vector.shape_cast %84 : vector<8xf32> to vector<8x1xf32>
    %86 = tpu.reciprocal %85 {approx = true} : vector<8x1xf32> -> vector<8x1xf32>
    %87 = vector.broadcast %86 : vector<8x1xf32> to vector<8x8xf32>
    %88 = arith.mulf %83, %87 : vector<8x8xf32>
    %89 = vector.extract_strided_slice %5 {offsets = [0, 24], sizes = [8, 8], strides = [1, 1]} : vector<8x32xf32> to vector<8x8xf32>
    %90 = arith.truncf %88 : vector<8x8xf32> to vector<8x8xbf16>
    %91 = arith.truncf %89 : vector<8x8xf32> to vector<8x8xbf16>
    %cst_27 = arith.constant dense<0.000000e+00> : vector<8x8xf32>
    %92 = tpu.matmul %90, %91, %cst_27 {dimension_numbers = #tpu.dot_dimension_numbers<[1], [0], [0], [1], [0, 0, 1, 1], [], []>} : vector<8x8xbf16>, vector<8x8xbf16>, vector<8x8xf32> -> vector<8x8xf32>
    %c0_28 = arith.constant 0 : index
    %c24 = arith.constant 24 : index
    %93 = vector.load %arg7[%c0_28, %c24] : memref<8x32xf32, #tpu.memory_space<vmem>>, vector<8x8xf32>
    tpu.vector_store %arg7[%c0_28, %c24], %92 {strides = array<i32>} : memref<8x32xf32, #tpu.memory_space<vmem>>, vector<8x8xf32>,
    %c0_29 = arith.constant 0 : index
    %c0_30 = arith.constant 0 : index
    %94 = vector.load %arg7[%c0_29, %c0_30] : memref<8x32xf32, #tpu.memory_space<vmem>>, vector<8x32xf32>
    %c0_31 = arith.constant 0 : index
    %c0_32 = arith.constant 0 : index
    %95 = vector.load %arg4[%c0_31, %c0_32] : memref<32x32xbf16, #tpu.memory_space<vmem>>, vector<32x32xbf16>
    %96 = arith.truncf %94 : vector<8x32xf32> to vector<8x32xbf16>
    %cst_33 = arith.constant dense<0.000000e+00> : vector<8x32xf32>
    %97 = tpu.matmul %96, %95, %cst_33 {dimension_numbers = #tpu.dot_dimension_numbers<[1], [0], [0], [1], [0, 0, 1, 1], [], []>} : vector<8x32xbf16>, vector<32x32xbf16>, vector<8x32xf32> -> vector<8x32xf32>
    %c0_34 = arith.constant 0 : index
    %c0_35 = arith.constant 0 : index
    %98 = vector.load %arg5[%c0_34, %c0_35] : memref<1x32xf32, #tpu.memory_space<vmem>>, vector<1x32xf32>
    %99 = vector.broadcast %98 : vector<1x32xf32> to vector<8x32xf32>
    %100 = arith.addf %97, %99 : vector<8x32xf32>
    %c0_36 = arith.constant 0 : index
    %c0_37 = arith.constant 0 : index
    %c0_38 = arith.constant 0 : index
    %101 = vector.load %arg6[%c0_36, %c0_37, %c0_38] : memref<1x8x32xf32, #tpu.memory_space<vmem>>, vector<1x8x32xf32>
    %102 = vector.shape_cast %101 : vector<1x8x32xf32> to vector<8x32xf32>
    %103 = vector.shape_cast %100 : vector<8x32xf32> to vector<1x8x32xf32>
    tpu.vector_store %arg6[%c0_36, %c0_37, %c0_38], %103 {strides = array<i32>} : memref<1x8x32xf32, #tpu.memory_space<vmem>>, vector<1x8x32xf32>,
    return
  }
  func.func @transform_0(%arg0: i32, %arg1: i32) -> (i32, i32, i32) {
    %c0_i32 = arith.constant 0 : i32
    %c0_i32_0 = arith.constant 0 : i32
    return %arg0, %arg1, %c0_i32 : i32, i32, i32
  }
  func.func @transform_1(%arg0: i32, %arg1: i32) -> (i32, i32, i32) {
    %c0_i32 = arith.constant 0 : i32
    %c0_i32_0 = arith.constant 0 : i32
    %c0_i32_1 = arith.constant 0 : i32
    return %arg0, %c0_i32, %c0_i32_0 : i32, i32, i32
  }
  func.func @transform_2(%arg0: i32, %arg1: i32) -> (i32, i32) {
    %c0_i32 = arith.constant 0 : i32
    %c0_i32_0 = arith.constant 0 : i32
    %c0_i32_1 = arith.constant 0 : i32
    return %c0_i32, %c0_i32_0 : i32, i32
  }
  func.func @transform_3(%arg0: i32, %arg1: i32) -> (i32, i32) {
    %c0_i32 = arith.constant 0 : i32
    %c0_i32_0 = arith.constant 0 : i32
    %c0_i32_1 = arith.constant 0 : i32
    return %c0_i32, %c0_i32_0 : i32, i32
  }
  func.func @transform_4(%arg0: i32, %arg1: i32) -> (i32, i32, i32) {
    %c0_i32 = arith.constant 0 : i32
    %c0_i32_0 = arith.constant 0 : i32
    return %arg0, %arg1, %c0_i32 : i32, i32, i32
  }
}

</mosaic_0001>

<llo_original>
// kernel: encoder_forward.19
$region0: #{encoder_forward.19}
  #allocation0 [shape = 'u32[]', space=smem, size = 0x4, offset = 0x4, fixed_abs, tag = 'smem constant byte address 0x4 - core index']
  #allocation1 [shape = 'u32[144,128]{1,0:T(1,128)}', space=vmem, size = 0x12000, scoped, tag = 'internal scratch']
  %s0 = inlined_call_operand.vmem [shape: f32[16,32], index: 0, kind: input, shape index: {}]
  %s1 = inlined_call_operand.vmem [shape: bf16[32,32], index: 1, kind: input, shape index: {}]
  %s2 = inlined_call_operand.vmem [shape: f32[1,32], index: 2, kind: input, shape index: {}]
  %s3 = inlined_call_operand.vmem [shape: f32[16,32], index: 3, kind: output, shape index: {}]
  %s4 = sld [smem:[#allocation0]]
  $region22: #{encoder_forward.19} parent=0
    _
  %s6 = ssub.s32 1, %s4
  %s7 = scalar_select 0, %s6, %s4
  // Predicated region
  $region2: #{encoder_forward.19} parent=0 // pred_check
    _
  $region3: #{encoder_forward.19} parent=0 // pred_check_branch
    %9 = sbr.rel (0) target = $region5
  $region4: #{encoder_forward.19} parent=0 // pred_region
    _
  $region5: #{encoder_forward.19} parent=0 // pred_fallthru
    _
  // Predicated region
  $region6: #{encoder_forward.19} parent=0 // pred_check
    _
  $region7: #{encoder_forward.19} parent=0 // pred_check_branch
    %11 = sbr.rel (0) target = $region9
  $region8: #{encoder_forward.19} parent=0 // pred_region
    _
  $region9: #{encoder_forward.19} parent=0 // pred_fallthru
    _
  // Predicated region
  $region10: #{encoder_forward.19} parent=0 // pred_check
    _
  $region11: #{encoder_forward.19} parent=0 // pred_check_branch
    %13 = sbr.rel (0) target = $region13
  $region12: #{encoder_forward.19} parent=0 // pred_region
    _
  $region13: #{encoder_forward.19} parent=0 // pred_fallthru
    _
  %v15 = vld [vmem:[%s0] sm:$0xff]
  %v16 = vld [vmem:[%s0 + $0x8] sm:$0xff]
  %v17 = vpack.c.bf16 %v16, %v15
  %v18 = vld [vmem:[%s1] sm:$0xf]
  %v19 = vld [vmem:[%s1 + $0x4] sm:$0xf]
  %v20 = vld [vmem:[%s1 + $0x8] sm:$0xf]
  %v21 = vld [vmem:[%s1 + $0xc] sm:$0xf]
  %v22 = vld [vmem:[%s2] sm:$0x1]
  %v24 = vlaneseq
  %v25 = vshrl.u32 %v24, 7
  %v26 = vsub.s32 0, %v25
  %v27 = vrot.slane %v22, %v26
  %v33 = vunpack.c.l.b16 %v18
  %v34 = vunpack.c.l.b16 %v19
  %v35 = vunpack.c.l.b16 %v20
  %v36 = vunpack.c.l.b16 %v21
  %v37 = vpack.c.b16 %v34, %v33
  %v38 = vpack.c.b16 %v36, %v35
  %vm41 = vcmask 261120
  %v43 = vsel %vm41, %v17, 0
  %45 = vmatprep.subr.bf16.mxu0 0
  %46 = vmatpush1.bf16.msra.mxu0 %v37
  %47 = vmatprep.subr.bf16.mxu0 0
  %48 = vmatpush1.bf16.msra.mxu0 %v38
  %49 = vmatprep.subr.bf16.mxu0 0
  %50 = vmatpush1.bf16.msra.mxu0 0
  %51 = vmatprep.subr.bf16.mxu0 0
  %52 = vmatpush1.bf16.msra.mxu0 0
  %53 = vmatprep.subr.bf16.mxu0 0
  %54 = vmatpush1.bf16.msra.mxu0 0
  %55 = vmatprep.subr.bf16.mxu0 0
  %56 = vmatpush1.bf16.msra.mxu0 0
  %57 = vmatprep.subr.bf16.mxu0 0
  %58 = vmatpush1.bf16.msra.mxu0 0
  %59 = vmatprep.subr.bf16.mxu0 0
  %60 = vmatpush1.bf16.msra.mxu0 0
  %61 = vmatprep.subr.bf16.mxu0 0
  %62 = vmatpush1.bf16.msra.mxu0 0
  %63 = vmatprep.subr.bf16.mxu0 0
  %64 = vmatpush1.bf16.msra.mxu0 0
  %65 = vmatprep.subr.bf16.mxu0 0
  %66 = vmatpush1.bf16.msra.mxu0 0
  %67 = vmatprep.subr.bf16.mxu0 0
  %68 = vmatpush1.bf16.msra.mxu0 0
  %69 = vmatprep.subr.bf16.mxu0 0
  %70 = vmatpush1.bf16.msra.mxu0 0
  %71 = vmatprep.subr.bf16.mxu0 0
  %72 = vmatpush1.bf16.msra.mxu0 0
  %73 = vmatprep.subr.bf16.mxu0 0
  %74 = vmatpush1.bf16.msra.mxu0 0
  %75 = vmatprep.subr.bf16.mxu0 0
  %76 = vmatpush1.bf16.msra.mxu0 0
  %77 = vmatprep.mubr.bf16.mxu0 0
  %78 = vmatmul.mubr.bf16.gmra.mrb[0].mxu0 %v43
  %v79 = vpop.f32.mrb[0].mxu0
  %v80 = vadd.f32 %v27, %v79
  %v81 = vpop.f32.mrb[0].mxu0
  %v82 = vpop.f32.mrb[0].mxu0
  %v83 = vadd.f32 %v27, %v82
  %v84 = vpop.f32.mrb[0].mxu0
  %85 = vdwg.mxu0
  %86 = vst.msk [vmem:[%s3] sm:$0xff] %vm41, %v80
  %87 = vst.msk [vmem:[%s3 + $0x8] sm:$0xff] %vm41, %v83
  // Predicated region
  $region14: #{encoder_forward.19} parent=0 // pred_check
    _
  $region15: #{encoder_forward.19} parent=0 // pred_check_branch
    %89 = sbr.rel (0) target = $region17
  $region16: #{encoder_forward.19} parent=0 // pred_region
    _
  $region17: #{encoder_forward.19} parent=0 // pred_fallthru
    _
  // Predicated region
  $region18: #{encoder_forward.19} parent=0 // pred_check
    _
  $region19: #{encoder_forward.19} parent=0 // pred_check_branch
    %91 = sbr.rel (0) target = $region21
  $region20: #{encoder_forward.19} parent=0 // pred_region
    _
  $region21: #{encoder_forward.19} parent=0 // pred_fallthru
    _

// kernel: encoder_forward.22
$region0: #{encoder_forward.22}
  #allocation0 [shape = 'u32[]', space=smem, size = 0x4, offset = 0x4, fixed_abs, tag = 'smem constant byte address 0x4 - core index']
  #allocation1 [shape = 'u32[144,128]{1,0:T(1,128)}', space=vmem, size = 0x12000, scoped, tag = 'internal scratch']
  %s0 = inlined_call_operand.vmem [shape: f32[16,32], index: 0, kind: input, shape index: {}]
  %s1 = inlined_call_operand.vmem [shape: bf16[32,64], index: 1, kind: input, shape index: {}]
  %s2 = inlined_call_operand.vmem [shape: f32[1,64], index: 2, kind: input, shape index: {}]
  %s3 = inlined_call_operand.vmem [shape: f32[16,64], index: 3, kind: output, shape index: {}]
  %s4 = sld [smem:[#allocation0]]
  $region22: #{encoder_forward.22} parent=0
    _
  %s6 = ssub.s32 1, %s4
  %s7 = scalar_select 0, %s6, %s4
  // Predicated region
  $region2: #{encoder_forward.22} parent=0 // pred_check
    _
  $region3: #{encoder_forward.22} parent=0 // pred_check_branch
    %9 = sbr.rel (0) target = $region5
  $region4: #{encoder_forward.22} parent=0 // pred_region
    _
  $region5: #{encoder_forward.22} parent=0 // pred_fallthru
    _
  // Predicated region
  $region6: #{encoder_forward.22} parent=0 // pred_check
    _
  $region7: #{encoder_forward.22} parent=0 // pred_check_branch
    %11 = sbr.rel (0) target = $region9
  $region8: #{encoder_forward.22} parent=0 // pred_region
    _
  $region9: #{encoder_forward.22} parent=0 // pred_fallthru
    _
  // Predicated region
  $region10: #{encoder_forward.22} parent=0 // pred_check
    _
  $region11: #{encoder_forward.22} parent=0 // pred_check_branch
    %13 = sbr.rel (0) target = $region13
  $region12: #{encoder_forward.22} parent=0 // pred_region
    _
  $region13: #{encoder_forward.22} parent=0 // pred_fallthru
    _
  %v15 = vld [vmem:[%s0] sm:$0xff]
  %v16 = vld [vmem:[%s0 + $0x8] sm:$0xff]
  %v17 = vpack.c.bf16 %v16, %v15
  %v18 = vld [vmem:[%s1] sm:$0xf]
  %v19 = vld [vmem:[%s1 + $0x4] sm:$0xf]
  %v20 = vld [vmem:[%s1 + $0x8] sm:$0xf]
  %v21 = vld [vmem:[%s1 + $0xc] sm:$0xf]
  %v22 = vld [vmem:[%s2] sm:$0x1]
  %v24 = vlaneseq
  %v25 = vshrl.u32 %v24, 7
  %v26 = vsub.s32 0, %v25
  %v27 = vrot.slane %v22, %v26
  %v33 = vunpack.c.l.b16 %v18
  %v34 = vunpack.c.l.b16 %v19
  %v35 = vunpack.c.l.b16 %v20
  %v36 = vunpack.c.l.b16 %v21
  %v37 = vpack.c.b16 %v34, %v33
  %v38 = vpack.c.b16 %v36, %v35
  %vm41 = vcmask 261120
  %v43 = vsel %vm41, %v17, 0
  %45 = vmatprep.subr.bf16.mxu0 0
  %46 = vmatpush1.bf16.msra.mxu0 %v37
  %47 = vmatprep.subr.bf16.mxu0 0
  %48 = vmatpush1.bf16.msra.mxu0 %v38
  %49 = vmatprep.subr.bf16.mxu0 0
  %50 = vmatpush1.bf16.msra.mxu0 0
  %51 = vmatprep.subr.bf16.mxu0 0
  %52 = vmatpush1.bf16.msra.mxu0 0
  %53 = vmatprep.subr.bf16.mxu0 0
  %54 = vmatpush1.bf16.msra.mxu0 0
  %55 = vmatprep.subr.bf16.mxu0 0
  %56 = vmatpush1.bf16.msra.mxu0 0
  %57 = vmatprep.subr.bf16.mxu0 0
  %58 = vmatpush1.bf16.msra.mxu0 0
  %59 = vmatprep.subr.bf16.mxu0 0
  %60 = vmatpush1.bf16.msra.mxu0 0
  %61 = vmatprep.subr.bf16.mxu0 0
  %62 = vmatpush1.bf16.msra.mxu0 0
  %63 = vmatprep.subr.bf16.mxu0 0
  %64 = vmatpush1.bf16.msra.mxu0 0
  %65 = vmatprep.subr.bf16.mxu0 0
  %66 = vmatpush1.bf16.msra.mxu0 0
  %67 = vmatprep.subr.bf16.mxu0 0
  %68 = vmatpush1.bf16.msra.mxu0 0
  %69 = vmatprep.subr.bf16.mxu0 0
  %70 = vmatpush1.bf16.msra.mxu0 0
  %71 = vmatprep.subr.bf16.mxu0 0
  %72 = vmatpush1.bf16.msra.mxu0 0
  %73 = vmatprep.subr.bf16.mxu0 0
  %74 = vmatpush1.bf16.msra.mxu0 0
  %75 = vmatprep.subr.bf16.mxu0 0
  %76 = vmatpush1.bf16.msra.mxu0 0
  %77 = vmatprep.mubr.bf16.mxu0 0
  %78 = vmatmul.mubr.bf16.gmra.mrb[0].mxu0 %v43
  %v79 = vpop.f32.mrb[0].mxu0
  %v80 = vadd.f32 %v27, %v79
  %v81 = vpop.f32.mrb[0].mxu0
  %v82 = vpop.f32.mrb[0].mxu0
  %v83 = vadd.f32 %v27, %v82
  %v84 = vpop.f32.mrb[0].mxu0
  %85 = vdwg.mxu0
  %vm86 = vcmask 523264
  %87 = vst.msk [vmem:[%s3] sm:$0xff] %vm86, %v80
  %88 = vst.msk [vmem:[%s3 + $0x8] sm:$0xff] %vm86, %v83
  // Predicated region
  $region14: #{encoder_forward.22} parent=0 // pred_check
    _
  $region15: #{encoder_forward.22} parent=0 // pred_check_branch
    %90 = sbr.rel (0) target = $region17
  $region16: #{encoder_forward.22} parent=0 // pred_region
    _
  $region17: #{encoder_forward.22} parent=0 // pred_fallthru
    _
  // Predicated region
  $region18: #{encoder_forward.22} parent=0 // pred_check
    _
  $region19: #{encoder_forward.22} parent=0 // pred_check_branch
    %92 = sbr.rel (0) target = $region21
  $region20: #{encoder_forward.22} parent=0 // pred_region
    _
  $region21: #{encoder_forward.22} parent=0 // pred_fallthru
    _

// kernel: encoder_forward.20
$region0: #{encoder_forward.20}
  #allocation0 [shape = 'u32[]', space=smem, size = 0x4, offset = 0x4, fixed_abs, tag = 'smem constant byte address 0x4 - core index']
  #allocation1 [shape = 'u32[144,128]{1,0:T(1,128)}', space=vmem, size = 0x12000, scoped, tag = 'internal scratch']
  %s0 = inlined_call_operand.vmem [shape: f32[16,32], index: 0, kind: input, shape index: {}]
  %s1 = inlined_call_operand.vmem [shape: bf16[32,32], index: 1, kind: input, shape index: {}]
  %s2 = inlined_call_operand.vmem [shape: f32[1,32], index: 2, kind: input, shape index: {}]
  %s3 = inlined_call_operand.vmem [shape: bf16[32,32], index: 3, kind: input, shape index: {}]
  %s4 = inlined_call_operand.vmem [shape: f32[1,32], index: 4, kind: input, shape index: {}]
  %s5 = inlined_call_operand.vmem [shape: f32[16,32], index: 5, kind: output, shape index: {}]
  %s6 = sld [smem:[#allocation0]]
  $region30: #{encoder_forward.20} parent=0
    _
  %s8 = ssub.s32 1, %s6
  %s9 = scalar_select 0, %s8, %s6
  // Predicated region
  $region2: #{encoder_forward.20} parent=0 // pred_check
    _
  $region3: #{encoder_forward.20} parent=0 // pred_check_branch
    %11 = sbr.rel (0) target = $region5
  $region4: #{encoder_forward.20} parent=0 // pred_region
    _
  $region5: #{encoder_forward.20} parent=0 // pred_fallthru
    _
  // Predicated region
  $region6: #{encoder_forward.20} parent=0 // pred_check
    _
  $region7: #{encoder_forward.20} parent=0 // pred_check_branch
    %13 = sbr.rel (0) target = $region9
  $region8: #{encoder_forward.20} parent=0 // pred_region
    _
  $region9: #{encoder_forward.20} parent=0 // pred_fallthru
    _
  // Predicated region
  $region10: #{encoder_forward.20} parent=0 // pred_check
    _
  $region11: #{encoder_forward.20} parent=0 // pred_check_branch
    %15 = sbr.rel (0) target = $region13
  $region12: #{encoder_forward.20} parent=0 // pred_region
    _
  $region13: #{encoder_forward.20} parent=0 // pred_fallthru
    _
  // Predicated region
  $region14: #{encoder_forward.20} parent=0 // pred_check
    _
  $region15: #{encoder_forward.20} parent=0 // pred_check_branch
    %17 = sbr.rel (0) target = $region17
  $region16: #{encoder_forward.20} parent=0 // pred_region
    _
  $region17: #{encoder_forward.20} parent=0 // pred_fallthru
    _
  // Predicated region
  $region18: #{encoder_forward.20} parent=0 // pred_check
    _
  $region19: #{encoder_forward.20} parent=0 // pred_check_branch
    %19 = sbr.rel (0) target = $region21
  $region20: #{encoder_forward.20} parent=0 // pred_region
    _
  $region21: #{encoder_forward.20} parent=0 // pred_fallthru
    _
  %v21 = vld [vmem:[%s0] sm:$0xff]
  %v22 = vld [vmem:[%s0 + $0x8] sm:$0xff]
  %v23 = vpack.c.bf16 %v22, %v21
  %v24 = vld [vmem:[%s1] sm:$0xf]
  %v25 = vld [vmem:[%s1 + $0x4] sm:$0xf]
  %v26 = vld [vmem:[%s1 + $0x8] sm:$0xf]
  %v27 = vld [vmem:[%s1 + $0xc] sm:$0xf]
  %v28 = vld [vmem:[%s2] sm:$0x1]
  %v30 = vlaneseq
  %v31 = vshrl.u32 %v30, 7
  %v32 = vsub.s32 0, %v31
  %v33 = vrot.slane %v28, %v32
  %v39 = vunpack.c.l.b16 %v24
  %v40 = vunpack.c.l.b16 %v25
  %v41 = vunpack.c.l.b16 %v26
  %v42 = vunpack.c.l.b16 %v27
  %v43 = vpack.c.b16 %v40, %v39
  %v44 = vpack.c.b16 %v42, %v41
  %vm47 = vcmask 261120
  %v49 = vsel %vm47, %v23, 0
  %51 = vmatprep.subr.bf16.mxu0 0
  %52 = vmatpush1.bf16.msra.mxu0 %v43
  %53 = vmatprep.subr.bf16.mxu0 0
  %54 = vmatpush1.bf16.msra.mxu0 %v44
  %55 = vmatprep.subr.bf16.mxu0 0
  %56 = vmatpush1.bf16.msra.mxu0 0
  %57 = vmatprep.subr.bf16.mxu0 0
  %58 = vmatpush1.bf16.msra.mxu0 0
  %59 = vmatprep.subr.bf16.mxu0 0
  %60 = vmatpush1.bf16.msra.mxu0 0
  %61 = vmatprep.subr.bf16.mxu0 0
  %62 = vmatpush1.bf16.msra.mxu0 0
  %63 = vmatprep.subr.bf16.mxu0 0
  %64 = vmatpush1.bf16.msra.mxu0 0
  %65 = vmatprep.subr.bf16.mxu0 0
  %66 = vmatpush1.bf16.msra.mxu0 0
  %67 = vmatprep.subr.bf16.mxu0 0
  %68 = vmatpush1.bf16.msra.mxu0 0
  %69 = vmatprep.subr.bf16.mxu0 0
  %70 = vmatpush1.bf16.msra.mxu0 0
  %71 = vmatprep.subr.bf16.mxu0 0
  %72 = vmatpush1.bf16.msra.mxu0 0
  %73 = vmatprep.subr.bf16.mxu0 0
  %74 = vmatpush1.bf16.msra.mxu0 0
  %75 = vmatprep.subr.bf16.mxu0 0
  %76 = vmatpush1.bf16.msra.mxu0 0
  %77 = vmatprep.subr.bf16.mxu0 0
  %78 = vmatpush1.bf16.msra.mxu0 0
  %79 = vmatprep.subr.bf16.mxu0 0
  %80 = vmatpush1.bf16.msra.mxu0 0
  %81 = vmatprep.subr.bf16.mxu0 0
  %82 = vmatpush1.bf16.msra.mxu0 0
  %83 = vmatprep.mubr.bf16.mxu0 0
  %84 = vmatmul.mubr.bf16.gmra.mrb[0].mxu0 %v49
  %v85 = vpop.f32.mrb[0].mxu0
  %v86 = vadd.f32 %v33, %v85
  %v87 = vpop.f32.mrb[0].mxu0
  %v88 = vpop.f32.mrb[0].mxu0
  %v89 = vadd.f32 %v33, %v88
  %v90 = vpop.f32.mrb[0].mxu0
  %91 = vdwg.mxu0
  %v92 = vxor.u32 %v86, 2147483648
  %v93 = vxor.u32 %v89, 2147483648
  %v94 = vmul.f32 %v92, 1.442695
  %v95 = vpow.pop %v94
  %v96 = vmul.f32 %v93, 1.442695
  %v97 = vpow.pop %v96
  %v98 = vadd.f32 %v95, 1.0
  %v99 = vadd.f32 %v97, 1.0
  %v100 = vrcp.pop %v98
  %v101 = vmul.f32 1.0, %v100
  %v102 = vrcp.pop %v99
  %v103 = vmul.f32 1.0, %v102
  %v104 = vmul.f32 %v86, %v101
  %v105 = vmul.f32 %v89, %v103
  %v106 = vpack.c.bf16 %v105, %v104
  %v107 = vld [vmem:[%s3] sm:$0xf]
  %v108 = vld [vmem:[%s3 + $0x4] sm:$0xf]
  %v109 = vld [vmem:[%s3 + $0x8] sm:$0xf]
  %v110 = vld [vmem:[%s3 + $0xc] sm:$0xf]
  %v111 = vld [vmem:[%s4] sm:$0x1]
  %v113 = vlaneseq
  %v114 = vshrl.u32 %v113, 7
  %v115 = vsub.s32 0, %v114
  %v116 = vrot.slane %v111, %v115
  %v122 = vunpack.c.l.b16 %v107
  %v123 = vunpack.c.l.b16 %v108
  %v124 = vunpack.c.l.b16 %v109
  %v125 = vunpack.c.l.b16 %v110
  %v126 = vpack.c.b16 %v123, %v122
  %v127 = vpack.c.b16 %v125, %v124
  %v131 = vsel %vm47, %v106, 0
  %133 = vmatprep.subr.bf16.mxu0 0
  %134 = vmatpush1.bf16.msra.mxu0 %v126
  %135 = vmatprep.subr.bf16.mxu0 0
  %136 = vmatpush1.bf16.msra.mxu0 %v127
  %137 = vmatprep.subr.bf16.mxu0 0
  %138 = vmatpush1.bf16.msra.mxu0 0
  %139 = vmatprep.subr.bf16.mxu0 0
  %140 = vmatpush1.bf16.msra.mxu0 0
  %141 = vmatprep.subr.bf16.mxu0 0
  %142 = vmatpush1.bf16.msra.mxu0 0
  %143 = vmatprep.subr.bf16.mxu0 0
  %144 = vmatpush1.bf16.msra.mxu0 0
  %145 = vmatprep.subr.bf16.mxu0 0
  %146 = vmatpush1.bf16.msra.mxu0 0
  %147 = vmatprep.subr.bf16.mxu0 0
  %148 = vmatpush1.bf16.msra.mxu0 0
  %149 = vmatprep.subr.bf16.mxu0 0
  %150 = vmatpush1.bf16.msra.mxu0 0
  %151 = vmatprep.subr.bf16.mxu0 0
  %152 = vmatpush1.bf16.msra.mxu0 0
  %153 = vmatprep.subr.bf16.mxu0 0
  %154 = vmatpush1.bf16.msra.mxu0 0
  %155 = vmatprep.subr.bf16.mxu0 0
  %156 = vmatpush1.bf16.msra.mxu0 0
  %157 = vmatprep.subr.bf16.mxu0 0
  %158 = vmatpush1.bf16.msra.mxu0 0
  %159 = vmatprep.subr.bf16.mxu0 0
  %160 = vmatpush1.bf16.msra.mxu0 0
  %161 = vmatprep.subr.bf16.mxu0 0
  %162 = vmatpush1.bf16.msra.mxu0 0
  %163 = vmatprep.subr.bf16.mxu0 0
  %164 = vmatpush1.bf16.msra.mxu0 0
  %165 = vmatprep.mubr.bf16.mxu0 0
  %166 = vmatmul.mubr.bf16.gmra.mrb[0].mxu0 %v131
  %v167 = vpop.f32.mrb[0].mxu0
  %v168 = vadd.f32 %v116, %v167
  %v169 = vpop.f32.mrb[0].mxu0
  %v170 = vpop.f32.mrb[0].mxu0
  %v171 = vadd.f32 %v116, %v170
  %v172 = vpop.f32.mrb[0].mxu0
  %173 = vdwg.mxu0
  %174 = vst.msk [vmem:[%s5] sm:$0xff] %vm47, %v168
  %175 = vst.msk [vmem:[%s5 + $0x8] sm:$0xff] %vm47, %v171
  // Predicated region
  $region22: #{encoder_forward.20} parent=0 // pred_check
    _
  $region23: #{encoder_forward.20} parent=0 // pred_check_branch
    %177 = sbr.rel (0) target = $region25
  $region24: #{encoder_forward.20} parent=0 // pred_region
    _
  $region25: #{encoder_forward.20} parent=0 // pred_fallthru
    _
  // Predicated region
  $region26: #{encoder_forward.20} parent=0 // pred_check
    _
  $region27: #{encoder_forward.20} parent=0 // pred_check_branch
    %179 = sbr.rel (0) target = $region29
  $region28: #{encoder_forward.20} parent=0 // pred_region
    _
  $region29: #{encoder_forward.20} parent=0 // pred_fallthru
    _

// kernel: encoder_forward.23
$region0: #{encoder_forward.23}
  #allocation0 [shape = 'u32[]', space=smem, size = 0x4, offset = 0x4, fixed_abs, tag = 'smem constant byte address 0x4 - core index']
  #allocation1 [shape = 'u32[144,128]{1,0:T(1,128)}', space=vmem, size = 0x12000, scoped, tag = 'internal scratch']
  #allocation2 [shape = 'f32[8,32]{1,0:T(8,128)}', space=vmem, size = 0x1000, scoped, tag = 'scratch operand']
  %s0 = inlined_call_operand.vmem [shape: f32[2,8,32], index: 0, kind: input, shape index: {}]
  %s1 = inlined_call_operand.vmem [shape: f32[2,8,64], index: 1, kind: input, shape index: {}]
  %s2 = inlined_call_operand.vmem [shape: f32[2,8,32], index: 2, kind: input, shape index: {}]
  %s3 = inlined_call_operand.vmem [shape: f32[2,8,8], index: 3, kind: input, shape index: {}]
  %s4 = inlined_call_operand.vmem [shape: f32[2,8,8], index: 4, kind: input, shape index: {}]
  %s5 = inlined_call_operand.vmem [shape: f32[2,8,8], index: 5, kind: input, shape index: {}]
  %s6 = inlined_call_operand.vmem [shape: f32[2,8,8], index: 6, kind: input, shape index: {}]
  %s7 = inlined_call_operand.vmem [shape: f32[2,8,8], index: 7, kind: input, shape index: {}]
  %s8 = inlined_call_operand.vmem [shape: f32[4,32], index: 8, kind: input, shape index: {}]
  %s9 = inlined_call_operand.vmem [shape: f32[1,32], index: 9, kind: input, shape index: {}]
  %s10 = inlined_call_operand.vmem [shape: bf16[32,32], index: 10, kind: input, shape index: {}]
  %s11 = inlined_call_operand.vmem [shape: f32[1,32], index: 11, kind: input, shape index: {}]
  %s12 = inlined_call_operand.vmem [shape: f32[1,32], index: 12, kind: input, shape index: {}]
  %s13 = inlined_call_operand.vmem [shape: f32[1,32], index: 13, kind: input, shape index: {}]
  %s14 = inlined_call_operand.vmem [shape: f32[2,8,32], index: 14, kind: output, shape index: {}]
  %s15 = sld [smem:[#allocation0]]
  $region89: #{encoder_forward.23} parent=0
    _
  %s17 = ssub.s32 1, %s15
  %s18 = scalar_select 0, %s17, %s15
  loop: start=0, step=1, limit=4
  $region2: #{encoder_forward.23} parent=0 // loop_pre_header
    _
  $region3: #{encoder_forward.23} parent=0 // loop_header
    %s20 = sphi 0, %s24
    %p21 = scmp.ge.s32.totalorder %s20, 4
    %s27 = sphi 0, %s39
    %s28 = sphi 0, %s35
    %s29 = sphi 0, %s27
    %s30 = sphi 0, %s28
    %s31 = sphi 0, %s29
    %s32 = sphi 0, %s30
    %s44 = sphi 0, %s46
    %s47 = sphi 0, %s44
    %s48 = sphi 0, %s47
    %s64 = sphi 0, %s48
    %s70 = sphi 0, %s72
    %s73 = sphi 0, %s70
    %s74 = sphi 0, %s73
    %s90 = sphi 0, %s74
    %s98 = sphi 0, %s100
    %s101 = sphi 0, %s98
    %s102 = sphi 0, %s101
    %s118 = sphi 0, %s102
    %s126 = sphi 0, %s128
    %s129 = sphi 0, %s126
    %s130 = sphi 0, %s129
    %s146 = sphi 0, %s130
    %s154 = sphi 0, %s156
    %s157 = sphi 0, %s154
    %s158 = sphi 0, %s157
    %s174 = sphi 0, %s158
    %s182 = sphi 0, %s184
    %s185 = sphi 0, %s182
    %s186 = sphi 0, %s185
    %s202 = sphi 0, %s186
    %s210 = sphi 0, %s212
    %s213 = sphi 0, %s210
    %s214 = sphi 0, %s213
    %s230 = sphi 0, %s214
    %s238 = sphi 0, %s240
    %s241 = sphi 0, %s238
    %s242 = sphi 0, %s241
    %s258 = sphi 0, %s242
    %s262 = sphi 0, %s262
    %s264 = sphi 0, %s262
    %s265 = sphi 0, %s264
    %s279 = sphi 0, %s265
    %s283 = sphi 0, %s283
    %s285 = sphi 0, %s283
    %s286 = sphi 0, %s285
    %s300 = sphi 0, %s286
    %s304 = sphi 0, %s304
    %s306 = sphi 0, %s304
    %s307 = sphi 0, %s306
    %s321 = sphi 0, %s307
    %s325 = sphi 0, %s325
    %s327 = sphi 0, %s325
    %s328 = sphi 0, %s327
    %s342 = sphi 0, %s328
    %s346 = sphi 0, %s346
    %s348 = sphi 0, %s346
    %s349 = sphi 0, %s348
    %s363 = sphi 0, %s349
    %s367 = sphi 0, %s367
    %s369 = sphi 0, %s367
    %s370 = sphi 0, %s369
    %s384 = sphi 0, %s370
    %s392 = sphi 0, %s394
    %s395 = sphi 0, %s392
    %s396 = sphi 0, %s395
    %s412 = sphi 0, %s396
  $region4: #{encoder_forward.23} parent=0 // loop_header_branch
    %23 = sbr.rel (%p21) target = $region8
  $region5: #{encoder_forward.23} parent=0 // loop_body
    %s25 = ssub.s32 %s20, 1
    %s26 = ssub.s32 %s20, 2
    %s33 = sadd.s32 1, %s28
    %p34 = scmp.ge.s32.totalorder %s33, 1
    %s35 = scalar_select %p34, 0, %s33
    %s36 = sadd.s32 1, %s27
    %s37 = scalar_select %p34, %s36, %s27
    %p38 = scmp.ge.s32.totalorder %s37, 2
    %s39 = scalar_select %p38, 0, %s37
    %s40 = ssub.s32 %s27, %s39
    %s41 = ssub.s32 %s28, %s35
    %s42 = sor.u32 %s40, %s41
    %p43 = scmp.eq.s32.totalorder %s42, 0
    %s45 = sadd.s32 %s44, 1
    %s46 = scalar_select %p43, %s44, %s45
    %p49 = pneg %p43
    %p50 = scmp.eq.s32.totalorder %s20, 1
    %p51 = por %p49, %p50
    %p52 = scmp.ne.s32.totalorder %s44, %s47
    %p53 = scmp.eq.s32.totalorder %s20, 0
    %p54 = por %p52, %p53
    %p55 = scmp.ne.s32.totalorder %s44, %s47
    %p56 = scmp.eq.s32.totalorder %s25, 1
    %p57 = por %p55, %p56
    %p58 = scmp.ne.s32.totalorder %s47, %s48
    %p59 = scmp.eq.s32.totalorder %s25, 0
    %p60 = por %p58, %p59
    %p61 = scmp.ne.s32.totalorder %s47, %s48
    %p62 = scmp.eq.s32.totalorder %s26, 1
    %p63 = por %p61, %p62
    %p65 = scmp.ne.s32.totalorder %s48, %s64
    %p66 = scmp.eq.s32.totalorder %s26, 0
    %p67 = por %p65, %p66
    %s68 = ssub.s32 %s27, %s39
    %p69 = scmp.eq.s32.totalorder %s68, 0
    %s71 = sadd.s32 %s70, 1
    %s72 = scalar_select %p69, %s70, %s71
    %p75 = pneg %p69
    %p76 = scmp.eq.s32.totalorder %s20, 1
    %p77 = por %p75, %p76
    %p78 = scmp.ne.s32.totalorder %s70, %s73
    %p79 = scmp.eq.s32.totalorder %s20, 0
    %p80 = por %p78, %p79
    %p81 = scmp.ne.s32.totalorder %s70, %s73
    %p82 = scmp.eq.s32.totalorder %s25, 1
    %p83 = por %p81, %p82
    %p84 = scmp.ne.s32.totalorder %s73, %s74
    %p85 = scmp.eq.s32.totalorder %s25, 0
    %p86 = por %p84, %p85
    %p87 = scmp.ne.s32.totalorder %s73, %s74
    %p88 = scmp.eq.s32.totalorder %s26, 1
    %p89 = por %p87, %p88
    %p91 = scmp.ne.s32.totalorder %s74, %s90
    %p92 = scmp.eq.s32.totalorder %s26, 0
    %p93 = por %p91, %p92
    %s94 = ssub.s32 %s27, %s39
    %s95 = ssub.s32 %s28, %s35
    %s96 = sor.u32 %s94, %s95
    %p97 = scmp.eq.s32.totalorder %s96, 0
    %s99 = sadd.s32 %s98, 1
    %s100 = scalar_select %p97, %s98, %s99
    %p103 = pneg %p97
    %p104 = scmp.eq.s32.totalorder %s20, 1
    %p105 = por %p103, %p104
    %p106 = scmp.ne.s32.totalorder %s98, %s101
    %p107 = scmp.eq.s32.totalorder %s20, 0
    %p108 = por %p106, %p107
    %p109 = scmp.ne.s32.totalorder %s98, %s101
    %p110 = scmp.eq.s32.totalorder %s25, 1
    %p111 = por %p109, %p110
    %p112 = scmp.ne.s32.totalorder %s101, %s102
    %p113 = scmp.eq.s32.totalorder %s25, 0
    %p114 = por %p112, %p113
    %p115 = scmp.ne.s32.totalorder %s101, %s102
    %p116 = scmp.eq.s32.totalorder %s26, 1
    %p117 = por %p115, %p116
    %p119 = scmp.ne.s32.totalorder %s102, %s118
    %p120 = scmp.eq.s32.totalorder %s26, 0
    %p121 = por %p119, %p120
    %s122 = ssub.s32 %s27, %s39
    %s123 = ssub.s32 %s28, %s35
    %s124 = sor.u32 %s122, %s123
    %p125 = scmp.eq.s32.totalorder %s124, 0
    %s127 = sadd.s32 %s126, 1
    %s128 = scalar_select %p125, %s126, %s127
    %p131 = pneg %p125
    %p132 = scmp.eq.s32.totalorder %s20, 1
    %p133 = por %p131, %p132
    %p134 = scmp.ne.s32.totalorder %s126, %s129
    %p135 = scmp.eq.s32.totalorder %s20, 0
    %p136 = por %p134, %p135
    %p137 = scmp.ne.s32.totalorder %s126, %s129
    %p138 = scmp.eq.s32.totalorder %s25, 1
    %p139 = por %p137, %p138
    %p140 = scmp.ne.s32.totalorder %s129, %s130
    %p141 = scmp.eq.s32.totalorder %s25, 0
    %p142 = por %p140, %p141
    %p143 = scmp.ne.s32.totalorder %s129, %s130
    %p144 = scmp.eq.s32.totalorder %s26, 1
    %p145 = por %p143, %p144
    %p147 = scmp.ne.s32.totalorder %s130, %s146
    %p148 = scmp.eq.s32.totalorder %s26, 0
    %p149 = por %p147, %p148
    %s150 = ssub.s32 %s27, %s39
    %s151 = ssub.s32 %s28, %s35
    %s152 = sor.u32 %s150, %s151
    %p153 = scmp.eq.s32.totalorder %s152, 0
    %s155 = sadd.s32 %s154, 1
    %s156 = scalar_select %p153, %s154, %s155
    %p159 = pneg %p153
    %p160 = scmp.eq.s32.totalorder %s20, 1
    %p161 = por %p159, %p160
    %p162 = scmp.ne.s32.totalorder %s154, %s157
    %p163 = scmp.eq.s32.totalorder %s20, 0
    %p164 = por %p162, %p163
    %p165 = scmp.ne.s32.totalorder %s154, %s157
    %p166 = scmp.eq.s32.totalorder %s25, 1
    %p167 = por %p165, %p166
    %p168 = scmp.ne.s32.totalorder %s157, %s158
    %p169 = scmp.eq.s32.totalorder %s25, 0
    %p170 = por %p168, %p169
    %p171 = scmp.ne.s32.totalorder %s157, %s158
    %p172 = scmp.eq.s32.totalorder %s26, 1
    %p173 = por %p171, %p172
    %p175 = scmp.ne.s32.totalorder %s158, %s174
    %p176 = scmp.eq.s32.totalorder %s26, 0
    %p177 = por %p175, %p176
    %s178 = ssub.s32 %s27, %s39
    %s179 = ssub.s32 %s28, %s35
    %s180 = sor.u32 %s178, %s179
    %p181 = scmp.eq.s32.totalorder %s180, 0
    %s183 = sadd.s32 %s182, 1
    %s184 = scalar_select %p181, %s182, %s183
    %p187 = pneg %p181
    %p188 = scmp.eq.s32.totalorder %s20, 1
    %p189 = por %p187, %p188
    %p190 = scmp.ne.s32.totalorder %s182, %s185
    %p191 = scmp.eq.s32.totalorder %s20, 0
    %p192 = por %p190, %p191
    %p193 = scmp.ne.s32.totalorder %s182, %s185
    %p194 = scmp.eq.s32.totalorder %s25, 1
    %p195 = por %p193, %p194
    %p196 = scmp.ne.s32.totalorder %s185, %s186
    %p197 = scmp.eq.s32.totalorder %s25, 0
    %p198 = por %p196, %p197
    %p199 = scmp.ne.s32.totalorder %s185, %s186
    %p200 = scmp.eq.s32.totalorder %s26, 1
    %p201 = por %p199, %p200
    %p203 = scmp.ne.s32.totalorder %s186, %s202
    %p204 = scmp.eq.s32.totalorder %s26, 0
    %p205 = por %p203, %p204
    %s206 = ssub.s32 %s27, %s39
    %s207 = ssub.s32 %s28, %s35
    %s208 = sor.u32 %s206, %s207
    %p209 = scmp.eq.s32.totalorder %s208, 0
    %s211 = sadd.s32 %s210, 1
    %s212 = scalar_select %p209, %s210, %s211
    %p215 = pneg %p209
    %p216 = scmp.eq.s32.totalorder %s20, 1
    %p217 = por %p215, %p216
    %p218 = scmp.ne.s32.totalorder %s210, %s213
    %p219 = scmp.eq.s32.totalorder %s20, 0
    %p220 = por %p218, %p219
    %p221 = scmp.ne.s32.totalorder %s210, %s213
    %p222 = scmp.eq.s32.totalorder %s25, 1
    %p223 = por %p221, %p222
    %p224 = scmp.ne.s32.totalorder %s213, %s214
    %p225 = scmp.eq.s32.totalorder %s25, 0
    %p226 = por %p224, %p225
    %p227 = scmp.ne.s32.totalorder %s213, %s214
    %p228 = scmp.eq.s32.totalorder %s26, 1
    %p229 = por %p227, %p228
    %p231 = scmp.ne.s32.totalorder %s214, %s230
    %p232 = scmp.eq.s32.totalorder %s26, 0
    %p233 = por %p231, %p232
    %s234 = ssub.s32 %s27, %s39
    %s235 = ssub.s32 %s28, %s35
    %s236 = sor.u32 %s234, %s235
    %p237 = scmp.eq.s32.totalorder %s236, 0
    %s239 = sadd.s32 %s238, 1
    %s240 = scalar_select %p237, %s238, %s239
    %p243 = pneg %p237
    %p244 = scmp.eq.s32.totalorder %s20, 1
    %p245 = por %p243, %p244
    %p246 = scmp.ne.s32.totalorder %s238, %s241
    %p247 = scmp.eq.s32.totalorder %s20, 0
    %p248 = por %p246, %p247
    %p249 = scmp.ne.s32.totalorder %s238, %s241
    %p250 = scmp.eq.s32.totalorder %s25, 1
    %p251 = por %p249, %p250
    %p252 = scmp.ne.s32.totalorder %s241, %s242
    %p253 = scmp.eq.s32.totalorder %s25, 0
    %p254 = por %p252, %p253
    %p255 = scmp.ne.s32.totalorder %s241, %s242
    %p256 = scmp.eq.s32.totalorder %s26, 1
    %p257 = por %p255, %p256
    %p259 = scmp.ne.s32.totalorder %s242, %s258
    %p260 = scmp.eq.s32.totalorder %s26, 0
    %p261 = por %p259, %p260
    %s263 = sadd.s32 %s262, 1
    %p266 = scmp.eq.s32.totalorder %s20, 1
    %p267 = scmp.ne.s32.totalorder %s262, %s264
    %p268 = scmp.eq.s32.totalorder %s20, 0
    %p269 = por %p267, %p268
    %p270 = scmp.ne.s32.totalorder %s262, %s264
    %p271 = scmp.eq.s32.totalorder %s25, 1
    %p272 = por %p270, %p271
    %p273 = scmp.ne.s32.totalorder %s264, %s265
    %p274 = scmp.eq.s32.totalorder %s25, 0
    %p275 = por %p273, %p274
    %p276 = scmp.ne.s32.totalorder %s264, %s265
    %p277 = scmp.eq.s32.totalorder %s26, 1
    %p278 = por %p276, %p277
    %p280 = scmp.ne.s32.totalorder %s265, %s279
    %p281 = scmp.eq.s32.totalorder %s26, 0
    %p282 = por %p280, %p281
    %s284 = sadd.s32 %s283, 1
    %p287 = scmp.eq.s32.totalorder %s20, 1
    %p288 = scmp.ne.s32.totalorder %s283, %s285
    %p289 = scmp.eq.s32.totalorder %s20, 0
    %p290 = por %p288, %p289
    %p291 = scmp.ne.s32.totalorder %s283, %s285
    %p292 = scmp.eq.s32.totalorder %s25, 1
    %p293 = por %p291, %p292
    %p294 = scmp.ne.s32.totalorder %s285, %s286
    %p295 = scmp.eq.s32.totalorder %s25, 0
    %p296 = por %p294, %p295
    %p297 = scmp.ne.s32.totalorder %s285, %s286
    %p298 = scmp.eq.s32.totalorder %s26, 1
    %p299 = por %p297, %p298
    %p301 = scmp.ne.s32.totalorder %s286, %s300
    %p302 = scmp.eq.s32.totalorder %s26, 0
    %p303 = por %p301, %p302
    %s305 = sadd.s32 %s304, 1
    %p308 = scmp.eq.s32.totalorder %s20, 1
    %p309 = scmp.ne.s32.totalorder %s304, %s306
    %p310 = scmp.eq.s32.totalorder %s20, 0
    %p311 = por %p309, %p310
    %p312 = scmp.ne.s32.totalorder %s304, %s306
    %p313 = scmp.eq.s32.totalorder %s25, 1
    %p314 = por %p312, %p313
    %p315 = scmp.ne.s32.totalorder %s306, %s307
    %p316 = scmp.eq.s32.totalorder %s25, 0
    %p317 = por %p315, %p316
    %p318 = scmp.ne.s32.totalorder %s306, %s307
    %p319 = scmp.eq.s32.totalorder %s26, 1
    %p320 = por %p318, %p319
    %p322 = scmp.ne.s32.totalorder %s307, %s321
    %p323 = scmp.eq.s32.totalorder %s26, 0
    %p324 = por %p322, %p323
    %s326 = sadd.s32 %s325, 1
    %p329 = scmp.eq.s32.totalorder %s20, 1
    %p330 = scmp.ne.s32.totalorder %s325, %s327
    %p331 = scmp.eq.s32.totalorder %s20, 0
    %p332 = por %p330, %p331
    %p333 = scmp.ne.s32.totalorder %s325, %s327
    %p334 = scmp.eq.s32.totalorder %s25, 1
    %p335 = por %p333, %p334
    %p336 = scmp.ne.s32.totalorder %s327, %s328
    %p337 = scmp.eq.s32.totalorder %s25, 0
    %p338 = por %p336, %p337
    %p339 = scmp.ne.s32.totalorder %s327, %s328
    %p340 = scmp.eq.s32.totalorder %s26, 1
    %p341 = por %p339, %p340
    %p343 = scmp.ne.s32.totalorder %s328, %s342
    %p344 = scmp.eq.s32.totalorder %s26, 0
    %p345 = por %p343, %p344
    %s347 = sadd.s32 %s346, 1
    %p350 = scmp.eq.s32.totalorder %s20, 1
    %p351 = scmp.ne.s32.totalorder %s346, %s348
    %p352 = scmp.eq.s32.totalorder %s20, 0
    %p353 = por %p351, %p352
    %p354 = scmp.ne.s32.totalorder %s346, %s348
    %p355 = scmp.eq.s32.totalorder %s25, 1
    %p356 = por %p354, %p355
    %p357 = scmp.ne.s32.totalorder %s348, %s349
    %p358 = scmp.eq.s32.totalorder %s25, 0
    %p359 = por %p357, %p358
    %p360 = scmp.ne.s32.totalorder %s348, %s349
    %p361 = scmp.eq.s32.totalorder %s26, 1
    %p362 = por %p360, %p361
    %p364 = scmp.ne.s32.totalorder %s349, %s363
    %p365 = scmp.eq.s32.totalorder %s26, 0
    %p366 = por %p364, %p365
    %s368 = sadd.s32 %s367, 1
    %p371 = scmp.eq.s32.totalorder %s20, 1
    %p372 = scmp.ne.s32.totalorder %s367, %s369
    %p373 = scmp.eq.s32.totalorder %s20, 0
    %p374 = por %p372, %p373
    %p375 = scmp.ne.s32.totalorder %s367, %s369
    %p376 = scmp.eq.s32.totalorder %s25, 1
    %p377 = por %p375, %p376
    %p378 = scmp.ne.s32.totalorder %s369, %s370
    %p379 = scmp.eq.s32.totalorder %s25, 0
    %p380 = por %p378, %p379
    %p381 = scmp.ne.s32.totalorder %s369, %s370
    %p382 = scmp.eq.s32.totalorder %s26, 1
    %p383 = por %p381, %p382
    %p385 = scmp.ne.s32.totalorder %s370, %s384
    %p386 = scmp.eq.s32.totalorder %s26, 0
    %p387 = por %p385, %p386
    %s388 = ssub.s32 %s27, %s39
    %s389 = ssub.s32 %s28, %s35
    %s390 = sor.u32 %s388, %s389
    %p391 = scmp.eq.s32.totalorder %s390, 0
    %s393 = sadd.s32 %s392, 1
    %s394 = scalar_select %p391, %s392, %s393
    %p397 = pneg %p391
    %p398 = scmp.eq.s32.totalorder %s20, 1
    %p399 = por %p397, %p398
    %p400 = scmp.ne.s32.totalorder %s392, %s395
    %p401 = scmp.eq.s32.totalorder %s20, 0
    %p402 = por %p400, %p401
    %p403 = scmp.ne.s32.totalorder %s392, %s395
    %p404 = scmp.eq.s32.totalorder %s25, 1
    %p405 = por %p403, %p404
    %p406 = scmp.ne.s32.totalorder %s395, %s396
    %p407 = scmp.eq.s32.totalorder %s25, 0
    %p408 = por %p406, %p407
    %p409 = scmp.ne.s32.totalorder %s395, %s396
    %p410 = scmp.eq.s32.totalorder %s26, 1
    %p411 = por %p409, %p410
    %p413 = scmp.ne.s32.totalorder %s396, %s412
    %p414 = scmp.eq.s32.totalorder %s26, 0
    %p415 = por %p413, %p414
    %p416 = scmp.le.s32.totalorder 1, %s20
    %p417 = scmp.lt.s32.totalorder %s20, 3
    %p418 = pnand %p416, %p417
    %p419 = pneg %p418
    // Predicated region
    $region9: #{encoder_forward.23} parent=5 // pred_check
      _
    $region10: #{encoder_forward.23} parent=5 // pred_check_branch
      %421 = sbr.rel (%p418) target = $region12
    $region11: #{encoder_forward.23} parent=5 // pred_region
      %s422 = ssub.s32 %s20, 1
      // Predicated region
      $region13: #{encoder_forward.23} parent=11 // pred_check
        %p423 = pneg %p275
      $region14: #{encoder_forward.23} parent=11 // pred_check_branch
        %425 = sbr.rel (%p423) target = $region16
      $region15: #{encoder_forward.23} parent=11 // pred_region
        _
      $region16: #{encoder_forward.23} parent=11 // pred_fallthru
        _
      // Predicated region
      $region17: #{encoder_forward.23} parent=11 // pred_check
        %p426 = pneg %p296
      $region18: #{encoder_forward.23} parent=11 // pred_check_branch
        %428 = sbr.rel (%p426) target = $region20
      $region19: #{encoder_forward.23} parent=11 // pred_region
        _
      $region20: #{encoder_forward.23} parent=11 // pred_fallthru
        _
      // Predicated region
      $region21: #{encoder_forward.23} parent=11 // pred_check
        %p429 = pneg %p317
      $region22: #{encoder_forward.23} parent=11 // pred_check_branch
        %431 = sbr.rel (%p429) target = $region24
      $region23: #{encoder_forward.23} parent=11 // pred_region
        _
      $region24: #{encoder_forward.23} parent=11 // pred_fallthru
        _
      // Predicated region
      $region25: #{encoder_forward.23} parent=11 // pred_check
        %p432 = pneg %p338
      $region26: #{encoder_forward.23} parent=11 // pred_check_branch
        %434 = sbr.rel (%p432) target = $region28
      $region27: #{encoder_forward.23} parent=11 // pred_region
        _
      $region28: #{encoder_forward.23} parent=11 // pred_fallthru
        _
      // Predicated region
      $region29: #{encoder_forward.23} parent=11 // pred_check
        %p435 = pneg %p359
      $region30: #{encoder_forward.23} parent=11 // pred_check_branch
        %437 = sbr.rel (%p435) target = $region32
      $region31: #{encoder_forward.23} parent=11 // pred_region
        _
      $region32: #{encoder_forward.23} parent=11 // pred_fallthru
        _
      // Predicated region
      $region33: #{encoder_forward.23} parent=11 // pred_check
        %p438 = pneg %p380
      $region34: #{encoder_forward.23} parent=11 // pred_check_branch
        %440 = sbr.rel (%p438) target = $region36
      $region35: #{encoder_forward.23} parent=11 // pred_region
        _
      $region36: #{encoder_forward.23} parent=11 // pred_fallthru
        _
    $region12: #{encoder_forward.23} parent=5 // pred_fallthru
      _
    %p441 = scmp.lt.s32.totalorder %s20, 2
    // Predicated region
    $region37: #{encoder_forward.23} parent=5 // pred_check
      %p442 = pneg %p441
    $region38: #{encoder_forward.23} parent=5 // pred_check_branch
      %444 = sbr.rel (%p442) target = $region40
    $region39: #{encoder_forward.23} parent=5 // pred_region
      // Predicated region
      $region41: #{encoder_forward.23} parent=39 // pred_check
        %p445 = pneg %p54
      $region42: #{encoder_forward.23} parent=39 // pred_check_branch
        %447 = sbr.rel (%p445) target = $region44
      $region43: #{encoder_forward.23} parent=39 // pred_region
        %p448 = scmp.lt.s32.totalorder %s27, 1
        %s449 = scalar_select %p448, %s27, 1
        %p450 = scmp.lt.s32.totalorder %s28, 0
        %s451 = scalar_select %p450, %s28, 0
        %s452 = sadd.s32 %s451, %s449
        %s453 = smul.addr %s452, 8
        %s454 = scalar_lea.vmem %s0, %s453
      $region44: #{encoder_forward.23} parent=39 // pred_fallthru
        _
      // Predicated region
      $region45: #{encoder_forward.23} parent=39 // pred_check
        %p455 = pneg %p80
      $region46: #{encoder_forward.23} parent=39 // pred_check_branch
        %457 = sbr.rel (%p455) target = $region48
      $region47: #{encoder_forward.23} parent=39 // pred_region
        %p458 = scmp.lt.s32.totalorder %s27, 1
        %s459 = scalar_select %p458, %s27, 1
        %s460 = smul.addr %s459, 8
        %s461 = scalar_lea.vmem %s1, %s460
      $region48: #{encoder_forward.23} parent=39 // pred_fallthru
        _
      // Predicated region
      $region49: #{encoder_forward.23} parent=39 // pred_check
        %p462 = pneg %p108
      $region50: #{encoder_forward.23} parent=39 // pred_check_branch
        %464 = sbr.rel (%p462) target = $region52
      $region51: #{encoder_forward.23} parent=39 // pred_region
        %p465 = scmp.lt.s32.totalorder %s27, 1
        %s466 = scalar_select %p465, %s27, 1
        %p467 = scmp.lt.s32.totalorder %s28, 0
        %s468 = scalar_select %p467, %s28, 0
        %s469 = sadd.s32 %s468, %s466
        %s470 = smul.addr %s469, 8
        %s471 = scalar_lea.vmem %s2, %s470
      $region52: #{encoder_forward.23} parent=39 // pred_fallthru
        _
      // Predicated region
      $region53: #{encoder_forward.23} parent=39 // pred_check
        %p472 = pneg %p136
      $region54: #{encoder_forward.23} parent=39 // pred_check_branch
        %474 = sbr.rel (%p472) target = $region56
      $region55: #{encoder_forward.23} parent=39 // pred_region
        %p475 = scmp.lt.s32.totalorder %s27, 1
        %s476 = scalar_select %p475, %s27, 1
        %p477 = scmp.lt.s32.totalorder %s28, 0
        %s478 = scalar_select %p477, %s28, 0
        %s479 = sadd.s32 %s478, %s476
        %s480 = smul.addr %s479, 8
        %s481 = scalar_lea.vmem %s3, %s480
      $region56: #{encoder_forward.23} parent=39 // pred_fallthru
        _
      // Predicated region
      $region57: #{encoder_forward.23} parent=39 // pred_check
        %p482 = pneg %p164
      $region58: #{encoder_forward.23} parent=39 // pred_check_branch
        %484 = sbr.rel (%p482) target = $region60
      $region59: #{encoder_forward.23} parent=39 // pred_region
        %p485 = scmp.lt.s32.totalorder %s27, 1
        %s486 = scalar_select %p485, %s27, 1
        %p487 = scmp.lt.s32.totalorder %s28, 0
        %s488 = scalar_select %p487, %s28, 0
        %s489 = sadd.s32 %s488, %s486
        %s490 = smul.addr %s489, 8
        %s491 = scalar_lea.vmem %s4, %s490
      $region60: #{encoder_forward.23} parent=39 // pred_fallthru
        _
      // Predicated region
      $region61: #{encoder_forward.23} parent=39 // pred_check
        %p492 = pneg %p192
      $region62: #{encoder_forward.23} parent=39 // pred_check_branch
        %494 = sbr.rel (%p492) target = $region64
      $region63: #{encoder_forward.23} parent=39 // pred_region
        %p495 = scmp.lt.s32.totalorder %s27, 1
        %s496 = scalar_select %p495, %s27, 1
        %p497 = scmp.lt.s32.totalorder %s28, 0
        %s498 = scalar_select %p497, %s28, 0
        %s499 = sadd.s32 %s498, %s496
        %s500 = smul.addr %s499, 8
        %s501 = scalar_lea.vmem %s5, %s500
      $region64: #{encoder_forward.23} parent=39 // pred_fallthru
        _
      // Predicated region
      $region65: #{encoder_forward.23} parent=39 // pred_check
        %p502 = pneg %p220
      $region66: #{encoder_forward.23} parent=39 // pred_check_branch
        %504 = sbr.rel (%p502) target = $region68
      $region67: #{encoder_forward.23} parent=39 // pred_region
        %p505 = scmp.lt.s32.totalorder %s27, 1
        %s506 = scalar_select %p505, %s27, 1
        %p507 = scmp.lt.s32.totalorder %s28, 0
        %s508 = scalar_select %p507, %s28, 0
        %s509 = sadd.s32 %s508, %s506
        %s510 = smul.addr %s509, 8
        %s511 = scalar_lea.vmem %s6, %s510
      $region68: #{encoder_forward.23} parent=39 // pred_fallthru
        _
      // Predicated region
      $region69: #{encoder_forward.23} parent=39 // pred_check
        %p512 = pneg %p248
      $region70: #{encoder_forward.23} parent=39 // pred_check_branch
        %514 = sbr.rel (%p512) target = $region72
      $region71: #{encoder_forward.23} parent=39 // pred_region
        %p515 = scmp.lt.s32.totalorder %s27, 1
        %s516 = scalar_select %p515, %s27, 1
        %p517 = scmp.lt.s32.totalorder %s28, 0
        %s518 = scalar_select %p517, %s28, 0
        %s519 = sadd.s32 %s518, %s516
        %s520 = smul.addr %s519, 8
        %s521 = scalar_lea.vmem %s7, %s520
      $region72: #{encoder_forward.23} parent=39 // pred_fallthru
        _
    $region40: #{encoder_forward.23} parent=5 // pred_fallthru
      _
    %p522 = scmp.le.s32.totalorder 1, %s20
    %p523 = scmp.lt.s32.totalorder %s20, 3
    %p524 = pnand %p522, %p523
    %p525 = pneg %p524
    // Predicated region
    $region73: #{encoder_forward.23} parent=5 // pred_check
      _
    $region74: #{encoder_forward.23} parent=5 // pred_check_branch
      %527 = sbr.rel (%p524) target = $region76
    $region75: #{encoder_forward.23} parent=5 // pred_region
      %s528 = ssub.s32 %s20, 1
      %p529 = scmp.lt.s32.totalorder %s29, 1
      %s530 = scalar_select %p529, %s29, 1
      %p531 = scmp.lt.s32.totalorder %s30, 0
      %s532 = scalar_select %p531, %s30, 0
      %s533 = sadd.s32 %s532, %s530
      %s534 = smul.addr %s533, 8
      %s535 = scalar_lea.vmem %s0, %s534
      %p536 = pneg %p60
      %p537 = pneg %p57
      %p538 = scmp.lt.s32.totalorder %s29, 1
      %s539 = scalar_select %p538, %s29, 1
      %s540 = smul.addr %s539, 8
      %s541 = scalar_lea.vmem %s1, %s540
      %p542 = pneg %p86
      %p543 = pneg %p83
      %p544 = scmp.lt.s32.totalorder %s29, 1
      %s545 = scalar_select %p544, %s29, 1
      %p546 = scmp.lt.s32.totalorder %s30, 0
      %s547 = scalar_select %p546, %s30, 0
      %s548 = sadd.s32 %s547, %s545
      %s549 = smul.addr %s548, 8
      %s550 = scalar_lea.vmem %s2, %s549
      %p551 = pneg %p114
      %p552 = pneg %p111
      %p553 = scmp.lt.s32.totalorder %s29, 1
      %s554 = scalar_select %p553, %s29, 1
      %p555 = scmp.lt.s32.totalorder %s30, 0
      %s556 = scalar_select %p555, %s30, 0
      %s557 = sadd.s32 %s556, %s554
      %s558 = smul.addr %s557, 8
      %s559 = scalar_lea.vmem %s3, %s558
      %p560 = pneg %p142
      %p561 = pneg %p139
      %p562 = scmp.lt.s32.totalorder %s29, 1
      %s563 = scalar_select %p562, %s29, 1
      %p564 = scmp.lt.s32.totalorder %s30, 0
      %s565 = scalar_select %p564, %s30, 0
      %s566 = sadd.s32 %s565, %s563
      %s567 = smul.addr %s566, 8
      %s568 = scalar_lea.vmem %s4, %s567
      %p569 = pneg %p170
      %p570 = pneg %p167
      %p571 = scmp.lt.s32.totalorder %s29, 1
      %s572 = scalar_select %p571, %s29, 1
      %p573 = scmp.lt.s32.totalorder %s30, 0
      %s574 = scalar_select %p573, %s30, 0
      %s575 = sadd.s32 %s574, %s572
      %s576 = smul.addr %s575, 8
      %s577 = scalar_lea.vmem %s5, %s576
      %p578 = pneg %p198
      %p579 = pneg %p195
      %p580 = scmp.lt.s32.totalorder %s29, 1
      %s581 = scalar_select %p580, %s29, 1
      %p582 = scmp.lt.s32.totalorder %s30, 0
      %s583 = scalar_select %p582, %s30, 0
      %s584 = sadd.s32 %s583, %s581
      %s585 = smul.addr %s584, 8
      %s586 = scalar_lea.vmem %s6, %s585
      %p587 = pneg %p226
      %p588 = pneg %p223
      %p589 = scmp.lt.s32.totalorder %s29, 1
      %s590 = scalar_select %p589, %s29, 1
      %p591 = scmp.lt.s32.totalorder %s30, 0
      %s592 = scalar_select %p591, %s30, 0
      %s593 = sadd.s32 %s592, %s590
      %s594 = smul.addr %s593, 8
      %s595 = scalar_lea.vmem %s7, %s594
      %p596 = pneg %p254
      %p597 = pneg %p251
      %p598 = pneg %p275
      %p599 = pneg %p272
      %p600 = pneg %p296
      %p601 = pneg %p293
      %p602 = pneg %p317
      %p603 = pneg %p314
      %p604 = pneg %p338
      %p605 = pneg %p335
      %p606 = pneg %p359
      %p607 = pneg %p356
      %p608 = pneg %p380
      %p609 = pneg %p377
      %p610 = pneg %p408
      %p611 = pneg %p405
      %p612 = scmp.lt.s32.totalorder %s29, 1
      %s613 = scalar_select %p612, %s29, 1
      %p614 = scmp.lt.s32.totalorder %s30, 0
      %s615 = scalar_select %p614, %s30, 0
      %s616 = sadd.s32 %s615, %s613
      %s617 = smul.addr %s616, 8
      %s618 = scalar_lea.vmem %s14, %s617
      %p619 = scmp.lt.s32.totalorder %s29, 1
      %s620 = scalar_select %p619, %s29, 1
      %p621 = scmp.lt.s32.totalorder %s30, 0
      %s622 = scalar_select %p621, %s30, 0
      %s623 = sadd.s32 %s622, %s620
      %s624 = smul.addr %s623, 8
      %s625 = scalar_lea.vmem %s0, %s624
      %p626 = scmp.lt.s32.totalorder %s29, 1
      %s627 = scalar_select %p626, %s29, 1
      %s628 = smul.addr %s627, 8
      %s629 = scalar_lea.vmem %s1, %s628
      %p630 = scmp.lt.s32.totalorder %s29, 1
      %s631 = scalar_select %p630, %s29, 1
      %p632 = scmp.lt.s32.totalorder %s30, 0
      %s633 = scalar_select %p632, %s30, 0
      %s634 = sadd.s32 %s633, %s631
      %s635 = smul.addr %s634, 8
      %s636 = scalar_lea.vmem %s2, %s635
      %p637 = scmp.lt.s32.totalorder %s29, 1
      %s638 = scalar_select %p637, %s29, 1
      %p639 = scmp.lt.s32.totalorder %s30, 0
      %s640 = scalar_select %p639, %s30, 0
      %s641 = sadd.s32 %s640, %s638
      %s642 = smul.addr %s641, 8
      %s643 = scalar_lea.vmem %s3, %s642
      %p644 = scmp.lt.s32.totalorder %s29, 1
      %s645 = scalar_select %p644, %s29, 1
      %p646 = scmp.lt.s32.totalorder %s30, 0
      %s647 = scalar_select %p646, %s30, 0
      %s648 = sadd.s32 %s647, %s645
      %s649 = smul.addr %s648, 8
      %s650 = scalar_lea.vmem %s4, %s649
      %p651 = scmp.lt.s32.totalorder %s29, 1
      %s652 = scalar_select %p651, %s29, 1
      %p653 = scmp.lt.s32.totalorder %s30, 0
      %s654 = scalar_select %p653, %s30, 0
      %s655 = sadd.s32 %s654, %s652
      %s656 = smul.addr %s655, 8
      %s657 = scalar_lea.vmem %s5, %s656
      %p658 = scmp.lt.s32.totalorder %s29, 1
      %s659 = scalar_select %p658, %s29, 1
      %p660 = scmp.lt.s32.totalorder %s30, 0
      %s661 = scalar_select %p660, %s30, 0
      %s662 = sadd.s32 %s661, %s659
      %s663 = smul.addr %s662, 8
      %s664 = scalar_lea.vmem %s6, %s663
      %p665 = scmp.lt.s32.totalorder %s29, 1
      %s666 = scalar_select %p665, %s29, 1
      %p667 = scmp.lt.s32.totalorder %s30, 0
      %s668 = scalar_select %p667, %s30, 0
      %s669 = sadd.s32 %s668, %s666
      %s670 = smul.addr %s669, 8
      %s671 = scalar_lea.vmem %s7, %s670
      %p672 = scmp.lt.s32.totalorder %s29, 1
      %s673 = scalar_select %p672, %s29, 1
      %p674 = scmp.lt.s32.totalorder %s30, 0
      %s675 = scalar_select %p674, %s30, 0
      %s676 = sadd.s32 %s675, %s673
      %s677 = smul.addr %s676, 8
      %s678 = scalar_lea.vmem %s14, %s677
      %v680 = vld [vmem:[%s625] sm:$0xff]
      %v681 = vld [vmem:[%s629] sm:$0xff]
      %v682 = vld [vmem:[%s8] sm:$0xf]
      %v683 = vld [vmem:[%s9] sm:$0x1]
      %v684 = vld [vmem:[%s643] sm:$0xff]
      %v685 = vlaneseq
      %v686 = vshrl.u32 %v685, 7
      %v687 = vsub.s32 0, %v686
      %v688 = vrot.slane %v684, %v687
      %690 = vbcast.lane.b32.xlu0 %v688, 256
      %v691 = vpop.permute.xlu0 %690
      %v692 = vlaneseq
      %v693 = vshrl.u32 %v692, 7
      %v694 = vsub.s32 1, %v693
      %v695 = vrot.slane %v684, %v694
      %697 = vbcast.lane.b32.xlu0 %v695, 256
      %v698 = vpop.permute.xlu0 %697
      %v699 = vlaneseq
      %v700 = vshrl.u32 %v699, 7
      %v701 = vsub.s32 2, %v700
      %v702 = vrot.slane %v684, %v701
      %704 = vbcast.lane.b32.xlu0 %v702, 256
      %v705 = vpop.permute.xlu0 %704
      %v706 = vlaneseq
      %v707 = vshrl.u32 %v706, 7
      %v708 = vsub.s32 3, %v707
      %v709 = vrot.slane %v684, %v708
      %711 = vbcast.lane.b32.xlu0 %v709, 256
      %v712 = vpop.permute.xlu0 %711
      %v713 = vlaneseq
      %v714 = vshrl.u32 %v713, 7
      %v715 = vsub.s32 4, %v714
      %v716 = vrot.slane %v684, %v715
      %718 = vbcast.lane.b32.xlu0 %v716, 256
      %v719 = vpop.permute.xlu0 %718
      %v720 = vlaneseq
      %v721 = vshrl.u32 %v720, 7
      %v722 = vsub.s32 5, %v721
      %v723 = vrot.slane %v684, %v722
      %725 = vbcast.lane.b32.xlu0 %v723, 256
      %v726 = vpop.permute.xlu0 %725
      %v727 = vlaneseq
      %v728 = vshrl.u32 %v727, 7
      %v729 = vsub.s32 6, %v728
      %v730 = vrot.slane %v684, %v729
      %732 = vbcast.lane.b32.xlu0 %v730, 256
      %v733 = vpop.permute.xlu0 %732
      %v734 = vlaneseq
      %v735 = vshrl.u32 %v734, 7
      %v736 = vsub.s32 7, %v735
      %v737 = vrot.slane %v684, %v736
      %739 = vbcast.lane.b32.xlu0 %v737, 256
      %v740 = vpop.permute.xlu0 %739
      %v741 = vlaneseq
      %v742 = vshrl.u32 %v741, 7
      %v743 = vsub.s32 0, %v742
      %v744 = vrot.slane %v682, %v743
      %v745 = vmul.f32 %v691, %v744
      %v746 = vmul.f32 %v698, %v744
      %v747 = vmul.f32 %v705, %v744
      %v748 = vmul.f32 %v712, %v744
      %v749 = vmul.f32 %v719, %v744
      %v750 = vmul.f32 %v726, %v744
      %v751 = vmul.f32 %v733, %v744
      %v752 = vmul.f32 %v740, %v744
      %v754 = vlaneseq
      %v755 = vshrl.u32 %v754, 7
      %v756 = vsub.s32 0, %v755
      %v757 = vrot.slane %v683, %v756
      %v759 = vadd.f32 %v757, %v745
      %v760 = vadd.f32 %v757, %v746
      %v761 = vadd.f32 %v757, %v747
      %v762 = vadd.f32 %v757, %v748
      %v763 = vadd.f32 %v757, %v749
      %v764 = vadd.f32 %v757, %v750
      %v765 = vadd.f32 %v757, %v751
      %v766 = vadd.f32 %v757, %v752
      %v767 = vld [vmem:[%s650] sm:$0xff]
      %v768 = vlaneseq
      %v769 = vshrl.u32 %v768, 7
      %v770 = vsub.s32 0, %v769
      %v771 = vrot.slane %v767, %v770
      %773 = vbcast.lane.b32.xlu0 %v771, 256
      %v774 = vpop.permute.xlu0 %773
      %v775 = vlaneseq
      %v776 = vshrl.u32 %v775, 7
      %v777 = vsub.s32 1, %v776
      %v778 = vrot.slane %v767, %v777
      %780 = vbcast.lane.b32.xlu0 %v778, 256
      %v781 = vpop.permute.xlu0 %780
      %v782 = vlaneseq
      %v783 = vshrl.u32 %v782, 7
      %v784 = vsub.s32 2, %v783
      %v785 = vrot.slane %v767, %v784
      %787 = vbcast.lane.b32.xlu0 %v785, 256
      %v788 = vpop.permute.xlu0 %787
      %v789 = vlaneseq
      %v790 = vshrl.u32 %v789, 7
      %v791 = vsub.s32 3, %v790
      %v792 = vrot.slane %v767, %v791
      %794 = vbcast.lane.b32.xlu0 %v792, 256
      %v795 = vpop.permute.xlu0 %794
      %v796 = vlaneseq
      %v797 = vshrl.u32 %v796, 7
      %v798 = vsub.s32 4, %v797
      %v799 = vrot.slane %v767, %v798
      %801 = vbcast.lane.b32.xlu0 %v799, 256
      %v802 = vpop.permute.xlu0 %801
      %v803 = vlaneseq
      %v804 = vshrl.u32 %v803, 7
      %v805 = vsub.s32 5, %v804
      %v806 = vrot.slane %v767, %v805
      %808 = vbcast.lane.b32.xlu0 %v806, 256
      %v809 = vpop.permute.xlu0 %808
      %v810 = vlaneseq
      %v811 = vshrl.u32 %v810, 7
      %v812 = vsub.s32 6, %v811
      %v813 = vrot.slane %v767, %v812
      %815 = vbcast.lane.b32.xlu0 %v813, 256
      %v816 = vpop.permute.xlu0 %815
      %v817 = vlaneseq
      %v818 = vshrl.u32 %v817, 7
      %v819 = vsub.s32 7, %v818
      %v820 = vrot.slane %v767, %v819
      %822 = vbcast.lane.b32.xlu0 %v820, 256
      %v823 = vpop.permute.xlu0 %822
      %v824 = vlaneseq
      %v825 = vshrl.u32 %v824, 7
      %v826 = vsub.s32 1, %v825
      %v827 = vrot.slane %v682, %v826
      %v828 = vmul.f32 %v774, %v827
      %v829 = vmul.f32 %v781, %v827
      %v830 = vmul.f32 %v788, %v827
      %v831 = vmul.f32 %v795, %v827
      %v832 = vmul.f32 %v802, %v827
      %v833 = vmul.f32 %v809, %v827
      %v834 = vmul.f32 %v816, %v827
      %v835 = vmul.f32 %v823, %v827
      %v836 = vadd.f32 %v759, %v828
      %v837 = vadd.f32 %v760, %v829
      %v838 = vadd.f32 %v761, %v830
      %v839 = vadd.f32 %v762, %v831
      %v840 = vadd.f32 %v763, %v832
      %v841 = vadd.f32 %v764, %v833
      %v842 = vadd.f32 %v765, %v834
      %v843 = vadd.f32 %v766, %v835
      %v844 = vld [vmem:[%s657] sm:$0xff]
      %v845 = vlaneseq
      %v846 = vshrl.u32 %v845, 7
      %v847 = vsub.s32 0, %v846
      %v848 = vrot.slane %v844, %v847
      %850 = vbcast.lane.b32.xlu0 %v848, 256
      %v851 = vpop.permute.xlu0 %850
      %v852 = vlaneseq
      %v853 = vshrl.u32 %v852, 7
      %v854 = vsub.s32 1, %v853
      %v855 = vrot.slane %v844, %v854
      %857 = vbcast.lane.b32.xlu0 %v855, 256
      %v858 = vpop.permute.xlu0 %857
      %v859 = vlaneseq
      %v860 = vshrl.u32 %v859, 7
      %v861 = vsub.s32 2, %v860
      %v862 = vrot.slane %v844, %v861
      %864 = vbcast.lane.b32.xlu0 %v862, 256
      %v865 = vpop.permute.xlu0 %864
      %v866 = vlaneseq
      %v867 = vshrl.u32 %v866, 7
      %v868 = vsub.s32 3, %v867
      %v869 = vrot.slane %v844, %v868
      %871 = vbcast.lane.b32.xlu0 %v869, 256
      %v872 = vpop.permute.xlu0 %871
      %v873 = vlaneseq
      %v874 = vshrl.u32 %v873, 7
      %v875 = vsub.s32 4, %v874
      %v876 = vrot.slane %v844, %v875
      %878 = vbcast.lane.b32.xlu0 %v876, 256
      %v879 = vpop.permute.xlu0 %878
      %v880 = vlaneseq
      %v881 = vshrl.u32 %v880, 7
      %v882 = vsub.s32 5, %v881
      %v883 = vrot.slane %v844, %v882
      %885 = vbcast.lane.b32.xlu0 %v883, 256
      %v886 = vpop.permute.xlu0 %885
      %v887 = vlaneseq
      %v888 = vshrl.u32 %v887, 7
      %v889 = vsub.s32 6, %v888
      %v890 = vrot.slane %v844, %v889
      %892 = vbcast.lane.b32.xlu0 %v890, 256
      %v893 = vpop.permute.xlu0 %892
      %v894 = vlaneseq
      %v895 = vshrl.u32 %v894, 7
      %v896 = vsub.s32 7, %v895
      %v897 = vrot.slane %v844, %v896
      %899 = vbcast.lane.b32.xlu0 %v897, 256
      %v900 = vpop.permute.xlu0 %899
      %v901 = vlaneseq
      %v902 = vshrl.u32 %v901, 7
      %v903 = vsub.s32 2, %v902
      %v904 = vrot.slane %v682, %v903
      %v905 = vmul.f32 %v851, %v904
      %v906 = vmul.f32 %v858, %v904
      %v907 = vmul.f32 %v865, %v904
      %v908 = vmul.f32 %v872, %v904
      %v909 = vmul.f32 %v879, %v904
      %v910 = vmul.f32 %v886, %v904
      %v911 = vmul.f32 %v893, %v904
      %v912 = vmul.f32 %v900, %v904
      %v913 = vadd.f32 %v836, %v905
      %v914 = vadd.f32 %v837, %v906
      %v915 = vadd.f32 %v838, %v907
      %v916 = vadd.f32 %v839, %v908
      %v917 = vadd.f32 %v840, %v909
      %v918 = vadd.f32 %v841, %v910
      %v919 = vadd.f32 %v842, %v911
      %v920 = vadd.f32 %v843, %v912
      %v921 = vld [vmem:[%s664] sm:$0xff]
      %v922 = vlaneseq
      %v923 = vshrl.u32 %v922, 7
      %v924 = vsub.s32 0, %v923
      %v925 = vrot.slane %v921, %v924
      %927 = vbcast.lane.b32.xlu0 %v925, 256
      %v928 = vpop.permute.xlu0 %927
      %v929 = vlaneseq
      %v930 = vshrl.u32 %v929, 7
      %v931 = vsub.s32 1, %v930
      %v932 = vrot.slane %v921, %v931
      %934 = vbcast.lane.b32.xlu0 %v932, 256
      %v935 = vpop.permute.xlu0 %934
      %v936 = vlaneseq
      %v937 = vshrl.u32 %v936, 7
      %v938 = vsub.s32 2, %v937
      %v939 = vrot.slane %v921, %v938
      %941 = vbcast.lane.b32.xlu0 %v939, 256
      %v942 = vpop.permute.xlu0 %941
      %v943 = vlaneseq
      %v944 = vshrl.u32 %v943, 7
      %v945 = vsub.s32 3, %v944
      %v946 = vrot.slane %v921, %v945
      %948 = vbcast.lane.b32.xlu0 %v946, 256
      %v949 = vpop.permute.xlu0 %948
      %v950 = vlaneseq
      %v951 = vshrl.u32 %v950, 7
      %v952 = vsub.s32 4, %v951
      %v953 = vrot.slane %v921, %v952
      %955 = vbcast.lane.b32.xlu0 %v953, 256
      %v956 = vpop.permute.xlu0 %955
      %v957 = vlaneseq
      %v958 = vshrl.u32 %v957, 7
      %v959 = vsub.s32 5, %v958
      %v960 = vrot.slane %v921, %v959
      %962 = vbcast.lane.b32.xlu0 %v960, 256
      %v963 = vpop.permute.xlu0 %962
      %v964 = vlaneseq
      %v965 = vshrl.u32 %v964, 7
      %v966 = vsub.s32 6, %v965
      %v967 = vrot.slane %v921, %v966
      %969 = vbcast.lane.b32.xlu0 %v967, 256
      %v970 = vpop.permute.xlu0 %969
      %v971 = vlaneseq
      %v972 = vshrl.u32 %v971, 7
      %v973 = vsub.s32 7, %v972
      %v974 = vrot.slane %v921, %v973
      %976 = vbcast.lane.b32.xlu0 %v974, 256
      %v977 = vpop.permute.xlu0 %976
      %v978 = vlaneseq
      %v979 = vshrl.u32 %v978, 7
      %v980 = vsub.s32 3, %v979
      %v981 = vrot.slane %v682, %v980
      %v982 = vmul.f32 %v928, %v981
      %v983 = vmul.f32 %v935, %v981
      %v984 = vmul.f32 %v942, %v981
      %v985 = vmul.f32 %v949, %v981
      %v986 = vmul.f32 %v956, %v981
      %v987 = vmul.f32 %v963, %v981
      %v988 = vmul.f32 %v970, %v981
      %v989 = vmul.f32 %v977, %v981
      %v990 = vadd.f32 %v913, %v982
      %v991 = vadd.f32 %v914, %v983
      %v992 = vadd.f32 %v915, %v984
      %v993 = vadd.f32 %v916, %v985
      %v994 = vadd.f32 %v917, %v986
      %v995 = vadd.f32 %v918, %v987
      %v996 = vadd.f32 %v919, %v988
      %v997 = vadd.f32 %v920, %v989
      %v998 = vmax.f32 %v990, 0.0
      %v999 = vmax.f32 %v991, 0.0
      %v1000 = vmax.f32 %v992, 0.0
      %v1001 = vmax.f32 %v993, 0.0
      %v1002 = vmax.f32 %v994, 0.0
      %v1003 = vmax.f32 %v995, 0.0
      %v1004 = vmax.f32 %v996, 0.0
      %v1005 = vmax.f32 %v997, 0.0
      %v1006 = vld [vmem:[%s10] sm:$0xf]
      %v1007 = vld [vmem:[%s10 + $0x4] sm:$0xf]
      %v1008 = vld [vmem:[%s10 + $0x8] sm:$0xf]
      %v1009 = vld [vmem:[%s10 + $0xc] sm:$0xf]
      %v1010 = vpack.c.bf16 %v999, %v998
      %v1011 = vpack.c.bf16 %v1001, %v1000
      %v1012 = vpack.c.bf16 %v1003, %v1002
      %v1013 = vpack.c.bf16 %v1005, %v1004
      %v1018 = vunpack.c.l.b16 %v1006
      %v1019 = vunpack.c.l.b16 %v1007
      %v1020 = vunpack.c.l.b16 %v1008
      %v1021 = vunpack.c.l.b16 %v1009
      %v1022 = vpack.c.b16 %v1019, %v1018
      %v1023 = vpack.c.b16 %v1021, %v1020
      %vm1026 = vcmask 261120
      %v1028 = vsel %vm1026, %v1010, 0
      %v1031 = vsel %vm1026, %v1011, 0
      %v1034 = vsel %vm1026, %v1012, 0
      %v1037 = vsel %vm1026, %v1013, 0
      %1039 = vmatprep.subr.bf16.mxu0 0
      %1040 = vmatpush1.bf16.msra.mxu0 %v1022
      %1041 = vmatprep.subr.bf16.mxu0 0
      %1042 = vmatpush1.bf16.msra.mxu0 %v1023
      %1043 = vmatprep.subr.bf16.mxu0 0
      %1044 = vmatpush1.bf16.msra.mxu0 0
      %1045 = vmatprep.subr.bf16.mxu0 0
      %1046 = vmatpush1.bf16.msra.mxu0 0
      %1047 = vmatprep.subr.bf16.mxu0 0
      %1048 = vmatpush1.bf16.msra.mxu0 0
      %1049 = vmatprep.subr.bf16.mxu0 0
      %1050 = vmatpush1.bf16.msra.mxu0 0
      %1051 = vmatprep.subr.bf16.mxu0 0
      %1052 = vmatpush1.bf16.msra.mxu0 0
      %1053 = vmatprep.subr.bf16.mxu0 0
      %1054 = vmatpush1.bf16.msra.mxu0 0
      %1055 = vmatprep.subr.bf16.mxu0 0
      %1056 = vmatpush1.bf16.msra.mxu0 0
      %1057 = vmatprep.subr.bf16.mxu0 0
      %1058 = vmatpush1.bf16.msra.mxu0 0
      %1059 = vmatprep.subr.bf16.mxu0 0
      %1060 = vmatpush1.bf16.msra.mxu0 0
      %1061 = vmatprep.subr.bf16.mxu0 0
      %1062 = vmatpush1.bf16.msra.mxu0 0
      %1063 = vmatprep.subr.bf16.mxu0 0
      %1064 = vmatpush1.bf16.msra.mxu0 0
      %1065 = vmatprep.subr.bf16.mxu0 0
      %1066 = vmatpush1.bf16.msra.mxu0 0
      %1067 = vmatprep.subr.bf16.mxu0 0
      %1068 = vmatpush1.bf16.msra.mxu0 0
      %1069 = vmatprep.subr.bf16.mxu0 0
      %1070 = vmatpush1.bf16.msra.mxu0 0
      %1071 = vmatprep.mubr.bf16.mxu0 0
      %1072 = vmatmul.mubr.bf16.gmra.mrb[0].mxu0 %v1028
      %v1073 = vpop.f32.mrb[0].mxu0
      %v1074 = vadd.f32 0.0, %v1073
      %v1075 = vpop.f32.mrb[0].mxu0
      %v1076 = vpop.f32.mrb[0].mxu0
      %v1077 = vadd.f32 0.0, %v1076
      %v1078 = vpop.f32.mrb[0].mxu0
      %1079 = vmatprep.mubr.bf16.mxu0 0
      %1080 = vmatmul.mubr.bf16.gmra.mrb[0].mxu0 %v1031
      %v1081 = vpop.f32.mrb[0].mxu0
      %v1082 = vadd.f32 0.0, %v1081
      %v1083 = vpop.f32.mrb[0].mxu0
      %v1084 = vpop.f32.mrb[0].mxu0
      %v1085 = vadd.f32 0.0, %v1084
      %v1086 = vpop.f32.mrb[0].mxu0
      %1087 = vmatprep.mubr.bf16.mxu0 0
      %1088 = vmatmul.mubr.bf16.gmra.mrb[0].mxu0 %v1034
      %v1089 = vpop.f32.mrb[0].mxu0
      %v1090 = vadd.f32 0.0, %v1089
      %v1091 = vpop.f32.mrb[0].mxu0
      %v1092 = vpop.f32.mrb[0].mxu0
      %v1093 = vadd.f32 0.0, %v1092
      %v1094 = vpop.f32.mrb[0].mxu0
      %1095 = vmatprep.mubr.bf16.mxu0 0
      %1096 = vmatmul.mubr.bf16.gmra.mrb[0].mxu0 %v1037
      %v1097 = vpop.f32.mrb[0].mxu0
      %v1098 = vadd.f32 0.0, %v1097
      %v1099 = vpop.f32.mrb[0].mxu0
      %v1100 = vpop.f32.mrb[0].mxu0
      %v1101 = vadd.f32 0.0, %v1100
      %v1102 = vpop.f32.mrb[0].mxu0
      %1103 = vdwg.mxu0
      %v1104 = vld [vmem:[%s11] sm:$0x1]
      %v1106 = vlaneseq
      %v1107 = vshrl.u32 %v1106, 7
      %v1108 = vsub.s32 0, %v1107
      %v1109 = vrot.slane %v1104, %v1108
      %v1111 = vadd.f32 %v1074, %v1109
      %v1112 = vadd.f32 %v1077, %v1109
      %v1113 = vadd.f32 %v1082, %v1109
      %v1114 = vadd.f32 %v1085, %v1109
      %v1115 = vadd.f32 %v1090, %v1109
      %v1116 = vadd.f32 %v1093, %v1109
      %v1117 = vadd.f32 %v1098, %v1109
      %v1118 = vadd.f32 %v1101, %v1109
      %v1120 = vcombine.high %v680, %v680
      %v1122 = vunpack.c.l.s4 1966171168
      %v1123 = vunpack.c.0.s8 %v1122
      %v1124 = vlaneseq
      %v1125 = vshrl.u32 %v1124, 7
      %v1126 = vsub.s32 %v1123, %v1125
      %v1127 = vrot.slane %v680, %v1126
      %v1129 = vunpack.c.l.s4 1966171168
      %v1130 = vunpack.c.0.s8 %v1129
      %v1131 = vlaneseq
      %v1132 = vshrl.u32 %v1131, 7
      %v1133 = vsub.s32 %v1130, %v1132
      %v1134 = vrot.slane %v1120, %v1133
      %v1135 = vcombine.high %v1127, %v1127
      %v1136 = vcombine.high %v1134, %v1134
      %v1138 = vunpack.c.l.s4 1966171168
      %v1139 = vunpack.c.0.s8 %v1138
      %v1140 = vlaneseq
      %v1141 = vshrl.u32 %v1140, 7
      %v1142 = vsub.s32 %v1139, %v1141
      %v1143 = vrot.slane %v1127, %v1142
      %v1145 = vunpack.c.l.s4 1966171168
      %v1146 = vunpack.c.0.s8 %v1145
      %v1147 = vlaneseq
      %v1148 = vshrl.u32 %v1147, 7
      %v1149 = vsub.s32 %v1146, %v1148
      %v1150 = vrot.slane %v1134, %v1149
      %v1152 = vunpack.c.l.s4 1966171168
      %v1153 = vunpack.c.0.s8 %v1152
      %v1154 = vlaneseq
      %v1155 = vshrl.u32 %v1154, 7
      %v1156 = vsub.s32 %v1153, %v1155
      %v1157 = vrot.slane %v1135, %v1156
      %v1159 = vunpack.c.l.s4 1966171168
      %v1160 = vunpack.c.0.s8 %v1159
      %v1161 = vlaneseq
      %v1162 = vshrl.u32 %v1161, 7
      %v1163 = vsub.s32 %v1160, %v1162
      %v1164 = vrot.slane %v1136, %v1163
      %v1165 = vcombine.high %v1143, %v1143
      %v1166 = vcombine.high %v1150, %v1150
      %v1167 = vcombine.high %v1157, %v1157
      %v1168 = vcombine.high %v1164, %v1164
      %v1169 = vlaneseq
      %v1170 = vshrl.u32 %v1169, 7
      %v1171 = vsub.s32 0, %v1170
      %v1172 = vrot.slane %v1143, %v1171
      %v1173 = vlaneseq
      %v1174 = vshrl.u32 %v1173, 7
      %v1175 = vsub.s32 0, %v1174
      %v1176 = vrot.slane %v1157, %v1175
      %v1177 = vlaneseq
      %v1178 = vshrl.u32 %v1177, 7
      %v1179 = vsub.s32 0, %v1178
      %v1180 = vrot.slane %v1165, %v1179
      %v1181 = vlaneseq
      %v1182 = vshrl.u32 %v1181, 7
      %v1183 = vsub.s32 0, %v1182
      %v1184 = vrot.slane %v1167, %v1183
      %v1185 = vlaneseq
      %v1186 = vshrl.u32 %v1185, 7
      %v1187 = vsub.s32 0, %v1186
      %v1188 = vrot.slane %v1150, %v1187
      %v1189 = vlaneseq
      %v1190 = vshrl.u32 %v1189, 7
      %v1191 = vsub.s32 0, %v1190
      %v1192 = vrot.slane %v1164, %v1191
      %v1193 = vlaneseq
      %v1194 = vshrl.u32 %v1193, 7
      %v1195 = vsub.s32 0, %v1194
      %v1196 = vrot.slane %v1166, %v1195
      %v1197 = vlaneseq
      %v1198 = vshrl.u32 %v1197, 7
      %v1199 = vsub.s32 0, %v1198
      %v1200 = vrot.slane %v1168, %v1199
      %v1209 = vmul.f32 %v1111, %v1172
      %v1210 = vmul.f32 %v1112, %v1176
      %v1211 = vmul.f32 %v1113, %v1180
      %v1212 = vmul.f32 %v1114, %v1184
      %v1213 = vmul.f32 %v1115, %v1188
      %v1214 = vmul.f32 %v1116, %v1192
      %v1215 = vmul.f32 %v1117, %v1196
      %v1216 = vmul.f32 %v1118, %v1200
      %v1217 = vld [vmem:[%s671] sm:$0xff]
      %vm1218 = vcmp.ne.f32.partialorder %v1217, 0.0
      %v1219 = vpack.c.bf16 %v680, %v680
      %v1220 = vpack.c.bf16 %v681, %v681
      %vm1221 = vcmask 64512
      %v1223 = vsel %vm1221, %v1219, 0
      %v1226 = vsel %vm1221, %v1220, 0
      %1228 = vmatprep.subr.bf16.mxu0 0
      %1229 = vmatpush1.bf16.xpose.msra.mxu0 %v1226
      %1230 = vmatprep.subr.bf16.mxu0 0
      %1231 = vmatpush1.bf16.xpose.msra.mxu0 0
      %1232 = vmatprep.subr.bf16.mxu0 0
      %1233 = vmatpush1.bf16.xpose.msra.mxu0 0
      %1234 = vmatprep.subr.bf16.mxu0 0
      %1235 = vmatpush1.bf16.xpose.msra.mxu0 0
      %1236 = vmatprep.subr.bf16.mxu0 0
      %1237 = vmatpush1.bf16.xpose.msra.mxu0 0
      %1238 = vmatprep.subr.bf16.mxu0 0
      %1239 = vmatpush1.bf16.xpose.msra.mxu0 0
      %1240 = vmatprep.subr.bf16.mxu0 0
      %1241 = vmatpush1.bf16.xpose.msra.mxu0 0
      %1242 = vmatprep.subr.bf16.mxu0 0
      %1243 = vmatpush1.bf16.xpose.msra.mxu0 0
      %1244 = vmatprep.subr.bf16.mxu0 0
      %1245 = vmatpush1.bf16.xpose.msra.mxu0 0
      %1246 = vmatprep.subr.bf16.mxu0 0
      %1247 = vmatpush1.bf16.xpose.msra.mxu0 0
      %1248 = vmatprep.subr.bf16.mxu0 0
      %1249 = vmatpush1.bf16.xpose.msra.mxu0 0
      %1250 = vmatprep.subr.bf16.mxu0 0
      %1251 = vmatpush1.bf16.xpose.msra.mxu0 0
      %1252 = vmatprep.subr.bf16.mxu0 0
      %1253 = vmatpush1.bf16.xpose.msra.mxu0 0
      %1254 = vmatprep.subr.bf16.mxu0 0
      %1255 = vmatpush1.bf16.xpose.msra.mxu0 0
      %1256 = vmatprep.subr.bf16.mxu0 0
      %1257 = vmatpush1.bf16.xpose.msra.mxu0 0
      %1258 = vmatprep.subr.bf16.mxu0 0
      %1259 = vmatpush1.bf16.xpose.msra.mxu0 0
      %1260 = vmatprep.mubr.bf16.mxu0 0
      %1261 = vmatmul.mubr.bf16.gmra.mrb[0].mxu0 %v1223
      %v1262 = vpop.f32.mrb[0].mxu0
      %v1263 = vadd.f32 0.0, %v1262
      %v1264 = vpop.f32.mrb[0].mxu0
      %v1265 = vpop.f32.mrb[0].mxu0
      %v1266 = vpop.f32.mrb[0].mxu0
      %1267 = vdwg.mxu0
      %v1268 = vmul.f32 %v1263, 0.35355338
      %v1269 = vsel %vm1221, %v1209, 0.0
      %1270 = vadd.xlane.f32.xlu0 %v1269
      %v1271 = vpop.xlane.xlu0 %1270
      %v1272 = vsel %vm1221, %v1210, 0.0
      %1273 = vadd.xlane.f32.xlu0 %v1272
      %v1274 = vpop.xlane.xlu0 %1273
      %v1275 = vsel %vm1221, %v1211, 0.0
      %1276 = vadd.xlane.f32.xlu0 %v1275
      %v1277 = vpop.xlane.xlu0 %1276
      %v1278 = vsel %vm1221, %v1212, 0.0
      %1279 = vadd.xlane.f32.xlu0 %v1278
      %v1280 = vpop.xlane.xlu0 %1279
      %v1281 = vsel %vm1221, %v1213, 0.0
      %1282 = vadd.xlane.f32.xlu0 %v1281
      %v1283 = vpop.xlane.xlu0 %1282
      %v1284 = vsel %vm1221, %v1214, 0.0
      %1285 = vadd.xlane.f32.xlu0 %v1284
      %v1286 = vpop.xlane.xlu0 %1285
      %v1287 = vsel %vm1221, %v1215, 0.0
      %1288 = vadd.xlane.f32.xlu0 %v1287
      %v1289 = vpop.xlane.xlu0 %1288
      %v1290 = vsel %vm1221, %v1216, 0.0
      %1291 = vadd.xlane.f32.xlu0 %v1290
      %v1292 = vpop.xlane.xlu0 %1291
      %v1301 = vlaneseq
      %v1302 = vand.u32 %v1301, 127
      %v1303 = vlaneseq
      %v1304 = vshrl.u32 %v1303, 7
      %v1305 = vsub.s32 %v1302, %v1304
      %v1306 = vrot.slane %v1271, %v1305
      %v1307 = vlaneseq
      %v1308 = vshrl.u32 %v1307, 7
      %v1309 = vsub.s32 %v1302, %v1308
      %v1310 = vrot.slane %v1274, %v1309
      %v1311 = vlaneseq
      %v1312 = vshrl.u32 %v1311, 7
      %v1313 = vsub.s32 %v1302, %v1312
      %v1314 = vrot.slane %v1277, %v1313
      %v1315 = vlaneseq
      %v1316 = vshrl.u32 %v1315, 7
      %v1317 = vsub.s32 %v1302, %v1316
      %v1318 = vrot.slane %v1280, %v1317
      %v1319 = vlaneseq
      %v1320 = vshrl.u32 %v1319, 7
      %v1321 = vsub.s32 %v1302, %v1320
      %v1322 = vrot.slane %v1283, %v1321
      %v1323 = vlaneseq
      %v1324 = vshrl.u32 %v1323, 7
      %v1325 = vsub.s32 %v1302, %v1324
      %v1326 = vrot.slane %v1286, %v1325
      %v1327 = vlaneseq
      %v1328 = vshrl.u32 %v1327, 7
      %v1329 = vsub.s32 %v1302, %v1328
      %v1330 = vrot.slane %v1289, %v1329
      %v1331 = vlaneseq
      %v1332 = vshrl.u32 %v1331, 7
      %v1333 = vsub.s32 %v1302, %v1332
      %v1334 = vrot.slane %v1292, %v1333
      %vm1335 = vcmask 1041409
      %v1336 = vsel %vm1335, %v1310, %v1306
      %vm1337 = vcmask 1042434
      %v1338 = vsel %vm1337, %v1314, %v1336
      %vm1339 = vcmask 1043459
      %v1340 = vsel %vm1339, %v1318, %v1338
      %vm1341 = vcmask 1044484
      %v1342 = vsel %vm1341, %v1322, %v1340
      %vm1343 = vcmask 1045509
      %v1344 = vsel %vm1343, %v1326, %v1342
      %vm1345 = vcmask 1046534
      %v1346 = vsel %vm1345, %v1330, %v1344
      %vm1347 = vcmask 1047559
      %v1348 = vsel %vm1347, %v1334, %v1346
      %v1350 = vadd.f32 %v1268, %v1348
      %v1351 = vsel %vm1218, %v1350, -1e+30
      %v1352 = vsel %vm1221, %v1351, -inf
      %1353 = vmax.xlane.f32.xlu0 %v1352
      %v1354 = vpop.xlane.xlu0 %1353
      %v1355 = vsub.f32 %v1351, %v1354
      %v1356 = vmul.f32 %v1355, 1.442695
      %v1357 = vpow.pop %v1356
      %v1358 = vsel %vm1221, %v1357, 0.0
      %1359 = vadd.xlane.f32.xlu0 %v1358
      %v1360 = vpop.xlane.xlu0 %1359
      %v1361 = vrcp.pop %v1360
      %v1362 = vmul.f32 %v1357, %v1361
      %v1363 = vpack.c.bf16 %v1362, %v1362
      %1365 = vrot.lane.b32.xlu0 %v1220, 96
      %v1366 = vpop.permute.xlu0 %1365
      %v1368 = vsel %vm1221, %v1363, 0
      %vm1370 = vcmask 1043456
      %v1372 = vsel %vm1370, %v1366, 0
      %1374 = vmatprep.subr.bf16.mxu0 0
      %1375 = vmatpush1.bf16.msra.mxu0 %v1372
      %1376 = vmatprep.subr.bf16.mxu0 0
      %1377 = vmatpush1.bf16.msra.mxu0 0
      %1378 = vmatprep.subr.bf16.mxu0 0
      %1379 = vmatpush1.bf16.msra.mxu0 0
      %1380 = vmatprep.subr.bf16.mxu0 0
      %1381 = vmatpush1.bf16.msra.mxu0 0
      %1382 = vmatprep.subr.bf16.mxu0 0
      %1383 = vmatpush1.bf16.msra.mxu0 0
      %1384 = vmatprep.subr.bf16.mxu0 0
      %1385 = vmatpush1.bf16.msra.mxu0 0
      %1386 = vmatprep.subr.bf16.mxu0 0
      %1387 = vmatpush1.bf16.msra.mxu0 0
      %1388 = vmatprep.subr.bf16.mxu0 0
      %1389 = vmatpush1.bf16.msra.mxu0 0
      %1390 = vmatprep.subr.bf16.mxu0 0
      %1391 = vmatpush1.bf16.msra.mxu0 0
      %1392 = vmatprep.subr.bf16.mxu0 0
      %1393 = vmatpush1.bf16.msra.mxu0 0
      %1394 = vmatprep.subr.bf16.mxu0 0
      %1395 = vmatpush1.bf16.msra.mxu0 0
      %1396 = vmatprep.subr.bf16.mxu0 0
      %1397 = vmatpush1.bf16.msra.mxu0 0
      %1398 = vmatprep.subr.bf16.mxu0 0
      %1399 = vmatpush1.bf16.msra.mxu0 0
      %1400 = vmatprep.subr.bf16.mxu0 0
      %1401 = vmatpush1.bf16.msra.mxu0 0
      %1402 = vmatprep.subr.bf16.mxu0 0
      %1403 = vmatpush1.bf16.msra.mxu0 0
      %1404 = vmatprep.subr.bf16.mxu0 0
      %1405 = vmatpush1.bf16.msra.mxu0 0
      %1406 = vmatprep.mubr.bf16.mxu0 0
      %1407 = vmatmul.mubr.bf16.gmra.mrb[0].mxu0 %v1368
      %v1408 = vpop.f32.mrb[0].mxu0
      %v1409 = vadd.f32 0.0, %v1408
      %v1410 = vpop.f32.mrb[0].mxu0
      %v1411 = vpop.f32.mrb[0].mxu0
      %v1412 = vpop.f32.mrb[0].mxu0
      %1413 = vdwg.mxu0
      %1414 = vst.msk [vmem:[#allocation2] sm:$0xff] %vm1221, %v1409
      %1416 = vrot.lane.b32.xlu0 %v1219, 120
      %v1417 = vpop.permute.xlu0 %1416
      %1418 = vrot.lane.b32.xlu0 %v1220, 120
      %v1419 = vpop.permute.xlu0 %1418
      %v1421 = vsel %vm1221, %v1417, 0
      %v1424 = vsel %vm1221, %v1419, 0
      %1426 = vmatprep.subr.bf16.mxu0 0
      %1427 = vmatpush1.bf16.xpose.msra.mxu0 %v1424
      %1428 = vmatprep.subr.bf16.mxu0 0
      %1429 = vmatpush1.bf16.xpose.msra.mxu0 0
      %1430 = vmatprep.subr.bf16.mxu0 0
      %1431 = vmatpush1.bf16.xpose.msra.mxu0 0
      %1432 = vmatprep.subr.bf16.mxu0 0
      %1433 = vmatpush1.bf16.xpose.msra.mxu0 0
      %1434 = vmatprep.subr.bf16.mxu0 0
      %1435 = vmatpush1.bf16.xpose.msra.mxu0 0
      %1436 = vmatprep.subr.bf16.mxu0 0
      %1437 = vmatpush1.bf16.xpose.msra.mxu0 0
      %1438 = vmatprep.subr.bf16.mxu0 0
      %1439 = vmatpush1.bf16.xpose.msra.mxu0 0
      %1440 = vmatprep.subr.bf16.mxu0 0
      %1441 = vmatpush1.bf16.xpose.msra.mxu0 0
      %1442 = vmatprep.subr.bf16.mxu0 0
      %1443 = vmatpush1.bf16.xpose.msra.mxu0 0
      %1444 = vmatprep.subr.bf16.mxu0 0
      %1445 = vmatpush1.bf16.xpose.msra.mxu0 0
      %1446 = vmatprep.subr.bf16.mxu0 0
      %1447 = vmatpush1.bf16.xpose.msra.mxu0 0
      %1448 = vmatprep.subr.bf16.mxu0 0
      %1449 = vmatpush1.bf16.xpose.msra.mxu0 0
      %1450 = vmatprep.subr.bf16.mxu0 0
      %1451 = vmatpush1.bf16.xpose.msra.mxu0 0
      %1452 = vmatprep.subr.bf16.mxu0 0
      %1453 = vmatpush1.bf16.xpose.msra.mxu0 0
      %1454 = vmatprep.subr.bf16.mxu0 0
      %1455 = vmatpush1.bf16.xpose.msra.mxu0 0
      %1456 = vmatprep.subr.bf16.mxu0 0
      %1457 = vmatpush1.bf16.xpose.msra.mxu0 0
      %1458 = vmatprep.mubr.bf16.mxu0 0
      %1459 = vmatmul.mubr.bf16.gmra.mrb[0].mxu0 %v1421
      %v1460 = vpop.f32.mrb[0].mxu0
      %v1461 = vadd.f32 0.0, %v1460
      %v1462 = vpop.f32.mrb[0].mxu0
      %v1463 = vpop.f32.mrb[0].mxu0
      %v1464 = vpop.f32.mrb[0].mxu0
      %1465 = vdwg.mxu0
      %v1466 = vmul.f32 %v1461, 0.35355338
      %1475 = vrot.lane.b32.xlu0 %v1209, 120
      %v1476 = vpop.permute.xlu0 %1475
      %1477 = vrot.lane.b32.xlu0 %v1210, 120
      %v1478 = vpop.permute.xlu0 %1477
      %1479 = vrot.lane.b32.xlu0 %v1211, 120
      %v1480 = vpop.permute.xlu0 %1479
      %1481 = vrot.lane.b32.xlu0 %v1212, 120
      %v1482 = vpop.permute.xlu0 %1481
      %1483 = vrot.lane.b32.xlu0 %v1213, 120
      %v1484 = vpop.permute.xlu0 %1483
      %1485 = vrot.lane.b32.xlu0 %v1214, 120
      %v1486 = vpop.permute.xlu0 %1485
      %1487 = vrot.lane.b32.xlu0 %v1215, 120
      %v1488 = vpop.permute.xlu0 %1487
      %1489 = vrot.lane.b32.xlu0 %v1216, 120
      %v1490 = vpop.permute.xlu0 %1489
      %v1499 = vsel %vm1221, %v1476, 0.0
      %1500 = vadd.xlane.f32.xlu0 %v1499
      %v1501 = vpop.xlane.xlu0 %1500
      %v1502 = vsel %vm1221, %v1478, 0.0
      %1503 = vadd.xlane.f32.xlu0 %v1502
      %v1504 = vpop.xlane.xlu0 %1503
      %v1505 = vsel %vm1221, %v1480, 0.0
      %1506 = vadd.xlane.f32.xlu0 %v1505
      %v1507 = vpop.xlane.xlu0 %1506
      %v1508 = vsel %vm1221, %v1482, 0.0
      %1509 = vadd.xlane.f32.xlu0 %v1508
      %v1510 = vpop.xlane.xlu0 %1509
      %v1511 = vsel %vm1221, %v1484, 0.0
      %1512 = vadd.xlane.f32.xlu0 %v1511
      %v1513 = vpop.xlane.xlu0 %1512
      %v1514 = vsel %vm1221, %v1486, 0.0
      %1515 = vadd.xlane.f32.xlu0 %v1514
      %v1516 = vpop.xlane.xlu0 %1515
      %v1517 = vsel %vm1221, %v1488, 0.0
      %1518 = vadd.xlane.f32.xlu0 %v1517
      %v1519 = vpop.xlane.xlu0 %1518
      %v1520 = vsel %vm1221, %v1490, 0.0
      %1521 = vadd.xlane.f32.xlu0 %v1520
      %v1522 = vpop.xlane.xlu0 %1521
      %v1531 = vlaneseq
      %v1532 = vshrl.u32 %v1531, 7
      %v1533 = vsub.s32 %v1302, %v1532
      %v1534 = vrot.slane %v1501, %v1533
      %v1535 = vlaneseq
      %v1536 = vshrl.u32 %v1535, 7
      %v1537 = vsub.s32 %v1302, %v1536
      %v1538 = vrot.slane %v1504, %v1537
      %v1539 = vlaneseq
      %v1540 = vshrl.u32 %v1539, 7
      %v1541 = vsub.s32 %v1302, %v1540
      %v1542 = vrot.slane %v1507, %v1541
      %v1543 = vlaneseq
      %v1544 = vshrl.u32 %v1543, 7
      %v1545 = vsub.s32 %v1302, %v1544
      %v1546 = vrot.slane %v1510, %v1545
      %v1547 = vlaneseq
      %v1548 = vshrl.u32 %v1547, 7
      %v1549 = vsub.s32 %v1302, %v1548
      %v1550 = vrot.slane %v1513, %v1549
      %v1551 = vlaneseq
      %v1552 = vshrl.u32 %v1551, 7
      %v1553 = vsub.s32 %v1302, %v1552
      %v1554 = vrot.slane %v1516, %v1553
      %v1555 = vlaneseq
      %v1556 = vshrl.u32 %v1555, 7
      %v1557 = vsub.s32 %v1302, %v1556
      %v1558 = vrot.slane %v1519, %v1557
      %v1559 = vlaneseq
      %v1560 = vshrl.u32 %v1559, 7
      %v1561 = vsub.s32 %v1302, %v1560
      %v1562 = vrot.slane %v1522, %v1561
      %v1563 = vsel %vm1335, %v1538, %v1534
      %v1564 = vsel %vm1337, %v1542, %v1563
      %v1565 = vsel %vm1339, %v1546, %v1564
      %v1566 = vsel %vm1341, %v1550, %v1565
      %v1567 = vsel %vm1343, %v1554, %v1566
      %v1568 = vsel %vm1345, %v1558, %v1567
      %v1569 = vsel %vm1347, %v1562, %v1568
      %v1571 = vadd.f32 %v1466, %v1569
      %v1572 = vsel %vm1218, %v1571, -1e+30
      %v1573 = vsel %vm1221, %v1572, -inf
      %1574 = vmax.xlane.f32.xlu0 %v1573
      %v1575 = vpop.xlane.xlu0 %1574
      %v1576 = vsub.f32 %v1572, %v1575
      %v1577 = vmul.f32 %v1576, 1.442695
      %v1578 = vpow.pop %v1577
      %v1579 = vsel %vm1221, %v1578, 0.0
      %1580 = vadd.xlane.f32.xlu0 %v1579
      %v1581 = vpop.xlane.xlu0 %1580
      %v1582 = vrcp.pop %v1581
      %v1583 = vmul.f32 %v1578, %v1582
      %v1584 = vpack.c.bf16 %v1583, %v1583
      %1585 = vrot.lane.b32.xlu0 %v1220, 88
      %v1586 = vpop.permute.xlu0 %1585
      %v1588 = vsel %vm1221, %v1584, 0
      %v1591 = vsel %vm1370, %v1586, 0
      %1593 = vmatprep.subr.bf16.mxu0 0
      %1594 = vmatpush1.bf16.msra.mxu0 %v1591
      %1595 = vmatprep.subr.bf16.mxu0 0
      %1596 = vmatpush1.bf16.msra.mxu0 0
      %1597 = vmatprep.subr.bf16.mxu0 0
      %1598 = vmatpush1.bf16.msra.mxu0 0
      %1599 = vmatprep.subr.bf16.mxu0 0
      %1600 = vmatpush1.bf16.msra.mxu0 0
      %1601 = vmatprep.subr.bf16.mxu0 0
      %1602 = vmatpush1.bf16.msra.mxu0 0
      %1603 = vmatprep.subr.bf16.mxu0 0
      %1604 = vmatpush1.bf16.msra.mxu0 0
      %1605 = vmatprep.subr.bf16.mxu0 0
      %1606 = vmatpush1.bf16.msra.mxu0 0
      %1607 = vmatprep.subr.bf16.mxu0 0
      %1608 = vmatpush1.bf16.msra.mxu0 0
      %1609 = vmatprep.subr.bf16.mxu0 0
      %1610 = vmatpush1.bf16.msra.mxu0 0
      %1611 = vmatprep.subr.bf16.mxu0 0
      %1612 = vmatpush1.bf16.msra.mxu0 0
      %1613 = vmatprep.subr.bf16.mxu0 0
      %1614 = vmatpush1.bf16.msra.mxu0 0
      %1615 = vmatprep.subr.bf16.mxu0 0
      %1616 = vmatpush1.bf16.msra.mxu0 0
      %1617 = vmatprep.subr.bf16.mxu0 0
      %1618 = vmatpush1.bf16.msra.mxu0 0
      %1619 = vmatprep.subr.bf16.mxu0 0
      %1620 = vmatpush1.bf16.msra.mxu0 0
      %1621 = vmatprep.subr.bf16.mxu0 0
      %1622 = vmatpush1.bf16.msra.mxu0 0
      %1623 = vmatprep.subr.bf16.mxu0 0
      %1624 = vmatpush1.bf16.msra.mxu0 0
      %1625 = vmatprep.mubr.bf16.mxu0 0
      %1626 = vmatmul.mubr.bf16.gmra.mrb[0].mxu0 %v1588
      %v1627 = vpop.f32.mrb[0].mxu0
      %v1628 = vadd.f32 0.0, %v1627
      %v1629 = vpop.f32.mrb[0].mxu0
      %v1630 = vpop.f32.mrb[0].mxu0
      %v1631 = vpop.f32.mrb[0].mxu0
      %1632 = vdwg.mxu0
      %1634 = vrot.lane.b32.xlu0 %v1628, 8
      %v1635 = vpop.permute.xlu0 %1634
      %vm1637 = vcmask 130112
      %1638 = vst.msk [vmem:[#allocation2] sm:$0xff] %vm1637, %v1635
      %1639 = vrot.lane.b32.xlu0 %v1219, 112
      %v1640 = vpop.permute.xlu0 %1639
      %1641 = vrot.lane.b32.xlu0 %v1220, 112
      %v1642 = vpop.permute.xlu0 %1641
      %v1644 = vsel %vm1221, %v1640, 0
      %v1647 = vsel %vm1221, %v1642, 0
      %1649 = vmatprep.subr.bf16.mxu0 0
      %1650 = vmatpush1.bf16.xpose.msra.mxu0 %v1647
      %1651 = vmatprep.subr.bf16.mxu0 0
      %1652 = vmatpush1.bf16.xpose.msra.mxu0 0
      %1653 = vmatprep.subr.bf16.mxu0 0
      %1654 = vmatpush1.bf16.xpose.msra.mxu0 0
      %1655 = vmatprep.subr.bf16.mxu0 0
      %1656 = vmatpush1.bf16.xpose.msra.mxu0 0
      %1657 = vmatprep.subr.bf16.mxu0 0
      %1658 = vmatpush1.bf16.xpose.msra.mxu0 0
      %1659 = vmatprep.subr.bf16.mxu0 0
      %1660 = vmatpush1.bf16.xpose.msra.mxu0 0
      %1661 = vmatprep.subr.bf16.mxu0 0
      %1662 = vmatpush1.bf16.xpose.msra.mxu0 0
      %1663 = vmatprep.subr.bf16.mxu0 0
      %1664 = vmatpush1.bf16.xpose.msra.mxu0 0
      %1665 = vmatprep.subr.bf16.mxu0 0
      %1666 = vmatpush1.bf16.xpose.msra.mxu0 0
      %1667 = vmatprep.subr.bf16.mxu0 0
      %1668 = vmatpush1.bf16.xpose.msra.mxu0 0
      %1669 = vmatprep.subr.bf16.mxu0 0
      %1670 = vmatpush1.bf16.xpose.msra.mxu0 0
      %1671 = vmatprep.subr.bf16.mxu0 0
      %1672 = vmatpush1.bf16.xpose.msra.mxu0 0
      %1673 = vmatprep.subr.bf16.mxu0 0
      %1674 = vmatpush1.bf16.xpose.msra.mxu0 0
      %1675 = vmatprep.subr.bf16.mxu0 0
      %1676 = vmatpush1.bf16.xpose.msra.mxu0 0
      %1677 = vmatprep.subr.bf16.mxu0 0
      %1678 = vmatpush1.bf16.xpose.msra.mxu0 0
      %1679 = vmatprep.subr.bf16.mxu0 0
      %1680 = vmatpush1.bf16.xpose.msra.mxu0 0
      %1681 = vmatprep.mubr.bf16.mxu0 0
      %1682 = vmatmul.mubr.bf16.gmra.mrb[0].mxu0 %v1644
      %v1683 = vpop.f32.mrb[0].mxu0
      %v1684 = vadd.f32 0.0, %v1683
      %v1685 = vpop.f32.mrb[0].mxu0
      %v1686 = vpop.f32.mrb[0].mxu0
      %v1687 = vpop.f32.mrb[0].mxu0
      %1688 = vdwg.mxu0
      %v1689 = vmul.f32 %v1684, 0.35355338
      %1690 = vrot.lane.b32.xlu0 %v1209, 112
      %v1691 = vpop.permute.xlu0 %1690
      %1692 = vrot.lane.b32.xlu0 %v1210, 112
      %v1693 = vpop.permute.xlu0 %1692
      %1694 = vrot.lane.b32.xlu0 %v1211, 112
      %v1695 = vpop.permute.xlu0 %1694
      %1696 = vrot.lane.b32.xlu0 %v1212, 112
      %v1697 = vpop.permute.xlu0 %1696
      %1698 = vrot.lane.b32.xlu0 %v1213, 112
      %v1699 = vpop.permute.xlu0 %1698
      %1700 = vrot.lane.b32.xlu0 %v1214, 112
      %v1701 = vpop.permute.xlu0 %1700
      %1702 = vrot.lane.b32.xlu0 %v1215, 112
      %v1703 = vpop.permute.xlu0 %1702
      %1704 = vrot.lane.b32.xlu0 %v1216, 112
      %v1705 = vpop.permute.xlu0 %1704
      %v1714 = vsel %vm1221, %v1691, 0.0
      %1715 = vadd.xlane.f32.xlu0 %v1714
      %v1716 = vpop.xlane.xlu0 %1715
      %v1717 = vsel %vm1221, %v1693, 0.0
      %1718 = vadd.xlane.f32.xlu0 %v1717
      %v1719 = vpop.xlane.xlu0 %1718
      %v1720 = vsel %vm1221, %v1695, 0.0
      %1721 = vadd.xlane.f32.xlu0 %v1720
      %v1722 = vpop.xlane.xlu0 %1721
      %v1723 = vsel %vm1221, %v1697, 0.0
      %1724 = vadd.xlane.f32.xlu0 %v1723
      %v1725 = vpop.xlane.xlu0 %1724
      %v1726 = vsel %vm1221, %v1699, 0.0
      %1727 = vadd.xlane.f32.xlu0 %v1726
      %v1728 = vpop.xlane.xlu0 %1727
      %v1729 = vsel %vm1221, %v1701, 0.0
      %1730 = vadd.xlane.f32.xlu0 %v1729
      %v1731 = vpop.xlane.xlu0 %1730
      %v1732 = vsel %vm1221, %v1703, 0.0
      %1733 = vadd.xlane.f32.xlu0 %v1732
      %v1734 = vpop.xlane.xlu0 %1733
      %v1735 = vsel %vm1221, %v1705, 0.0
      %1736 = vadd.xlane.f32.xlu0 %v1735
      %v1737 = vpop.xlane.xlu0 %1736
      %v1746 = vlaneseq
      %v1747 = vshrl.u32 %v1746, 7
      %v1748 = vsub.s32 %v1302, %v1747
      %v1749 = vrot.slane %v1716, %v1748
      %v1750 = vlaneseq
      %v1751 = vshrl.u32 %v1750, 7
      %v1752 = vsub.s32 %v1302, %v1751
      %v1753 = vrot.slane %v1719, %v1752
      %v1754 = vlaneseq
      %v1755 = vshrl.u32 %v1754, 7
      %v1756 = vsub.s32 %v1302, %v1755
      %v1757 = vrot.slane %v1722, %v1756
      %v1758 = vlaneseq
      %v1759 = vshrl.u32 %v1758, 7
      %v1760 = vsub.s32 %v1302, %v1759
      %v1761 = vrot.slane %v1725, %v1760
      %v1762 = vlaneseq
      %v1763 = vshrl.u32 %v1762, 7
      %v1764 = vsub.s32 %v1302, %v1763
      %v1765 = vrot.slane %v1728, %v1764
      %v1766 = vlaneseq
      %v1767 = vshrl.u32 %v1766, 7
      %v1768 = vsub.s32 %v1302, %v1767
      %v1769 = vrot.slane %v1731, %v1768
      %v1770 = vlaneseq
      %v1771 = vshrl.u32 %v1770, 7
      %v1772 = vsub.s32 %v1302, %v1771
      %v1773 = vrot.slane %v1734, %v1772
      %v1774 = vlaneseq
      %v1775 = vshrl.u32 %v1774, 7
      %v1776 = vsub.s32 %v1302, %v1775
      %v1777 = vrot.slane %v1737, %v1776
      %v1778 = vsel %vm1335, %v1753, %v1749
      %v1779 = vsel %vm1337, %v1757, %v1778
      %v1780 = vsel %vm1339, %v1761, %v1779
      %v1781 = vsel %vm1341, %v1765, %v1780
      %v1782 = vsel %vm1343, %v1769, %v1781
      %v1783 = vsel %vm1345, %v1773, %v1782
      %v1784 = vsel %vm1347, %v1777, %v1783
      %v1786 = vadd.f32 %v1689, %v1784
      %v1787 = vsel %vm1218, %v1786, -1e+30
      %v1788 = vsel %vm1221, %v1787, -inf
      %1789 = vmax.xlane.f32.xlu0 %v1788
      %v1790 = vpop.xlane.xlu0 %1789
      %v1791 = vsub.f32 %v1787, %v1790
      %v1792 = vmul.f32 %v1791, 1.442695
      %v1793 = vpow.pop %v1792
      %v1794 = vsel %vm1221, %v1793, 0.0
      %1795 = vadd.xlane.f32.xlu0 %v1794
      %v1796 = vpop.xlane.xlu0 %1795
      %v1797 = vrcp.pop %v1796
      %v1798 = vmul.f32 %v1793, %v1797
      %v1799 = vpack.c.bf16 %v1798, %v1798
      %1800 = vrot.lane.b32.xlu0 %v1220, 80
      %v1801 = vpop.permute.xlu0 %1800
      %v1803 = vsel %vm1221, %v1799, 0
      %v1806 = vsel %vm1370, %v1801, 0
      %1808 = vmatprep.subr.bf16.mxu0 0
      %1809 = vmatpush1.bf16.msra.mxu0 %v1806
      %1810 = vmatprep.subr.bf16.mxu0 0
      %1811 = vmatpush1.bf16.msra.mxu0 0
      %1812 = vmatprep.subr.bf16.mxu0 0
      %1813 = vmatpush1.bf16.msra.mxu0 0
      %1814 = vmatprep.subr.bf16.mxu0 0
      %1815 = vmatpush1.bf16.msra.mxu0 0
      %1816 = vmatprep.subr.bf16.mxu0 0
      %1817 = vmatpush1.bf16.msra.mxu0 0
      %1818 = vmatprep.subr.bf16.mxu0 0
      %1819 = vmatpush1.bf16.msra.mxu0 0
      %1820 = vmatprep.subr.bf16.mxu0 0
      %1821 = vmatpush1.bf16.msra.mxu0 0
      %1822 = vmatprep.subr.bf16.mxu0 0
      %1823 = vmatpush1.bf16.msra.mxu0 0
      %1824 = vmatprep.subr.bf16.mxu0 0
      %1825 = vmatpush1.bf16.msra.mxu0 0
      %1826 = vmatprep.subr.bf16.mxu0 0
      %1827 = vmatpush1.bf16.msra.mxu0 0
      %1828 = vmatprep.subr.bf16.mxu0 0
      %1829 = vmatpush1.bf16.msra.mxu0 0
      %1830 = vmatprep.subr.bf16.mxu0 0
      %1831 = vmatpush1.bf16.msra.mxu0 0
      %1832 = vmatprep.subr.bf16.mxu0 0
      %1833 = vmatpush1.bf16.msra.mxu0 0
      %1834 = vmatprep.subr.bf16.mxu0 0
      %1835 = vmatpush1.bf16.msra.mxu0 0
      %1836 = vmatprep.subr.bf16.mxu0 0
      %1837 = vmatpush1.bf16.msra.mxu0 0
      %1838 = vmatprep.subr.bf16.mxu0 0
      %1839 = vmatpush1.bf16.msra.mxu0 0
      %1840 = vmatprep.mubr.bf16.mxu0 0
      %1841 = vmatmul.mubr.bf16.gmra.mrb[0].mxu0 %v1803
      %v1842 = vpop.f32.mrb[0].mxu0
      %v1843 = vadd.f32 0.0, %v1842
      %v1844 = vpop.f32.mrb[0].mxu0
      %v1845 = vpop.f32.mrb[0].mxu0
      %v1846 = vpop.f32.mrb[0].mxu0
      %1847 = vdwg.mxu0
      %1849 = vrot.lane.b32.xlu0 %v1843, 16
      %v1850 = vpop.permute.xlu0 %1849
      %vm1852 = vcmask 195712
      %1853 = vst.msk [vmem:[#allocation2] sm:$0xff] %vm1852, %v1850
      %1854 = vrot.lane.b32.xlu0 %v1219, 104
      %v1855 = vpop.permute.xlu0 %1854
      %1856 = vrot.lane.b32.xlu0 %v1220, 104
      %v1857 = vpop.permute.xlu0 %1856
      %v1859 = vsel %vm1221, %v1855, 0
      %v1862 = vsel %vm1221, %v1857, 0
      %1864 = vmatprep.subr.bf16.mxu0 0
      %1865 = vmatpush1.bf16.xpose.msra.mxu0 %v1862
      %1866 = vmatprep.subr.bf16.mxu0 0
      %1867 = vmatpush1.bf16.xpose.msra.mxu0 0
      %1868 = vmatprep.subr.bf16.mxu0 0
      %1869 = vmatpush1.bf16.xpose.msra.mxu0 0
      %1870 = vmatprep.subr.bf16.mxu0 0
      %1871 = vmatpush1.bf16.xpose.msra.mxu0 0
      %1872 = vmatprep.subr.bf16.mxu0 0
      %1873 = vmatpush1.bf16.xpose.msra.mxu0 0
      %1874 = vmatprep.subr.bf16.mxu0 0
      %1875 = vmatpush1.bf16.xpose.msra.mxu0 0
      %1876 = vmatprep.subr.bf16.mxu0 0
      %1877 = vmatpush1.bf16.xpose.msra.mxu0 0
      %1878 = vmatprep.subr.bf16.mxu0 0
      %1879 = vmatpush1.bf16.xpose.msra.mxu0 0
      %1880 = vmatprep.subr.bf16.mxu0 0
      %1881 = vmatpush1.bf16.xpose.msra.mxu0 0
      %1882 = vmatprep.subr.bf16.mxu0 0
      %1883 = vmatpush1.bf16.xpose.msra.mxu0 0
      %1884 = vmatprep.subr.bf16.mxu0 0
      %1885 = vmatpush1.bf16.xpose.msra.mxu0 0
      %1886 = vmatprep.subr.bf16.mxu0 0
      %1887 = vmatpush1.bf16.xpose.msra.mxu0 0
      %1888 = vmatprep.subr.bf16.mxu0 0
      %1889 = vmatpush1.bf16.xpose.msra.mxu0 0
      %1890 = vmatprep.subr.bf16.mxu0 0
      %1891 = vmatpush1.bf16.xpose.msra.mxu0 0
      %1892 = vmatprep.subr.bf16.mxu0 0
      %1893 = vmatpush1.bf16.xpose.msra.mxu0 0
      %1894 = vmatprep.subr.bf16.mxu0 0
      %1895 = vmatpush1.bf16.xpose.msra.mxu0 0
      %1896 = vmatprep.mubr.bf16.mxu0 0
      %1897 = vmatmul.mubr.bf16.gmra.mrb[0].mxu0 %v1859
      %v1898 = vpop.f32.mrb[0].mxu0
      %v1899 = vadd.f32 0.0, %v1898
      %v1900 = vpop.f32.mrb[0].mxu0
      %v1901 = vpop.f32.mrb[0].mxu0
      %v1902 = vpop.f32.mrb[0].mxu0
      %1903 = vdwg.mxu0
      %v1904 = vmul.f32 %v1899, 0.35355338
      %1905 = vrot.lane.b32.xlu0 %v1209, 104
      %v1906 = vpop.permute.xlu0 %1905
      %1907 = vrot.lane.b32.xlu0 %v1210, 104
      %v1908 = vpop.permute.xlu0 %1907
      %1909 = vrot.lane.b32.xlu0 %v1211, 104
      %v1910 = vpop.permute.xlu0 %1909
      %1911 = vrot.lane.b32.xlu0 %v1212, 104
      %v1912 = vpop.permute.xlu0 %1911
      %1913 = vrot.lane.b32.xlu0 %v1213, 104
      %v1914 = vpop.permute.xlu0 %1913
      %1915 = vrot.lane.b32.xlu0 %v1214, 104
      %v1916 = vpop.permute.xlu0 %1915
      %1917 = vrot.lane.b32.xlu0 %v1215, 104
      %v1918 = vpop.permute.xlu0 %1917
      %1919 = vrot.lane.b32.xlu0 %v1216, 104
      %v1920 = vpop.permute.xlu0 %1919
      %v1929 = vsel %vm1221, %v1906, 0.0
      %1930 = vadd.xlane.f32.xlu0 %v1929
      %v1931 = vpop.xlane.xlu0 %1930
      %v1932 = vsel %vm1221, %v1908, 0.0
      %1933 = vadd.xlane.f32.xlu0 %v1932
      %v1934 = vpop.xlane.xlu0 %1933
      %v1935 = vsel %vm1221, %v1910, 0.0
      %1936 = vadd.xlane.f32.xlu0 %v1935
      %v1937 = vpop.xlane.xlu0 %1936
      %v1938 = vsel %vm1221, %v1912, 0.0
      %1939 = vadd.xlane.f32.xlu0 %v1938
      %v1940 = vpop.xlane.xlu0 %1939
      %v1941 = vsel %vm1221, %v1914, 0.0
      %1942 = vadd.xlane.f32.xlu0 %v1941
      %v1943 = vpop.xlane.xlu0 %1942
      %v1944 = vsel %vm1221, %v1916, 0.0
      %1945 = vadd.xlane.f32.xlu0 %v1944
      %v1946 = vpop.xlane.xlu0 %1945
      %v1947 = vsel %vm1221, %v1918, 0.0
      %1948 = vadd.xlane.f32.xlu0 %v1947
      %v1949 = vpop.xlane.xlu0 %1948
      %v1950 = vsel %vm1221, %v1920, 0.0
      %1951 = vadd.xlane.f32.xlu0 %v1950
      %v1952 = vpop.xlane.xlu0 %1951
      %v1961 = vlaneseq
      %v1962 = vshrl.u32 %v1961, 7
      %v1963 = vsub.s32 %v1302, %v1962
      %v1964 = vrot.slane %v1931, %v1963
      %v1965 = vlaneseq
      %v1966 = vshrl.u32 %v1965, 7
      %v1967 = vsub.s32 %v1302, %v1966
      %v1968 = vrot.slane %v1934, %v1967
      %v1969 = vlaneseq
      %v1970 = vshrl.u32 %v1969, 7
      %v1971 = vsub.s32 %v1302, %v1970
      %v1972 = vrot.slane %v1937, %v1971
      %v1973 = vlaneseq
      %v1974 = vshrl.u32 %v1973, 7
      %v1975 = vsub.s32 %v1302, %v1974
      %v1976 = vrot.slane %v1940, %v1975
      %v1977 = vlaneseq
      %v1978 = vshrl.u32 %v1977, 7
      %v1979 = vsub.s32 %v1302, %v1978
      %v1980 = vrot.slane %v1943, %v1979
      %v1981 = vlaneseq
      %v1982 = vshrl.u32 %v1981, 7
      %v1983 = vsub.s32 %v1302, %v1982
      %v1984 = vrot.slane %v1946, %v1983
      %v1985 = vlaneseq
      %v1986 = vshrl.u32 %v1985, 7
      %v1987 = vsub.s32 %v1302, %v1986
      %v1988 = vrot.slane %v1949, %v1987
      %v1989 = vlaneseq
      %v1990 = vshrl.u32 %v1989, 7
      %v1991 = vsub.s32 %v1302, %v1990
      %v1992 = vrot.slane %v1952, %v1991
      %v1993 = vsel %vm1335, %v1968, %v1964
      %v1994 = vsel %vm1337, %v1972, %v1993
      %v1995 = vsel %vm1339, %v1976, %v1994
      %v1996 = vsel %vm1341, %v1980, %v1995
      %v1997 = vsel %vm1343, %v1984, %v1996
      %v1998 = vsel %vm1345, %v1988, %v1997
      %v1999 = vsel %vm1347, %v1992, %v1998
      %v2001 = vadd.f32 %v1904, %v1999
      %v2002 = vsel %vm1218, %v2001, -1e+30
      %v2003 = vsel %vm1221, %v2002, -inf
      %2004 = vmax.xlane.f32.xlu0 %v2003
      %v2005 = vpop.xlane.xlu0 %2004
      %v2006 = vsub.f32 %v2002, %v2005
      %v2007 = vmul.f32 %v2006, 1.442695
      %v2008 = vpow.pop %v2007
      %v2009 = vsel %vm1221, %v2008, 0.0
      %2010 = vadd.xlane.f32.xlu0 %v2009
      %v2011 = vpop.xlane.xlu0 %2010
      %v2012 = vrcp.pop %v2011
      %v2013 = vmul.f32 %v2008, %v2012
      %v2014 = vpack.c.bf16 %v2013, %v2013
      %2015 = vrot.lane.b32.xlu0 %v1220, 72
      %v2016 = vpop.permute.xlu0 %2015
      %v2018 = vsel %vm1221, %v2014, 0
      %v2021 = vsel %vm1370, %v2016, 0
      %2023 = vmatprep.subr.bf16.mxu0 0
      %2024 = vmatpush1.bf16.msra.mxu0 %v2021
      %2025 = vmatprep.subr.bf16.mxu0 0
      %2026 = vmatpush1.bf16.msra.mxu0 0
      %2027 = vmatprep.subr.bf16.mxu0 0
      %2028 = vmatpush1.bf16.msra.mxu0 0
      %2029 = vmatprep.subr.bf16.mxu0 0
      %2030 = vmatpush1.bf16.msra.mxu0 0
      %2031 = vmatprep.subr.bf16.mxu0 0
      %2032 = vmatpush1.bf16.msra.mxu0 0
      %2033 = vmatprep.subr.bf16.mxu0 0
      %2034 = vmatpush1.bf16.msra.mxu0 0
      %2035 = vmatprep.subr.bf16.mxu0 0
      %2036 = vmatpush1.bf16.msra.mxu0 0
      %2037 = vmatprep.subr.bf16.mxu0 0
      %2038 = vmatpush1.bf16.msra.mxu0 0
      %2039 = vmatprep.subr.bf16.mxu0 0
      %2040 = vmatpush1.bf16.msra.mxu0 0
      %2041 = vmatprep.subr.bf16.mxu0 0
      %2042 = vmatpush1.bf16.msra.mxu0 0
      %2043 = vmatprep.subr.bf16.mxu0 0
      %2044 = vmatpush1.bf16.msra.mxu0 0
      %2045 = vmatprep.subr.bf16.mxu0 0
      %2046 = vmatpush1.bf16.msra.mxu0 0
      %2047 = vmatprep.subr.bf16.mxu0 0
      %2048 = vmatpush1.bf16.msra.mxu0 0
      %2049 = vmatprep.subr.bf16.mxu0 0
      %2050 = vmatpush1.bf16.msra.mxu0 0
      %2051 = vmatprep.subr.bf16.mxu0 0
      %2052 = vmatpush1.bf16.msra.mxu0 0
      %2053 = vmatprep.subr.bf16.mxu0 0
      %2054 = vmatpush1.bf16.msra.mxu0 0
      %2055 = vmatprep.mubr.bf16.mxu0 0
      %2056 = vmatmul.mubr.bf16.gmra.mrb[0].mxu0 %v2018
      %v2057 = vpop.f32.mrb[0].mxu0
      %v2058 = vadd.f32 0.0, %v2057
      %v2059 = vpop.f32.mrb[0].mxu0
      %v2060 = vpop.f32.mrb[0].mxu0
      %v2061 = vpop.f32.mrb[0].mxu0
      %2062 = vdwg.mxu0
      %2064 = vrot.lane.b32.xlu0 %v2058, 24
      %v2065 = vpop.permute.xlu0 %2064
      %vm2067 = vcmask 261312
      %2068 = vst.msk [vmem:[#allocation2] sm:$0xff] %vm2067, %v2065
      %v2069 = vld [vmem:[#allocation2] sm:$0xff]
      %v2070 = vld [vmem:[%s636] sm:$0xff]
      %v2071 = vadd.f32 %v2069, %v2070
      %v2072 = vld [vmem:[%s12] sm:$0x1]
      %v2073 = vld [vmem:[%s13] sm:$0x1]
      %v2074 = vsel %vm1026, %v2071, 0.0
      %2075 = vadd.xlane.f32.xlu0 %v2074
      %v2076 = vpop.xlane.xlu0 %2075
      %v2077 = vrcp.pop 32.0
      %v2078 = vmul.f32 %v2076, %v2077
      %v2079 = vsub.f32 %v2071, %v2078
      %v2080 = vmul.f32 %v2079, %v2079
      %v2081 = vsel %vm1026, %v2080, 0.0
      %2082 = vadd.xlane.f32.xlu0 %v2081
      %v2083 = vpop.xlane.xlu0 %2082
      %v2084 = vmul.f32 %v2083, %v2077
      %v2085 = vadd.f32 %v2084, 1e-05
      %v2086 = vrsqrt.pop %v2085
      %v2087 = vmul.f32 %v2079, %v2086
      %v2089 = vlaneseq
      %v2090 = vshrl.u32 %v2089, 7
      %v2091 = vsub.s32 0, %v2090
      %v2092 = vrot.slane %v2072, %v2091
      %v2094 = vmul.f32 %v2087, %v2092
      %v2096 = vlaneseq
      %v2097 = vshrl.u32 %v2096, 7
      %v2098 = vsub.s32 0, %v2097
      %v2099 = vrot.slane %v2073, %v2098
      %v2101 = vadd.f32 %v2094, %v2099
      %2102 = vst.msk [vmem:[%s678] sm:$0xff] %vm1026, %v2101
      %p2103 = scmp.lt.s32.totalorder %s29, 1
      %s2104 = scalar_select %p2103, %s29, 1
      %p2105 = scmp.lt.s32.totalorder %s30, 0
      %s2106 = scalar_select %p2105, %s30, 0
      %s2107 = sadd.s32 %s2106, %s2104
      %s2108 = smul.addr %s2107, 8
      %s2109 = scalar_lea.vmem %s14, %s2108
      // Predicated region
      $region77: #{encoder_forward.23} parent=75 // pred_check
        %p2110 = pneg %p405
      $region78: #{encoder_forward.23} parent=75 // pred_check_branch
        %2112 = sbr.rel (%p2110) target = $region80
      $region79: #{encoder_forward.23} parent=75 // pred_region
        _
      $region80: #{encoder_forward.23} parent=75 // pred_fallthru
        _
    $region76: #{encoder_forward.23} parent=5 // pred_fallthru
      _
    %p2113 = scmp.le.s32.totalorder 2, %s20
    // Predicated region
    $region81: #{encoder_forward.23} parent=5 // pred_check
      %p2114 = pneg %p2113
    $region82: #{encoder_forward.23} parent=5 // pred_check_branch
      %2116 = sbr.rel (%p2114) target = $region84
    $region83: #{encoder_forward.23} parent=5 // pred_region
      %s2117 = ssub.s32 %s20, 2
      // Predicated region
      $region85: #{encoder_forward.23} parent=83 // pred_check
        %p2118 = pneg %p411
      $region86: #{encoder_forward.23} parent=83 // pred_check_branch
        %2120 = sbr.rel (%p2118) target = $region88
      $region87: #{encoder_forward.23} parent=83 // pred_region
        %p2121 = scmp.lt.s32.totalorder %s31, 1
        %s2122 = scalar_select %p2121, %s31, 1
        %p2123 = scmp.lt.s32.totalorder %s32, 0
        %s2124 = scalar_select %p2123, %s32, 0
        %s2125 = sadd.s32 %s2124, %s2122
        %s2126 = smul.addr %s2125, 8
        %s2127 = scalar_lea.vmem %s14, %s2126
      $region88: #{encoder_forward.23} parent=83 // pred_fallthru
        _
    $region84: #{encoder_forward.23} parent=5 // pred_fallthru
      _
  $region6: #{encoder_forward.23} parent=0 // loop_footer
    %s24 = sadd.s32 1, %s20
  $region7: #{encoder_forward.23} parent=0 // loop_footer_branch
    %19 = sbr.rel target = $region3
  $region8: #{encoder_forward.23} parent=0 // loop_exit
    _

// kernel: encoder_forward.34
$region0: #{encoder_forward.34}
  #allocation0 [shape = 'u32[]', space=smem, size = 0x4, offset = 0x4, fixed_abs, tag = 'smem constant byte address 0x4 - core index']
  #allocation1 [shape = 'u32[144,128]{1,0:T(1,128)}', space=vmem, size = 0x12000, scoped, tag = 'internal scratch']
  %s0 = inlined_call_operand.vmem [shape: f32[16,32], index: 0, kind: input, shape index: {}]
  %s1 = inlined_call_operand.vmem [shape: bf16[32,32], index: 1, kind: input, shape index: {}]
  %s2 = inlined_call_operand.vmem [shape: f32[1,32], index: 2, kind: input, shape index: {}]
  %s3 = inlined_call_operand.vmem [shape: bf16[32,32], index: 3, kind: input, shape index: {}]
  %s4 = inlined_call_operand.vmem [shape: f32[1,32], index: 4, kind: input, shape index: {}]
  %s5 = inlined_call_operand.vmem [shape: f32[16,32], index: 5, kind: output, shape index: {}]
  %s6 = sld [smem:[#allocation0]]
  $region30: #{encoder_forward.34} parent=0
    _
  %s8 = ssub.s32 1, %s6
  %s9 = scalar_select 0, %s8, %s6
  // Predicated region
  $region2: #{encoder_forward.34} parent=0 // pred_check
    _
  $region3: #{encoder_forward.34} parent=0 // pred_check_branch
    %11 = sbr.rel (0) target = $region5
  $region4: #{encoder_forward.34} parent=0 // pred_region
    _
  $region5: #{encoder_forward.34} parent=0 // pred_fallthru
    _
  // Predicated region
  $region6: #{encoder_forward.34} parent=0 // pred_check
    _
  $region7: #{encoder_forward.34} parent=0 // pred_check_branch
    %13 = sbr.rel (0) target = $region9
  $region8: #{encoder_forward.34} parent=0 // pred_region
    _
  $region9: #{encoder_forward.34} parent=0 // pred_fallthru
    _
  // Predicated region
  $region10: #{encoder_forward.34} parent=0 // pred_check
    _
  $region11: #{encoder_forward.34} parent=0 // pred_check_branch
    %15 = sbr.rel (0) target = $region13
  $region12: #{encoder_forward.34} parent=0 // pred_region
    _
  $region13: #{encoder_forward.34} parent=0 // pred_fallthru
    _
  // Predicated region
  $region14: #{encoder_forward.34} parent=0 // pred_check
    _
  $region15: #{encoder_forward.34} parent=0 // pred_check_branch
    %17 = sbr.rel (0) target = $region17
  $region16: #{encoder_forward.34} parent=0 // pred_region
    _
  $region17: #{encoder_forward.34} parent=0 // pred_fallthru
    _
  // Predicated region
  $region18: #{encoder_forward.34} parent=0 // pred_check
    _
  $region19: #{encoder_forward.34} parent=0 // pred_check_branch
    %19 = sbr.rel (0) target = $region21
  $region20: #{encoder_forward.34} parent=0 // pred_region
    _
  $region21: #{encoder_forward.34} parent=0 // pred_fallthru
    _
  %v21 = vld [vmem:[%s0] sm:$0xff]
  %v22 = vld [vmem:[%s0 + $0x8] sm:$0xff]
  %v23 = vpack.c.bf16 %v22, %v21
  %v24 = vld [vmem:[%s1] sm:$0xf]
  %v25 = vld [vmem:[%s1 + $0x4] sm:$0xf]
  %v26 = vld [vmem:[%s1 + $0x8] sm:$0xf]
  %v27 = vld [vmem:[%s1 + $0xc] sm:$0xf]
  %v28 = vld [vmem:[%s2] sm:$0x1]
  %v30 = vlaneseq
  %v31 = vshrl.u32 %v30, 7
  %v32 = vsub.s32 0, %v31
  %v33 = vrot.slane %v28, %v32
  %v39 = vunpack.c.l.b16 %v24
  %v40 = vunpack.c.l.b16 %v25
  %v41 = vunpack.c.l.b16 %v26
  %v42 = vunpack.c.l.b16 %v27
  %v43 = vpack.c.b16 %v40, %v39
  %v44 = vpack.c.b16 %v42, %v41
  %vm47 = vcmask 261120
  %v49 = vsel %vm47, %v23, 0
  %51 = vmatprep.subr.bf16.mxu0 0
  %52 = vmatpush1.bf16.msra.mxu0 %v43
  %53 = vmatprep.subr.bf16.mxu0 0
  %54 = vmatpush1.bf16.msra.mxu0 %v44
  %55 = vmatprep.subr.bf16.mxu0 0
  %56 = vmatpush1.bf16.msra.mxu0 0
  %57 = vmatprep.subr.bf16.mxu0 0
  %58 = vmatpush1.bf16.msra.mxu0 0
  %59 = vmatprep.subr.bf16.mxu0 0
  %60 = vmatpush1.bf16.msra.mxu0 0
  %61 = vmatprep.subr.bf16.mxu0 0
  %62 = vmatpush1.bf16.msra.mxu0 0
  %63 = vmatprep.subr.bf16.mxu0 0
  %64 = vmatpush1.bf16.msra.mxu0 0
  %65 = vmatprep.subr.bf16.mxu0 0
  %66 = vmatpush1.bf16.msra.mxu0 0
  %67 = vmatprep.subr.bf16.mxu0 0
  %68 = vmatpush1.bf16.msra.mxu0 0
  %69 = vmatprep.subr.bf16.mxu0 0
  %70 = vmatpush1.bf16.msra.mxu0 0
  %71 = vmatprep.subr.bf16.mxu0 0
  %72 = vmatpush1.bf16.msra.mxu0 0
  %73 = vmatprep.subr.bf16.mxu0 0
  %74 = vmatpush1.bf16.msra.mxu0 0
  %75 = vmatprep.subr.bf16.mxu0 0
  %76 = vmatpush1.bf16.msra.mxu0 0
  %77 = vmatprep.subr.bf16.mxu0 0
  %78 = vmatpush1.bf16.msra.mxu0 0
  %79 = vmatprep.subr.bf16.mxu0 0
  %80 = vmatpush1.bf16.msra.mxu0 0
  %81 = vmatprep.subr.bf16.mxu0 0
  %82 = vmatpush1.bf16.msra.mxu0 0
  %83 = vmatprep.mubr.bf16.mxu0 0
  %84 = vmatmul.mubr.bf16.gmra.mrb[0].mxu0 %v49
  %v85 = vpop.f32.mrb[0].mxu0
  %v86 = vadd.f32 %v33, %v85
  %v87 = vpop.f32.mrb[0].mxu0
  %v88 = vpop.f32.mrb[0].mxu0
  %v89 = vadd.f32 %v33, %v88
  %v90 = vpop.f32.mrb[0].mxu0
  %91 = vdwg.mxu0
  %v92 = vmax.f32 %v86, 0.0
  %v93 = vmax.f32 %v89, 0.0
  %v94 = vpack.c.bf16 %v93, %v92
  %v95 = vld [vmem:[%s3] sm:$0xf]
  %v96 = vld [vmem:[%s3 + $0x4] sm:$0xf]
  %v97 = vld [vmem:[%s3 + $0x8] sm:$0xf]
  %v98 = vld [vmem:[%s3 + $0xc] sm:$0xf]
  %v99 = vld [vmem:[%s4] sm:$0x1]
  %v101 = vlaneseq
  %v102 = vshrl.u32 %v101, 7
  %v103 = vsub.s32 0, %v102
  %v104 = vrot.slane %v99, %v103
  %v110 = vunpack.c.l.b16 %v95
  %v111 = vunpack.c.l.b16 %v96
  %v112 = vunpack.c.l.b16 %v97
  %v113 = vunpack.c.l.b16 %v98
  %v114 = vpack.c.b16 %v111, %v110
  %v115 = vpack.c.b16 %v113, %v112
  %v119 = vsel %vm47, %v94, 0
  %121 = vmatprep.subr.bf16.mxu0 0
  %122 = vmatpush1.bf16.msra.mxu0 %v114
  %123 = vmatprep.subr.bf16.mxu0 0
  %124 = vmatpush1.bf16.msra.mxu0 %v115
  %125 = vmatprep.subr.bf16.mxu0 0
  %126 = vmatpush1.bf16.msra.mxu0 0
  %127 = vmatprep.subr.bf16.mxu0 0
  %128 = vmatpush1.bf16.msra.mxu0 0
  %129 = vmatprep.subr.bf16.mxu0 0
  %130 = vmatpush1.bf16.msra.mxu0 0
  %131 = vmatprep.subr.bf16.mxu0 0
  %132 = vmatpush1.bf16.msra.mxu0 0
  %133 = vmatprep.subr.bf16.mxu0 0
  %134 = vmatpush1.bf16.msra.mxu0 0
  %135 = vmatprep.subr.bf16.mxu0 0
  %136 = vmatpush1.bf16.msra.mxu0 0
  %137 = vmatprep.subr.bf16.mxu0 0
  %138 = vmatpush1.bf16.msra.mxu0 0
  %139 = vmatprep.subr.bf16.mxu0 0
  %140 = vmatpush1.bf16.msra.mxu0 0
  %141 = vmatprep.subr.bf16.mxu0 0
  %142 = vmatpush1.bf16.msra.mxu0 0
  %143 = vmatprep.subr.bf16.mxu0 0
  %144 = vmatpush1.bf16.msra.mxu0 0
  %145 = vmatprep.subr.bf16.mxu0 0
  %146 = vmatpush1.bf16.msra.mxu0 0
  %147 = vmatprep.subr.bf16.mxu0 0
  %148 = vmatpush1.bf16.msra.mxu0 0
  %149 = vmatprep.subr.bf16.mxu0 0
  %150 = vmatpush1.bf16.msra.mxu0 0
  %151 = vmatprep.subr.bf16.mxu0 0
  %152 = vmatpush1.bf16.msra.mxu0 0
  %153 = vmatprep.mubr.bf16.mxu0 0
  %154 = vmatmul.mubr.bf16.gmra.mrb[0].mxu0 %v119
  %v155 = vpop.f32.mrb[0].mxu0
  %v156 = vadd.f32 %v104, %v155
  %v157 = vpop.f32.mrb[0].mxu0
  %v158 = vpop.f32.mrb[0].mxu0
  %v159 = vadd.f32 %v104, %v158
  %v160 = vpop.f32.mrb[0].mxu0
  %161 = vdwg.mxu0
  %162 = vst.msk [vmem:[%s5] sm:$0xff] %vm47, %v156
  %163 = vst.msk [vmem:[%s5 + $0x8] sm:$0xff] %vm47, %v159
  // Predicated region
  $region22: #{encoder_forward.34} parent=0 // pred_check
    _
  $region23: #{encoder_forward.34} parent=0 // pred_check_branch
    %165 = sbr.rel (0) target = $region25
  $region24: #{encoder_forward.34} parent=0 // pred_region
    _
  $region25: #{encoder_forward.34} parent=0 // pred_fallthru
    _
  // Predicated region
  $region26: #{encoder_forward.34} parent=0 // pred_check
    _
  $region27: #{encoder_forward.34} parent=0 // pred_check_branch
    %167 = sbr.rel (0) target = $region29
  $region28: #{encoder_forward.34} parent=0 // pred_region
    _
  $region29: #{encoder_forward.34} parent=0 // pred_fallthru
    _

// kernel: encoder_forward.26
$region0: #{encoder_forward.26}
  #allocation0 [shape = 'u32[]', space=smem, size = 0x4, offset = 0x4, fixed_abs, tag = 'smem constant byte address 0x4 - core index']
  #allocation1 [shape = 'u32[144,128]{1,0:T(1,128)}', space=vmem, size = 0x12000, scoped, tag = 'internal scratch']
  #allocation2 [shape = 'f32[8,32]{1,0:T(8,128)}', space=vmem, size = 0x1000, scoped, tag = 'scratch operand']
  %s0 = inlined_call_operand.vmem [shape: f32[2,8,32], index: 0, kind: input, shape index: {}]
  %s1 = inlined_call_operand.vmem [shape: f32[2,8,64], index: 1, kind: input, shape index: {}]
  %s2 = inlined_call_operand.vmem [shape: f32[2,8,32], index: 2, kind: input, shape index: {}]
  %s3 = inlined_call_operand.vmem [shape: bf16[32,32], index: 3, kind: input, shape index: {}]
  %s4 = inlined_call_operand.vmem [shape: f32[1,32], index: 4, kind: input, shape index: {}]
  %s5 = inlined_call_operand.vmem [shape: f32[1,32], index: 5, kind: input, shape index: {}]
  %s6 = inlined_call_operand.vmem [shape: f32[1,32], index: 6, kind: input, shape index: {}]
  %s7 = inlined_call_operand.vmem [shape: f32[2,8,32], index: 7, kind: output, shape index: {}]
  %s8 = sld [smem:[#allocation0]]
  $region61: #{encoder_forward.26} parent=0
    _
  %s10 = ssub.s32 1, %s8
  %s11 = scalar_select 0, %s10, %s8
  loop: start=0, step=1, limit=4
  $region2: #{encoder_forward.26} parent=0 // loop_pre_header
    _
  $region3: #{encoder_forward.26} parent=0 // loop_header
    %s13 = sphi 0, %s17
    %p14 = scmp.ge.s32.totalorder %s13, 4
    %s20 = sphi 0, %s32
    %s21 = sphi 0, %s28
    %s22 = sphi 0, %s20
    %s23 = sphi 0, %s21
    %s24 = sphi 0, %s22
    %s25 = sphi 0, %s23
    %s37 = sphi 0, %s39
    %s40 = sphi 0, %s37
    %s41 = sphi 0, %s40
    %s57 = sphi 0, %s41
    %s63 = sphi 0, %s65
    %s66 = sphi 0, %s63
    %s67 = sphi 0, %s66
    %s83 = sphi 0, %s67
    %s91 = sphi 0, %s93
    %s94 = sphi 0, %s91
    %s95 = sphi 0, %s94
    %s111 = sphi 0, %s95
    %s115 = sphi 0, %s115
    %s117 = sphi 0, %s115
    %s118 = sphi 0, %s117
    %s132 = sphi 0, %s118
    %s136 = sphi 0, %s136
    %s138 = sphi 0, %s136
    %s139 = sphi 0, %s138
    %s153 = sphi 0, %s139
    %s157 = sphi 0, %s157
    %s159 = sphi 0, %s157
    %s160 = sphi 0, %s159
    %s174 = sphi 0, %s160
    %s178 = sphi 0, %s178
    %s180 = sphi 0, %s178
    %s181 = sphi 0, %s180
    %s195 = sphi 0, %s181
    %s203 = sphi 0, %s205
    %s206 = sphi 0, %s203
    %s207 = sphi 0, %s206
    %s223 = sphi 0, %s207
  $region4: #{encoder_forward.26} parent=0 // loop_header_branch
    %16 = sbr.rel (%p14) target = $region8
  $region5: #{encoder_forward.26} parent=0 // loop_body
    %s18 = ssub.s32 %s13, 1
    %s19 = ssub.s32 %s13, 2
    %s26 = sadd.s32 1, %s21
    %p27 = scmp.ge.s32.totalorder %s26, 1
    %s28 = scalar_select %p27, 0, %s26
    %s29 = sadd.s32 1, %s20
    %s30 = scalar_select %p27, %s29, %s20
    %p31 = scmp.ge.s32.totalorder %s30, 2
    %s32 = scalar_select %p31, 0, %s30
    %s33 = ssub.s32 %s20, %s32
    %s34 = ssub.s32 %s21, %s28
    %s35 = sor.u32 %s33, %s34
    %p36 = scmp.eq.s32.totalorder %s35, 0
    %s38 = sadd.s32 %s37, 1
    %s39 = scalar_select %p36, %s37, %s38
    %p42 = pneg %p36
    %p43 = scmp.eq.s32.totalorder %s13, 1
    %p44 = por %p42, %p43
    %p45 = scmp.ne.s32.totalorder %s37, %s40
    %p46 = scmp.eq.s32.totalorder %s13, 0
    %p47 = por %p45, %p46
    %p48 = scmp.ne.s32.totalorder %s37, %s40
    %p49 = scmp.eq.s32.totalorder %s18, 1
    %p50 = por %p48, %p49
    %p51 = scmp.ne.s32.totalorder %s40, %s41
    %p52 = scmp.eq.s32.totalorder %s18, 0
    %p53 = por %p51, %p52
    %p54 = scmp.ne.s32.totalorder %s40, %s41
    %p55 = scmp.eq.s32.totalorder %s19, 1
    %p56 = por %p54, %p55
    %p58 = scmp.ne.s32.totalorder %s41, %s57
    %p59 = scmp.eq.s32.totalorder %s19, 0
    %p60 = por %p58, %p59
    %s61 = ssub.s32 %s20, %s32
    %p62 = scmp.eq.s32.totalorder %s61, 0
    %s64 = sadd.s32 %s63, 1
    %s65 = scalar_select %p62, %s63, %s64
    %p68 = pneg %p62
    %p69 = scmp.eq.s32.totalorder %s13, 1
    %p70 = por %p68, %p69
    %p71 = scmp.ne.s32.totalorder %s63, %s66
    %p72 = scmp.eq.s32.totalorder %s13, 0
    %p73 = por %p71, %p72
    %p74 = scmp.ne.s32.totalorder %s63, %s66
    %p75 = scmp.eq.s32.totalorder %s18, 1
    %p76 = por %p74, %p75
    %p77 = scmp.ne.s32.totalorder %s66, %s67
    %p78 = scmp.eq.s32.totalorder %s18, 0
    %p79 = por %p77, %p78
    %p80 = scmp.ne.s32.totalorder %s66, %s67
    %p81 = scmp.eq.s32.totalorder %s19, 1
    %p82 = por %p80, %p81
    %p84 = scmp.ne.s32.totalorder %s67, %s83
    %p85 = scmp.eq.s32.totalorder %s19, 0
    %p86 = por %p84, %p85
    %s87 = ssub.s32 %s20, %s32
    %s88 = ssub.s32 %s21, %s28
    %s89 = sor.u32 %s87, %s88
    %p90 = scmp.eq.s32.totalorder %s89, 0
    %s92 = sadd.s32 %s91, 1
    %s93 = scalar_select %p90, %s91, %s92
    %p96 = pneg %p90
    %p97 = scmp.eq.s32.totalorder %s13, 1
    %p98 = por %p96, %p97
    %p99 = scmp.ne.s32.totalorder %s91, %s94
    %p100 = scmp.eq.s32.totalorder %s13, 0
    %p101 = por %p99, %p100
    %p102 = scmp.ne.s32.totalorder %s91, %s94
    %p103 = scmp.eq.s32.totalorder %s18, 1
    %p104 = por %p102, %p103
    %p105 = scmp.ne.s32.totalorder %s94, %s95
    %p106 = scmp.eq.s32.totalorder %s18, 0
    %p107 = por %p105, %p106
    %p108 = scmp.ne.s32.totalorder %s94, %s95
    %p109 = scmp.eq.s32.totalorder %s19, 1
    %p110 = por %p108, %p109
    %p112 = scmp.ne.s32.totalorder %s95, %s111
    %p113 = scmp.eq.s32.totalorder %s19, 0
    %p114 = por %p112, %p113
    %s116 = sadd.s32 %s115, 1
    %p119 = scmp.eq.s32.totalorder %s13, 1
    %p120 = scmp.ne.s32.totalorder %s115, %s117
    %p121 = scmp.eq.s32.totalorder %s13, 0
    %p122 = por %p120, %p121
    %p123 = scmp.ne.s32.totalorder %s115, %s117
    %p124 = scmp.eq.s32.totalorder %s18, 1
    %p125 = por %p123, %p124
    %p126 = scmp.ne.s32.totalorder %s117, %s118
    %p127 = scmp.eq.s32.totalorder %s18, 0
    %p128 = por %p126, %p127
    %p129 = scmp.ne.s32.totalorder %s117, %s118
    %p130 = scmp.eq.s32.totalorder %s19, 1
    %p131 = por %p129, %p130
    %p133 = scmp.ne.s32.totalorder %s118, %s132
    %p134 = scmp.eq.s32.totalorder %s19, 0
    %p135 = por %p133, %p134
    %s137 = sadd.s32 %s136, 1
    %p140 = scmp.eq.s32.totalorder %s13, 1
    %p141 = scmp.ne.s32.totalorder %s136, %s138
    %p142 = scmp.eq.s32.totalorder %s13, 0
    %p143 = por %p141, %p142
    %p144 = scmp.ne.s32.totalorder %s136, %s138
    %p145 = scmp.eq.s32.totalorder %s18, 1
    %p146 = por %p144, %p145
    %p147 = scmp.ne.s32.totalorder %s138, %s139
    %p148 = scmp.eq.s32.totalorder %s18, 0
    %p149 = por %p147, %p148
    %p150 = scmp.ne.s32.totalorder %s138, %s139
    %p151 = scmp.eq.s32.totalorder %s19, 1
    %p152 = por %p150, %p151
    %p154 = scmp.ne.s32.totalorder %s139, %s153
    %p155 = scmp.eq.s32.totalorder %s19, 0
    %p156 = por %p154, %p155
    %s158 = sadd.s32 %s157, 1
    %p161 = scmp.eq.s32.totalorder %s13, 1
    %p162 = scmp.ne.s32.totalorder %s157, %s159
    %p163 = scmp.eq.s32.totalorder %s13, 0
    %p164 = por %p162, %p163
    %p165 = scmp.ne.s32.totalorder %s157, %s159
    %p166 = scmp.eq.s32.totalorder %s18, 1
    %p167 = por %p165, %p166
    %p168 = scmp.ne.s32.totalorder %s159, %s160
    %p169 = scmp.eq.s32.totalorder %s18, 0
    %p170 = por %p168, %p169
    %p171 = scmp.ne.s32.totalorder %s159, %s160
    %p172 = scmp.eq.s32.totalorder %s19, 1
    %p173 = por %p171, %p172
    %p175 = scmp.ne.s32.totalorder %s160, %s174
    %p176 = scmp.eq.s32.totalorder %s19, 0
    %p177 = por %p175, %p176
    %s179 = sadd.s32 %s178, 1
    %p182 = scmp.eq.s32.totalorder %s13, 1
    %p183 = scmp.ne.s32.totalorder %s178, %s180
    %p184 = scmp.eq.s32.totalorder %s13, 0
    %p185 = por %p183, %p184
    %p186 = scmp.ne.s32.totalorder %s178, %s180
    %p187 = scmp.eq.s32.totalorder %s18, 1
    %p188 = por %p186, %p187
    %p189 = scmp.ne.s32.totalorder %s180, %s181
    %p190 = scmp.eq.s32.totalorder %s18, 0
    %p191 = por %p189, %p190
    %p192 = scmp.ne.s32.totalorder %s180, %s181
    %p193 = scmp.eq.s32.totalorder %s19, 1
    %p194 = por %p192, %p193
    %p196 = scmp.ne.s32.totalorder %s181, %s195
    %p197 = scmp.eq.s32.totalorder %s19, 0
    %p198 = por %p196, %p197
    %s199 = ssub.s32 %s20, %s32
    %s200 = ssub.s32 %s21, %s28
    %s201 = sor.u32 %s199, %s200
    %p202 = scmp.eq.s32.totalorder %s201, 0
    %s204 = sadd.s32 %s203, 1
    %s205 = scalar_select %p202, %s203, %s204
    %p208 = pneg %p202
    %p209 = scmp.eq.s32.totalorder %s13, 1
    %p210 = por %p208, %p209
    %p211 = scmp.ne.s32.totalorder %s203, %s206
    %p212 = scmp.eq.s32.totalorder %s13, 0
    %p213 = por %p211, %p212
    %p214 = scmp.ne.s32.totalorder %s203, %s206
    %p215 = scmp.eq.s32.totalorder %s18, 1
    %p216 = por %p214, %p215
    %p217 = scmp.ne.s32.totalorder %s206, %s207
    %p218 = scmp.eq.s32.totalorder %s18, 0
    %p219 = por %p217, %p218
    %p220 = scmp.ne.s32.totalorder %s206, %s207
    %p221 = scmp.eq.s32.totalorder %s19, 1
    %p222 = por %p220, %p221
    %p224 = scmp.ne.s32.totalorder %s207, %s223
    %p225 = scmp.eq.s32.totalorder %s19, 0
    %p226 = por %p224, %p225
    %p227 = scmp.le.s32.totalorder 1, %s13
    %p228 = scmp.lt.s32.totalorder %s13, 3
    %p229 = pnand %p227, %p228
    %p230 = pneg %p229
    // Predicated region
    $region9: #{encoder_forward.26} parent=5 // pred_check
      _
    $region10: #{encoder_forward.26} parent=5 // pred_check_branch
      %232 = sbr.rel (%p229) target = $region12
    $region11: #{encoder_forward.26} parent=5 // pred_region
      %s233 = ssub.s32 %s13, 1
      // Predicated region
      $region13: #{encoder_forward.26} parent=11 // pred_check
        %p234 = pneg %p128
      $region14: #{encoder_forward.26} parent=11 // pred_check_branch
        %236 = sbr.rel (%p234) target = $region16
      $region15: #{encoder_forward.26} parent=11 // pred_region
        _
      $region16: #{encoder_forward.26} parent=11 // pred_fallthru
        _
      // Predicated region
      $region17: #{encoder_forward.26} parent=11 // pred_check
        %p237 = pneg %p149
      $region18: #{encoder_forward.26} parent=11 // pred_check_branch
        %239 = sbr.rel (%p237) target = $region20
      $region19: #{encoder_forward.26} parent=11 // pred_region
        _
      $region20: #{encoder_forward.26} parent=11 // pred_fallthru
        _
      // Predicated region
      $region21: #{encoder_forward.26} parent=11 // pred_check
        %p240 = pneg %p170
      $region22: #{encoder_forward.26} parent=11 // pred_check_branch
        %242 = sbr.rel (%p240) target = $region24
      $region23: #{encoder_forward.26} parent=11 // pred_region
        _
      $region24: #{encoder_forward.26} parent=11 // pred_fallthru
        _
      // Predicated region
      $region25: #{encoder_forward.26} parent=11 // pred_check
        %p243 = pneg %p191
      $region26: #{encoder_forward.26} parent=11 // pred_check_branch
        %245 = sbr.rel (%p243) target = $region28
      $region27: #{encoder_forward.26} parent=11 // pred_region
        _
      $region28: #{encoder_forward.26} parent=11 // pred_fallthru
        _
    $region12: #{encoder_forward.26} parent=5 // pred_fallthru
      _
    %p246 = scmp.lt.s32.totalorder %s13, 2
    // Predicated region
    $region29: #{encoder_forward.26} parent=5 // pred_check
      %p247 = pneg %p246
    $region30: #{encoder_forward.26} parent=5 // pred_check_branch
      %249 = sbr.rel (%p247) target = $region32
    $region31: #{encoder_forward.26} parent=5 // pred_region
      // Predicated region
      $region33: #{encoder_forward.26} parent=31 // pred_check
        %p250 = pneg %p47
      $region34: #{encoder_forward.26} parent=31 // pred_check_branch
        %252 = sbr.rel (%p250) target = $region36
      $region35: #{encoder_forward.26} parent=31 // pred_region
        %p253 = scmp.lt.s32.totalorder %s20, 1
        %s254 = scalar_select %p253, %s20, 1
        %p255 = scmp.lt.s32.totalorder %s21, 0
        %s256 = scalar_select %p255, %s21, 0
        %s257 = sadd.s32 %s256, %s254
        %s258 = smul.addr %s257, 8
        %s259 = scalar_lea.vmem %s0, %s258
      $region36: #{encoder_forward.26} parent=31 // pred_fallthru
        _
      // Predicated region
      $region37: #{encoder_forward.26} parent=31 // pred_check
        %p260 = pneg %p73
      $region38: #{encoder_forward.26} parent=31 // pred_check_branch
        %262 = sbr.rel (%p260) target = $region40
      $region39: #{encoder_forward.26} parent=31 // pred_region
        %p263 = scmp.lt.s32.totalorder %s20, 1
        %s264 = scalar_select %p263, %s20, 1
        %s265 = smul.addr %s264, 8
        %s266 = scalar_lea.vmem %s1, %s265
      $region40: #{encoder_forward.26} parent=31 // pred_fallthru
        _
      // Predicated region
      $region41: #{encoder_forward.26} parent=31 // pred_check
        %p267 = pneg %p101
      $region42: #{encoder_forward.26} parent=31 // pred_check_branch
        %269 = sbr.rel (%p267) target = $region44
      $region43: #{encoder_forward.26} parent=31 // pred_region
        %p270 = scmp.lt.s32.totalorder %s20, 1
        %s271 = scalar_select %p270, %s20, 1
        %p272 = scmp.lt.s32.totalorder %s21, 0
        %s273 = scalar_select %p272, %s21, 0
        %s274 = sadd.s32 %s273, %s271
        %s275 = smul.addr %s274, 8
        %s276 = scalar_lea.vmem %s2, %s275
      $region44: #{encoder_forward.26} parent=31 // pred_fallthru
        _
    $region32: #{encoder_forward.26} parent=5 // pred_fallthru
      _
    %p277 = scmp.le.s32.totalorder 1, %s13
    %p278 = scmp.lt.s32.totalorder %s13, 3
    %p279 = pnand %p277, %p278
    %p280 = pneg %p279
    // Predicated region
    $region45: #{encoder_forward.26} parent=5 // pred_check
      _
    $region46: #{encoder_forward.26} parent=5 // pred_check_branch
      %282 = sbr.rel (%p279) target = $region48
    $region47: #{encoder_forward.26} parent=5 // pred_region
      %s283 = ssub.s32 %s13, 1
      %p284 = scmp.lt.s32.totalorder %s22, 1
      %s285 = scalar_select %p284, %s22, 1
      %p286 = scmp.lt.s32.totalorder %s23, 0
      %s287 = scalar_select %p286, %s23, 0
      %s288 = sadd.s32 %s287, %s285
      %s289 = smul.addr %s288, 8
      %s290 = scalar_lea.vmem %s0, %s289
      %p291 = pneg %p53
      %p292 = pneg %p50
      %p293 = scmp.lt.s32.totalorder %s22, 1
      %s294 = scalar_select %p293, %s22, 1
      %s295 = smul.addr %s294, 8
      %s296 = scalar_lea.vmem %s1, %s295
      %p297 = pneg %p79
      %p298 = pneg %p76
      %p299 = scmp.lt.s32.totalorder %s22, 1
      %s300 = scalar_select %p299, %s22, 1
      %p301 = scmp.lt.s32.totalorder %s23, 0
      %s302 = scalar_select %p301, %s23, 0
      %s303 = sadd.s32 %s302, %s300
      %s304 = smul.addr %s303, 8
      %s305 = scalar_lea.vmem %s2, %s304
      %p306 = pneg %p107
      %p307 = pneg %p104
      %p308 = pneg %p128
      %p309 = pneg %p125
      %p310 = pneg %p149
      %p311 = pneg %p146
      %p312 = pneg %p170
      %p313 = pneg %p167
      %p314 = pneg %p191
      %p315 = pneg %p188
      %p316 = pneg %p219
      %p317 = pneg %p216
      %p318 = scmp.lt.s32.totalorder %s22, 1
      %s319 = scalar_select %p318, %s22, 1
      %p320 = scmp.lt.s32.totalorder %s23, 0
      %s321 = scalar_select %p320, %s23, 0
      %s322 = sadd.s32 %s321, %s319
      %s323 = smul.addr %s322, 8
      %s324 = scalar_lea.vmem %s7, %s323
      %p325 = scmp.lt.s32.totalorder %s22, 1
      %s326 = scalar_select %p325, %s22, 1
      %p327 = scmp.lt.s32.totalorder %s23, 0
      %s328 = scalar_select %p327, %s23, 0
      %s329 = sadd.s32 %s328, %s326
      %s330 = smul.addr %s329, 8
      %s331 = scalar_lea.vmem %s0, %s330
      %p332 = scmp.lt.s32.totalorder %s22, 1
      %s333 = scalar_select %p332, %s22, 1
      %s334 = smul.addr %s333, 8
      %s335 = scalar_lea.vmem %s1, %s334
      %p336 = scmp.lt.s32.totalorder %s22, 1
      %s337 = scalar_select %p336, %s22, 1
      %p338 = scmp.lt.s32.totalorder %s23, 0
      %s339 = scalar_select %p338, %s23, 0
      %s340 = sadd.s32 %s339, %s337
      %s341 = smul.addr %s340, 8
      %s342 = scalar_lea.vmem %s2, %s341
      %p343 = scmp.lt.s32.totalorder %s22, 1
      %s344 = scalar_select %p343, %s22, 1
      %p345 = scmp.lt.s32.totalorder %s23, 0
      %s346 = scalar_select %p345, %s23, 0
      %s347 = sadd.s32 %s346, %s344
      %s348 = smul.addr %s347, 8
      %s349 = scalar_lea.vmem %s7, %s348
      %v351 = vld [vmem:[%s331] sm:$0xff]
      %v352 = vld [vmem:[%s335] sm:$0xff]
      %v353 = vpack.c.bf16 %v351, %v351
      %v354 = vpack.c.bf16 %v352, %v352
      %vm355 = vcmask 64512
      %v357 = vsel %vm355, %v353, 0
      %v360 = vsel %vm355, %v354, 0
      %362 = vmatprep.subr.bf16.mxu0 0
      %363 = vmatpush1.bf16.xpose.msra.mxu0 %v360
      %364 = vmatprep.subr.bf16.mxu0 0
      %365 = vmatpush1.bf16.xpose.msra.mxu0 0
      %366 = vmatprep.subr.bf16.mxu0 0
      %367 = vmatpush1.bf16.xpose.msra.mxu0 0
      %368 = vmatprep.subr.bf16.mxu0 0
      %369 = vmatpush1.bf16.xpose.msra.mxu0 0
      %370 = vmatprep.subr.bf16.mxu0 0
      %371 = vmatpush1.bf16.xpose.msra.mxu0 0
      %372 = vmatprep.subr.bf16.mxu0 0
      %373 = vmatpush1.bf16.xpose.msra.mxu0 0
      %374 = vmatprep.subr.bf16.mxu0 0
      %375 = vmatpush1.bf16.xpose.msra.mxu0 0
      %376 = vmatprep.subr.bf16.mxu0 0
      %377 = vmatpush1.bf16.xpose.msra.mxu0 0
      %378 = vmatprep.subr.bf16.mxu0 0
      %379 = vmatpush1.bf16.xpose.msra.mxu0 0
      %380 = vmatprep.subr.bf16.mxu0 0
      %381 = vmatpush1.bf16.xpose.msra.mxu0 0
      %382 = vmatprep.subr.bf16.mxu0 0
      %383 = vmatpush1.bf16.xpose.msra.mxu0 0
      %384 = vmatprep.subr.bf16.mxu0 0
      %385 = vmatpush1.bf16.xpose.msra.mxu0 0
      %386 = vmatprep.subr.bf16.mxu0 0
      %387 = vmatpush1.bf16.xpose.msra.mxu0 0
      %388 = vmatprep.subr.bf16.mxu0 0
      %389 = vmatpush1.bf16.xpose.msra.mxu0 0
      %390 = vmatprep.subr.bf16.mxu0 0
      %391 = vmatpush1.bf16.xpose.msra.mxu0 0
      %392 = vmatprep.subr.bf16.mxu0 0
      %393 = vmatpush1.bf16.xpose.msra.mxu0 0
      %394 = vmatprep.mubr.bf16.mxu0 0
      %395 = vmatmul.mubr.bf16.gmra.mrb[0].mxu0 %v357
      %v396 = vpop.f32.mrb[0].mxu0
      %v397 = vadd.f32 0.0, %v396
      %v398 = vpop.f32.mrb[0].mxu0
      %v399 = vpop.f32.mrb[0].mxu0
      %v400 = vpop.f32.mrb[0].mxu0
      %401 = vdwg.mxu0
      %v402 = vmul.f32 %v397, 0.35355338
      %v403 = vsel %vm355, %v402, -inf
      %404 = vmax.xlane.f32.xlu0 %v403
      %v405 = vpop.xlane.xlu0 %404
      %v406 = vsub.f32 %v402, %v405
      %v407 = vmul.f32 %v406, 1.442695
      %v408 = vpow.pop %v407
      %v409 = vsel %vm355, %v408, 0.0
      %410 = vadd.xlane.f32.xlu0 %v409
      %v411 = vpop.xlane.xlu0 %410
      %v412 = vrcp.pop %v411
      %v413 = vmul.f32 %v408, %v412
      %v414 = vpack.c.bf16 %v413, %v413
      %416 = vrot.lane.b32.xlu0 %v354, 96
      %v417 = vpop.permute.xlu0 %416
      %v419 = vsel %vm355, %v414, 0
      %vm421 = vcmask 1043456
      %v423 = vsel %vm421, %v417, 0
      %425 = vmatprep.subr.bf16.mxu0 0
      %426 = vmatpush1.bf16.msra.mxu0 %v423
      %427 = vmatprep.subr.bf16.mxu0 0
      %428 = vmatpush1.bf16.msra.mxu0 0
      %429 = vmatprep.subr.bf16.mxu0 0
      %430 = vmatpush1.bf16.msra.mxu0 0
      %431 = vmatprep.subr.bf16.mxu0 0
      %432 = vmatpush1.bf16.msra.mxu0 0
      %433 = vmatprep.subr.bf16.mxu0 0
      %434 = vmatpush1.bf16.msra.mxu0 0
      %435 = vmatprep.subr.bf16.mxu0 0
      %436 = vmatpush1.bf16.msra.mxu0 0
      %437 = vmatprep.subr.bf16.mxu0 0
      %438 = vmatpush1.bf16.msra.mxu0 0
      %439 = vmatprep.subr.bf16.mxu0 0
      %440 = vmatpush1.bf16.msra.mxu0 0
      %441 = vmatprep.subr.bf16.mxu0 0
      %442 = vmatpush1.bf16.msra.mxu0 0
      %443 = vmatprep.subr.bf16.mxu0 0
      %444 = vmatpush1.bf16.msra.mxu0 0
      %445 = vmatprep.subr.bf16.mxu0 0
      %446 = vmatpush1.bf16.msra.mxu0 0
      %447 = vmatprep.subr.bf16.mxu0 0
      %448 = vmatpush1.bf16.msra.mxu0 0
      %449 = vmatprep.subr.bf16.mxu0 0
      %450 = vmatpush1.bf16.msra.mxu0 0
      %451 = vmatprep.subr.bf16.mxu0 0
      %452 = vmatpush1.bf16.msra.mxu0 0
      %453 = vmatprep.subr.bf16.mxu0 0
      %454 = vmatpush1.bf16.msra.mxu0 0
      %455 = vmatprep.subr.bf16.mxu0 0
      %456 = vmatpush1.bf16.msra.mxu0 0
      %457 = vmatprep.mubr.bf16.mxu0 0
      %458 = vmatmul.mubr.bf16.gmra.mrb[0].mxu0 %v419
      %v459 = vpop.f32.mrb[0].mxu0
      %v460 = vadd.f32 0.0, %v459
      %v461 = vpop.f32.mrb[0].mxu0
      %v462 = vpop.f32.mrb[0].mxu0
      %v463 = vpop.f32.mrb[0].mxu0
      %464 = vdwg.mxu0
      %465 = vst.msk [vmem:[#allocation2] sm:$0xff] %vm355, %v460
      %467 = vrot.lane.b32.xlu0 %v353, 120
      %v468 = vpop.permute.xlu0 %467
      %469 = vrot.lane.b32.xlu0 %v354, 120
      %v470 = vpop.permute.xlu0 %469
      %v472 = vsel %vm355, %v468, 0
      %v475 = vsel %vm355, %v470, 0
      %477 = vmatprep.subr.bf16.mxu0 0
      %478 = vmatpush1.bf16.xpose.msra.mxu0 %v475
      %479 = vmatprep.subr.bf16.mxu0 0
      %480 = vmatpush1.bf16.xpose.msra.mxu0 0
      %481 = vmatprep.subr.bf16.mxu0 0
      %482 = vmatpush1.bf16.xpose.msra.mxu0 0
      %483 = vmatprep.subr.bf16.mxu0 0
      %484 = vmatpush1.bf16.xpose.msra.mxu0 0
      %485 = vmatprep.subr.bf16.mxu0 0
      %486 = vmatpush1.bf16.xpose.msra.mxu0 0
      %487 = vmatprep.subr.bf16.mxu0 0
      %488 = vmatpush1.bf16.xpose.msra.mxu0 0
      %489 = vmatprep.subr.bf16.mxu0 0
      %490 = vmatpush1.bf16.xpose.msra.mxu0 0
      %491 = vmatprep.subr.bf16.mxu0 0
      %492 = vmatpush1.bf16.xpose.msra.mxu0 0
      %493 = vmatprep.subr.bf16.mxu0 0
      %494 = vmatpush1.bf16.xpose.msra.mxu0 0
      %495 = vmatprep.subr.bf16.mxu0 0
      %496 = vmatpush1.bf16.xpose.msra.mxu0 0
      %497 = vmatprep.subr.bf16.mxu0 0
      %498 = vmatpush1.bf16.xpose.msra.mxu0 0
      %499 = vmatprep.subr.bf16.mxu0 0
      %500 = vmatpush1.bf16.xpose.msra.mxu0 0
      %501 = vmatprep.subr.bf16.mxu0 0
      %502 = vmatpush1.bf16.xpose.msra.mxu0 0
      %503 = vmatprep.subr.bf16.mxu0 0
      %504 = vmatpush1.bf16.xpose.msra.mxu0 0
      %505 = vmatprep.subr.bf16.mxu0 0
      %506 = vmatpush1.bf16.xpose.msra.mxu0 0
      %507 = vmatprep.subr.bf16.mxu0 0
      %508 = vmatpush1.bf16.xpose.msra.mxu0 0
      %509 = vmatprep.mubr.bf16.mxu0 0
      %510 = vmatmul.mubr.bf16.gmra.mrb[0].mxu0 %v472
      %v511 = vpop.f32.mrb[0].mxu0
      %v512 = vadd.f32 0.0, %v511
      %v513 = vpop.f32.mrb[0].mxu0
      %v514 = vpop.f32.mrb[0].mxu0
      %v515 = vpop.f32.mrb[0].mxu0
      %516 = vdwg.mxu0
      %v517 = vmul.f32 %v512, 0.35355338
      %v518 = vsel %vm355, %v517, -inf
      %519 = vmax.xlane.f32.xlu0 %v518
      %v520 = vpop.xlane.xlu0 %519
      %v521 = vsub.f32 %v517, %v520
      %v522 = vmul.f32 %v521, 1.442695
      %v523 = vpow.pop %v522
      %v524 = vsel %vm355, %v523, 0.0
      %525 = vadd.xlane.f32.xlu0 %v524
      %v526 = vpop.xlane.xlu0 %525
      %v527 = vrcp.pop %v526
      %v528 = vmul.f32 %v523, %v527
      %v529 = vpack.c.bf16 %v528, %v528
      %530 = vrot.lane.b32.xlu0 %v354, 88
      %v531 = vpop.permute.xlu0 %530
      %v533 = vsel %vm355, %v529, 0
      %v536 = vsel %vm421, %v531, 0
      %538 = vmatprep.subr.bf16.mxu0 0
      %539 = vmatpush1.bf16.msra.mxu0 %v536
      %540 = vmatprep.subr.bf16.mxu0 0
      %541 = vmatpush1.bf16.msra.mxu0 0
      %542 = vmatprep.subr.bf16.mxu0 0
      %543 = vmatpush1.bf16.msra.mxu0 0
      %544 = vmatprep.subr.bf16.mxu0 0
      %545 = vmatpush1.bf16.msra.mxu0 0
      %546 = vmatprep.subr.bf16.mxu0 0
      %547 = vmatpush1.bf16.msra.mxu0 0
      %548 = vmatprep.subr.bf16.mxu0 0
      %549 = vmatpush1.bf16.msra.mxu0 0
      %550 = vmatprep.subr.bf16.mxu0 0
      %551 = vmatpush1.bf16.msra.mxu0 0
      %552 = vmatprep.subr.bf16.mxu0 0
      %553 = vmatpush1.bf16.msra.mxu0 0
      %554 = vmatprep.subr.bf16.mxu0 0
      %555 = vmatpush1.bf16.msra.mxu0 0
      %556 = vmatprep.subr.bf16.mxu0 0
      %557 = vmatpush1.bf16.msra.mxu0 0
      %558 = vmatprep.subr.bf16.mxu0 0
      %559 = vmatpush1.bf16.msra.mxu0 0
      %560 = vmatprep.subr.bf16.mxu0 0
      %561 = vmatpush1.bf16.msra.mxu0 0
      %562 = vmatprep.subr.bf16.mxu0 0
      %563 = vmatpush1.bf16.msra.mxu0 0
      %564 = vmatprep.subr.bf16.mxu0 0
      %565 = vmatpush1.bf16.msra.mxu0 0
      %566 = vmatprep.subr.bf16.mxu0 0
      %567 = vmatpush1.bf16.msra.mxu0 0
      %568 = vmatprep.subr.bf16.mxu0 0
      %569 = vmatpush1.bf16.msra.mxu0 0
      %570 = vmatprep.mubr.bf16.mxu0 0
      %571 = vmatmul.mubr.bf16.gmra.mrb[0].mxu0 %v533
      %v572 = vpop.f32.mrb[0].mxu0
      %v573 = vadd.f32 0.0, %v572
      %v574 = vpop.f32.mrb[0].mxu0
      %v575 = vpop.f32.mrb[0].mxu0
      %v576 = vpop.f32.mrb[0].mxu0
      %577 = vdwg.mxu0
      %579 = vrot.lane.b32.xlu0 %v573, 8
      %v580 = vpop.permute.xlu0 %579
      %vm582 = vcmask 130112
      %583 = vst.msk [vmem:[#allocation2] sm:$0xff] %vm582, %v580
      %584 = vrot.lane.b32.xlu0 %v353, 112
      %v585 = vpop.permute.xlu0 %584
      %586 = vrot.lane.b32.xlu0 %v354, 112
      %v587 = vpop.permute.xlu0 %586
      %v589 = vsel %vm355, %v585, 0
      %v592 = vsel %vm355, %v587, 0
      %594 = vmatprep.subr.bf16.mxu0 0
      %595 = vmatpush1.bf16.xpose.msra.mxu0 %v592
      %596 = vmatprep.subr.bf16.mxu0 0
      %597 = vmatpush1.bf16.xpose.msra.mxu0 0
      %598 = vmatprep.subr.bf16.mxu0 0
      %599 = vmatpush1.bf16.xpose.msra.mxu0 0
      %600 = vmatprep.subr.bf16.mxu0 0
      %601 = vmatpush1.bf16.xpose.msra.mxu0 0
      %602 = vmatprep.subr.bf16.mxu0 0
      %603 = vmatpush1.bf16.xpose.msra.mxu0 0
      %604 = vmatprep.subr.bf16.mxu0 0
      %605 = vmatpush1.bf16.xpose.msra.mxu0 0
      %606 = vmatprep.subr.bf16.mxu0 0
      %607 = vmatpush1.bf16.xpose.msra.mxu0 0
      %608 = vmatprep.subr.bf16.mxu0 0
      %609 = vmatpush1.bf16.xpose.msra.mxu0 0
      %610 = vmatprep.subr.bf16.mxu0 0
      %611 = vmatpush1.bf16.xpose.msra.mxu0 0
      %612 = vmatprep.subr.bf16.mxu0 0
      %613 = vmatpush1.bf16.xpose.msra.mxu0 0
      %614 = vmatprep.subr.bf16.mxu0 0
      %615 = vmatpush1.bf16.xpose.msra.mxu0 0
      %616 = vmatprep.subr.bf16.mxu0 0
      %617 = vmatpush1.bf16.xpose.msra.mxu0 0
      %618 = vmatprep.subr.bf16.mxu0 0
      %619 = vmatpush1.bf16.xpose.msra.mxu0 0
      %620 = vmatprep.subr.bf16.mxu0 0
      %621 = vmatpush1.bf16.xpose.msra.mxu0 0
      %622 = vmatprep.subr.bf16.mxu0 0
      %623 = vmatpush1.bf16.xpose.msra.mxu0 0
      %624 = vmatprep.subr.bf16.mxu0 0
      %625 = vmatpush1.bf16.xpose.msra.mxu0 0
      %626 = vmatprep.mubr.bf16.mxu0 0
      %627 = vmatmul.mubr.bf16.gmra.mrb[0].mxu0 %v589
      %v628 = vpop.f32.mrb[0].mxu0
      %v629 = vadd.f32 0.0, %v628
      %v630 = vpop.f32.mrb[0].mxu0
      %v631 = vpop.f32.mrb[0].mxu0
      %v632 = vpop.f32.mrb[0].mxu0
      %633 = vdwg.mxu0
      %v634 = vmul.f32 %v629, 0.35355338
      %v635 = vsel %vm355, %v634, -inf
      %636 = vmax.xlane.f32.xlu0 %v635
      %v637 = vpop.xlane.xlu0 %636
      %v638 = vsub.f32 %v634, %v637
      %v639 = vmul.f32 %v638, 1.442695
      %v640 = vpow.pop %v639
      %v641 = vsel %vm355, %v640, 0.0
      %642 = vadd.xlane.f32.xlu0 %v641
      %v643 = vpop.xlane.xlu0 %642
      %v644 = vrcp.pop %v643
      %v645 = vmul.f32 %v640, %v644
      %v646 = vpack.c.bf16 %v645, %v645
      %647 = vrot.lane.b32.xlu0 %v354, 80
      %v648 = vpop.permute.xlu0 %647
      %v650 = vsel %vm355, %v646, 0
      %v653 = vsel %vm421, %v648, 0
      %655 = vmatprep.subr.bf16.mxu0 0
      %656 = vmatpush1.bf16.msra.mxu0 %v653
      %657 = vmatprep.subr.bf16.mxu0 0
      %658 = vmatpush1.bf16.msra.mxu0 0
      %659 = vmatprep.subr.bf16.mxu0 0
      %660 = vmatpush1.bf16.msra.mxu0 0
      %661 = vmatprep.subr.bf16.mxu0 0
      %662 = vmatpush1.bf16.msra.mxu0 0
      %663 = vmatprep.subr.bf16.mxu0 0
      %664 = vmatpush1.bf16.msra.mxu0 0
      %665 = vmatprep.subr.bf16.mxu0 0
      %666 = vmatpush1.bf16.msra.mxu0 0
      %667 = vmatprep.subr.bf16.mxu0 0
      %668 = vmatpush1.bf16.msra.mxu0 0
      %669 = vmatprep.subr.bf16.mxu0 0
      %670 = vmatpush1.bf16.msra.mxu0 0
      %671 = vmatprep.subr.bf16.mxu0 0
      %672 = vmatpush1.bf16.msra.mxu0 0
      %673 = vmatprep.subr.bf16.mxu0 0
      %674 = vmatpush1.bf16.msra.mxu0 0
      %675 = vmatprep.subr.bf16.mxu0 0
      %676 = vmatpush1.bf16.msra.mxu0 0
      %677 = vmatprep.subr.bf16.mxu0 0
      %678 = vmatpush1.bf16.msra.mxu0 0
      %679 = vmatprep.subr.bf16.mxu0 0
      %680 = vmatpush1.bf16.msra.mxu0 0
      %681 = vmatprep.subr.bf16.mxu0 0
      %682 = vmatpush1.bf16.msra.mxu0 0
      %683 = vmatprep.subr.bf16.mxu0 0
      %684 = vmatpush1.bf16.msra.mxu0 0
      %685 = vmatprep.subr.bf16.mxu0 0
      %686 = vmatpush1.bf16.msra.mxu0 0
      %687 = vmatprep.mubr.bf16.mxu0 0
      %688 = vmatmul.mubr.bf16.gmra.mrb[0].mxu0 %v650
      %v689 = vpop.f32.mrb[0].mxu0
      %v690 = vadd.f32 0.0, %v689
      %v691 = vpop.f32.mrb[0].mxu0
      %v692 = vpop.f32.mrb[0].mxu0
      %v693 = vpop.f32.mrb[0].mxu0
      %694 = vdwg.mxu0
      %696 = vrot.lane.b32.xlu0 %v690, 16
      %v697 = vpop.permute.xlu0 %696
      %vm699 = vcmask 195712
      %700 = vst.msk [vmem:[#allocation2] sm:$0xff] %vm699, %v697
      %701 = vrot.lane.b32.xlu0 %v353, 104
      %v702 = vpop.permute.xlu0 %701
      %703 = vrot.lane.b32.xlu0 %v354, 104
      %v704 = vpop.permute.xlu0 %703
      %v706 = vsel %vm355, %v702, 0
      %v709 = vsel %vm355, %v704, 0
      %711 = vmatprep.subr.bf16.mxu0 0
      %712 = vmatpush1.bf16.xpose.msra.mxu0 %v709
      %713 = vmatprep.subr.bf16.mxu0 0
      %714 = vmatpush1.bf16.xpose.msra.mxu0 0
      %715 = vmatprep.subr.bf16.mxu0 0
      %716 = vmatpush1.bf16.xpose.msra.mxu0 0
      %717 = vmatprep.subr.bf16.mxu0 0
      %718 = vmatpush1.bf16.xpose.msra.mxu0 0
      %719 = vmatprep.subr.bf16.mxu0 0
      %720 = vmatpush1.bf16.xpose.msra.mxu0 0
      %721 = vmatprep.subr.bf16.mxu0 0
      %722 = vmatpush1.bf16.xpose.msra.mxu0 0
      %723 = vmatprep.subr.bf16.mxu0 0
      %724 = vmatpush1.bf16.xpose.msra.mxu0 0
      %725 = vmatprep.subr.bf16.mxu0 0
      %726 = vmatpush1.bf16.xpose.msra.mxu0 0
      %727 = vmatprep.subr.bf16.mxu0 0
      %728 = vmatpush1.bf16.xpose.msra.mxu0 0
      %729 = vmatprep.subr.bf16.mxu0 0
      %730 = vmatpush1.bf16.xpose.msra.mxu0 0
      %731 = vmatprep.subr.bf16.mxu0 0
      %732 = vmatpush1.bf16.xpose.msra.mxu0 0
      %733 = vmatprep.subr.bf16.mxu0 0
      %734 = vmatpush1.bf16.xpose.msra.mxu0 0
      %735 = vmatprep.subr.bf16.mxu0 0
      %736 = vmatpush1.bf16.xpose.msra.mxu0 0
      %737 = vmatprep.subr.bf16.mxu0 0
      %738 = vmatpush1.bf16.xpose.msra.mxu0 0
      %739 = vmatprep.subr.bf16.mxu0 0
      %740 = vmatpush1.bf16.xpose.msra.mxu0 0
      %741 = vmatprep.subr.bf16.mxu0 0
      %742 = vmatpush1.bf16.xpose.msra.mxu0 0
      %743 = vmatprep.mubr.bf16.mxu0 0
      %744 = vmatmul.mubr.bf16.gmra.mrb[0].mxu0 %v706
      %v745 = vpop.f32.mrb[0].mxu0
      %v746 = vadd.f32 0.0, %v745
      %v747 = vpop.f32.mrb[0].mxu0
      %v748 = vpop.f32.mrb[0].mxu0
      %v749 = vpop.f32.mrb[0].mxu0
      %750 = vdwg.mxu0
      %v751 = vmul.f32 %v746, 0.35355338
      %v752 = vsel %vm355, %v751, -inf
      %753 = vmax.xlane.f32.xlu0 %v752
      %v754 = vpop.xlane.xlu0 %753
      %v755 = vsub.f32 %v751, %v754
      %v756 = vmul.f32 %v755, 1.442695
      %v757 = vpow.pop %v756
      %v758 = vsel %vm355, %v757, 0.0
      %759 = vadd.xlane.f32.xlu0 %v758
      %v760 = vpop.xlane.xlu0 %759
      %v761 = vrcp.pop %v760
      %v762 = vmul.f32 %v757, %v761
      %v763 = vpack.c.bf16 %v762, %v762
      %764 = vrot.lane.b32.xlu0 %v354, 72
      %v765 = vpop.permute.xlu0 %764
      %v767 = vsel %vm355, %v763, 0
      %v770 = vsel %vm421, %v765, 0
      %772 = vmatprep.subr.bf16.mxu0 0
      %773 = vmatpush1.bf16.msra.mxu0 %v770
      %774 = vmatprep.subr.bf16.mxu0 0
      %775 = vmatpush1.bf16.msra.mxu0 0
      %776 = vmatprep.subr.bf16.mxu0 0
      %777 = vmatpush1.bf16.msra.mxu0 0
      %778 = vmatprep.subr.bf16.mxu0 0
      %779 = vmatpush1.bf16.msra.mxu0 0
      %780 = vmatprep.subr.bf16.mxu0 0
      %781 = vmatpush1.bf16.msra.mxu0 0
      %782 = vmatprep.subr.bf16.mxu0 0
      %783 = vmatpush1.bf16.msra.mxu0 0
      %784 = vmatprep.subr.bf16.mxu0 0
      %785 = vmatpush1.bf16.msra.mxu0 0
      %786 = vmatprep.subr.bf16.mxu0 0
      %787 = vmatpush1.bf16.msra.mxu0 0
      %788 = vmatprep.subr.bf16.mxu0 0
      %789 = vmatpush1.bf16.msra.mxu0 0
      %790 = vmatprep.subr.bf16.mxu0 0
      %791 = vmatpush1.bf16.msra.mxu0 0
      %792 = vmatprep.subr.bf16.mxu0 0
      %793 = vmatpush1.bf16.msra.mxu0 0
      %794 = vmatprep.subr.bf16.mxu0 0
      %795 = vmatpush1.bf16.msra.mxu0 0
      %796 = vmatprep.subr.bf16.mxu0 0
      %797 = vmatpush1.bf16.msra.mxu0 0
      %798 = vmatprep.subr.bf16.mxu0 0
      %799 = vmatpush1.bf16.msra.mxu0 0
      %800 = vmatprep.subr.bf16.mxu0 0
      %801 = vmatpush1.bf16.msra.mxu0 0
      %802 = vmatprep.subr.bf16.mxu0 0
      %803 = vmatpush1.bf16.msra.mxu0 0
      %804 = vmatprep.mubr.bf16.mxu0 0
      %805 = vmatmul.mubr.bf16.gmra.mrb[0].mxu0 %v767
      %v806 = vpop.f32.mrb[0].mxu0
      %v807 = vadd.f32 0.0, %v806
      %v808 = vpop.f32.mrb[0].mxu0
      %v809 = vpop.f32.mrb[0].mxu0
      %v810 = vpop.f32.mrb[0].mxu0
      %811 = vdwg.mxu0
      %813 = vrot.lane.b32.xlu0 %v807, 24
      %v814 = vpop.permute.xlu0 %813
      %vm816 = vcmask 261312
      %817 = vst.msk [vmem:[#allocation2] sm:$0xff] %vm816, %v814
      %v818 = vld [vmem:[#allocation2] sm:$0xff]
      %v819 = vld [vmem:[%s3] sm:$0xf]
      %v820 = vld [vmem:[%s3 + $0x4] sm:$0xf]
      %v821 = vld [vmem:[%s3 + $0x8] sm:$0xf]
      %v822 = vld [vmem:[%s3 + $0xc] sm:$0xf]
      %v823 = vpack.c.bf16 %v818, %v818
      %v824 = vld [vmem:[%s4] sm:$0x1]
      %v826 = vlaneseq
      %v827 = vshrl.u32 %v826, 7
      %v828 = vsub.s32 0, %v827
      %v829 = vrot.slane %v824, %v828
      %v835 = vunpack.c.l.b16 %v819
      %v836 = vunpack.c.l.b16 %v820
      %v837 = vunpack.c.l.b16 %v821
      %v838 = vunpack.c.l.b16 %v822
      %v839 = vpack.c.b16 %v836, %v835
      %v840 = vpack.c.b16 %v838, %v837
      %vm843 = vcmask 261120
      %v845 = vsel %vm843, %v823, 0
      %847 = vmatprep.subr.bf16.mxu0 0
      %848 = vmatpush1.bf16.msra.mxu0 %v839
      %849 = vmatprep.subr.bf16.mxu0 0
      %850 = vmatpush1.bf16.msra.mxu0 %v840
      %851 = vmatprep.subr.bf16.mxu0 0
      %852 = vmatpush1.bf16.msra.mxu0 0
      %853 = vmatprep.subr.bf16.mxu0 0
      %854 = vmatpush1.bf16.msra.mxu0 0
      %855 = vmatprep.subr.bf16.mxu0 0
      %856 = vmatpush1.bf16.msra.mxu0 0
      %857 = vmatprep.subr.bf16.mxu0 0
      %858 = vmatpush1.bf16.msra.mxu0 0
      %859 = vmatprep.subr.bf16.mxu0 0
      %860 = vmatpush1.bf16.msra.mxu0 0
      %861 = vmatprep.subr.bf16.mxu0 0
      %862 = vmatpush1.bf16.msra.mxu0 0
      %863 = vmatprep.subr.bf16.mxu0 0
      %864 = vmatpush1.bf16.msra.mxu0 0
      %865 = vmatprep.subr.bf16.mxu0 0
      %866 = vmatpush1.bf16.msra.mxu0 0
      %867 = vmatprep.subr.bf16.mxu0 0
      %868 = vmatpush1.bf16.msra.mxu0 0
      %869 = vmatprep.subr.bf16.mxu0 0
      %870 = vmatpush1.bf16.msra.mxu0 0
      %871 = vmatprep.subr.bf16.mxu0 0
      %872 = vmatpush1.bf16.msra.mxu0 0
      %873 = vmatprep.subr.bf16.mxu0 0
      %874 = vmatpush1.bf16.msra.mxu0 0
      %875 = vmatprep.subr.bf16.mxu0 0
      %876 = vmatpush1.bf16.msra.mxu0 0
      %877 = vmatprep.subr.bf16.mxu0 0
      %878 = vmatpush1.bf16.msra.mxu0 0
      %879 = vmatprep.mubr.bf16.mxu0 0
      %880 = vmatmul.mubr.bf16.gmra.mrb[0].mxu0 %v845
      %v881 = vpop.f32.mrb[0].mxu0
      %v882 = vadd.f32 %v829, %v881
      %v883 = vpop.f32.mrb[0].mxu0
      %v884 = vpop.f32.mrb[0].mxu0
      %v885 = vpop.f32.mrb[0].mxu0
      %886 = vdwg.mxu0
      %v887 = vld [vmem:[%s342] sm:$0xff]
      %v888 = vadd.f32 %v882, %v887
      %v889 = vld [vmem:[%s5] sm:$0x1]
      %v890 = vld [vmem:[%s6] sm:$0x1]
      %v891 = vsel %vm843, %v888, 0.0
      %892 = vadd.xlane.f32.xlu0 %v891
      %v893 = vpop.xlane.xlu0 %892
      %v894 = vrcp.pop 32.0
      %v895 = vmul.f32 %v893, %v894
      %v896 = vsub.f32 %v888, %v895
      %v897 = vmul.f32 %v896, %v896
      %v898 = vsel %vm843, %v897, 0.0
      %899 = vadd.xlane.f32.xlu0 %v898
      %v900 = vpop.xlane.xlu0 %899
      %v901 = vmul.f32 %v900, %v894
      %v902 = vadd.f32 %v901, 1e-05
      %v903 = vrsqrt.pop %v902
      %v904 = vmul.f32 %v896, %v903
      %v906 = vlaneseq
      %v907 = vshrl.u32 %v906, 7
      %v908 = vsub.s32 0, %v907
      %v909 = vrot.slane %v889, %v908
      %v911 = vmul.f32 %v904, %v909
      %v913 = vlaneseq
      %v914 = vshrl.u32 %v913, 7
      %v915 = vsub.s32 0, %v914
      %v916 = vrot.slane %v890, %v915
      %v918 = vadd.f32 %v911, %v916
      %919 = vst.msk [vmem:[%s349] sm:$0xff] %vm843, %v918
      %p920 = scmp.lt.s32.totalorder %s22, 1
      %s921 = scalar_select %p920, %s22, 1
      %p922 = scmp.lt.s32.totalorder %s23, 0
      %s923 = scalar_select %p922, %s23, 0
      %s924 = sadd.s32 %s923, %s921
      %s925 = smul.addr %s924, 8
      %s926 = scalar_lea.vmem %s7, %s925
      // Predicated region
      $region49: #{encoder_forward.26} parent=47 // pred_check
        %p927 = pneg %p216
      $region50: #{encoder_forward.26} parent=47 // pred_check_branch
        %929 = sbr.rel (%p927) target = $region52
      $region51: #{encoder_forward.26} parent=47 // pred_region
        _
      $region52: #{encoder_forward.26} parent=47 // pred_fallthru
        _
    $region48: #{encoder_forward.26} parent=5 // pred_fallthru
      _
    %p930 = scmp.le.s32.totalorder 2, %s13
    // Predicated region
    $region53: #{encoder_forward.26} parent=5 // pred_check
      %p931 = pneg %p930
    $region54: #{encoder_forward.26} parent=5 // pred_check_branch
      %933 = sbr.rel (%p931) target = $region56
    $region55: #{encoder_forward.26} parent=5 // pred_region
      %s934 = ssub.s32 %s13, 2
      // Predicated region
      $region57: #{encoder_forward.26} parent=55 // pred_check
        %p935 = pneg %p222
      $region58: #{encoder_forward.26} parent=55 // pred_check_branch
        %937 = sbr.rel (%p935) target = $region60
      $region59: #{encoder_forward.26} parent=55 // pred_region
        %p938 = scmp.lt.s32.totalorder %s24, 1
        %s939 = scalar_select %p938, %s24, 1
        %p940 = scmp.lt.s32.totalorder %s25, 0
        %s941 = scalar_select %p940, %s25, 0
        %s942 = sadd.s32 %s941, %s939
        %s943 = smul.addr %s942, 8
        %s944 = scalar_lea.vmem %s7, %s943
      $region60: #{encoder_forward.26} parent=55 // pred_fallthru
        _
    $region56: #{encoder_forward.26} parent=5 // pred_fallthru
      _
  $region6: #{encoder_forward.26} parent=0 // loop_footer
    %s17 = sadd.s32 1, %s13
  $region7: #{encoder_forward.26} parent=0 // loop_footer_branch
    %12 = sbr.rel target = $region3
  $region8: #{encoder_forward.26} parent=0 // loop_exit
    _

// kernel: encoder_forward.37
$region0: #{encoder_forward.37}
  #allocation0 [shape = 'u32[]', space=smem, size = 0x4, offset = 0x4, fixed_abs, tag = 'smem constant byte address 0x4 - core index']
  #allocation1 [shape = 'u32[144,128]{1,0:T(1,128)}', space=vmem, size = 0x12000, scoped, tag = 'internal scratch']
  #allocation2 [shape = 'f32[8,32]{1,0:T(8,128)}', space=vmem, size = 0x1000, scoped, tag = 'scratch operand']
  %s0 = inlined_call_operand.vmem [shape: f32[2,8,32], index: 0, kind: input, shape index: {}]
  %s1 = inlined_call_operand.vmem [shape: f32[2,8,64], index: 1, kind: input, shape index: {}]
  %s2 = inlined_call_operand.vmem [shape: bf16[32,32], index: 2, kind: input, shape index: {}]
  %s3 = inlined_call_operand.vmem [shape: f32[1,32], index: 3, kind: input, shape index: {}]
  %s4 = inlined_call_operand.vmem [shape: f32[2,8,32], index: 4, kind: output, shape index: {}]
  %s5 = sld [smem:[#allocation0]]
  $region49: #{encoder_forward.37} parent=0
    _
  %s7 = ssub.s32 1, %s5
  %s8 = scalar_select 0, %s7, %s5
  loop: start=0, step=1, limit=4
  $region2: #{encoder_forward.37} parent=0 // loop_pre_header
    _
  $region3: #{encoder_forward.37} parent=0 // loop_header
    %s10 = sphi 0, %s14
    %p11 = scmp.ge.s32.totalorder %s10, 4
    %s17 = sphi 0, %s29
    %s18 = sphi 0, %s25
    %s19 = sphi 0, %s17
    %s20 = sphi 0, %s18
    %s21 = sphi 0, %s19
    %s22 = sphi 0, %s20
    %s34 = sphi 0, %s36
    %s37 = sphi 0, %s34
    %s38 = sphi 0, %s37
    %s54 = sphi 0, %s38
    %s60 = sphi 0, %s62
    %s63 = sphi 0, %s60
    %s64 = sphi 0, %s63
    %s80 = sphi 0, %s64
    %s84 = sphi 0, %s84
    %s86 = sphi 0, %s84
    %s87 = sphi 0, %s86
    %s101 = sphi 0, %s87
    %s105 = sphi 0, %s105
    %s107 = sphi 0, %s105
    %s108 = sphi 0, %s107
    %s122 = sphi 0, %s108
    %s130 = sphi 0, %s132
    %s133 = sphi 0, %s130
    %s134 = sphi 0, %s133
    %s150 = sphi 0, %s134
  $region4: #{encoder_forward.37} parent=0 // loop_header_branch
    %13 = sbr.rel (%p11) target = $region8
  $region5: #{encoder_forward.37} parent=0 // loop_body
    %s15 = ssub.s32 %s10, 1
    %s16 = ssub.s32 %s10, 2
    %s23 = sadd.s32 1, %s18
    %p24 = scmp.ge.s32.totalorder %s23, 1
    %s25 = scalar_select %p24, 0, %s23
    %s26 = sadd.s32 1, %s17
    %s27 = scalar_select %p24, %s26, %s17
    %p28 = scmp.ge.s32.totalorder %s27, 2
    %s29 = scalar_select %p28, 0, %s27
    %s30 = ssub.s32 %s17, %s29
    %s31 = ssub.s32 %s18, %s25
    %s32 = sor.u32 %s30, %s31
    %p33 = scmp.eq.s32.totalorder %s32, 0
    %s35 = sadd.s32 %s34, 1
    %s36 = scalar_select %p33, %s34, %s35
    %p39 = pneg %p33
    %p40 = scmp.eq.s32.totalorder %s10, 1
    %p41 = por %p39, %p40
    %p42 = scmp.ne.s32.totalorder %s34, %s37
    %p43 = scmp.eq.s32.totalorder %s10, 0
    %p44 = por %p42, %p43
    %p45 = scmp.ne.s32.totalorder %s34, %s37
    %p46 = scmp.eq.s32.totalorder %s15, 1
    %p47 = por %p45, %p46
    %p48 = scmp.ne.s32.totalorder %s37, %s38
    %p49 = scmp.eq.s32.totalorder %s15, 0
    %p50 = por %p48, %p49
    %p51 = scmp.ne.s32.totalorder %s37, %s38
    %p52 = scmp.eq.s32.totalorder %s16, 1
    %p53 = por %p51, %p52
    %p55 = scmp.ne.s32.totalorder %s38, %s54
    %p56 = scmp.eq.s32.totalorder %s16, 0
    %p57 = por %p55, %p56
    %s58 = ssub.s32 %s17, %s29
    %p59 = scmp.eq.s32.totalorder %s58, 0
    %s61 = sadd.s32 %s60, 1
    %s62 = scalar_select %p59, %s60, %s61
    %p65 = pneg %p59
    %p66 = scmp.eq.s32.totalorder %s10, 1
    %p67 = por %p65, %p66
    %p68 = scmp.ne.s32.totalorder %s60, %s63
    %p69 = scmp.eq.s32.totalorder %s10, 0
    %p70 = por %p68, %p69
    %p71 = scmp.ne.s32.totalorder %s60, %s63
    %p72 = scmp.eq.s32.totalorder %s15, 1
    %p73 = por %p71, %p72
    %p74 = scmp.ne.s32.totalorder %s63, %s64
    %p75 = scmp.eq.s32.totalorder %s15, 0
    %p76 = por %p74, %p75
    %p77 = scmp.ne.s32.totalorder %s63, %s64
    %p78 = scmp.eq.s32.totalorder %s16, 1
    %p79 = por %p77, %p78
    %p81 = scmp.ne.s32.totalorder %s64, %s80
    %p82 = scmp.eq.s32.totalorder %s16, 0
    %p83 = por %p81, %p82
    %s85 = sadd.s32 %s84, 1
    %p88 = scmp.eq.s32.totalorder %s10, 1
    %p89 = scmp.ne.s32.totalorder %s84, %s86
    %p90 = scmp.eq.s32.totalorder %s10, 0
    %p91 = por %p89, %p90
    %p92 = scmp.ne.s32.totalorder %s84, %s86
    %p93 = scmp.eq.s32.totalorder %s15, 1
    %p94 = por %p92, %p93
    %p95 = scmp.ne.s32.totalorder %s86, %s87
    %p96 = scmp.eq.s32.totalorder %s15, 0
    %p97 = por %p95, %p96
    %p98 = scmp.ne.s32.totalorder %s86, %s87
    %p99 = scmp.eq.s32.totalorder %s16, 1
    %p100 = por %p98, %p99
    %p102 = scmp.ne.s32.totalorder %s87, %s101
    %p103 = scmp.eq.s32.totalorder %s16, 0
    %p104 = por %p102, %p103
    %s106 = sadd.s32 %s105, 1
    %p109 = scmp.eq.s32.totalorder %s10, 1
    %p110 = scmp.ne.s32.totalorder %s105, %s107
    %p111 = scmp.eq.s32.totalorder %s10, 0
    %p112 = por %p110, %p111
    %p113 = scmp.ne.s32.totalorder %s105, %s107
    %p114 = scmp.eq.s32.totalorder %s15, 1
    %p115 = por %p113, %p114
    %p116 = scmp.ne.s32.totalorder %s107, %s108
    %p117 = scmp.eq.s32.totalorder %s15, 0
    %p118 = por %p116, %p117
    %p119 = scmp.ne.s32.totalorder %s107, %s108
    %p120 = scmp.eq.s32.totalorder %s16, 1
    %p121 = por %p119, %p120
    %p123 = scmp.ne.s32.totalorder %s108, %s122
    %p124 = scmp.eq.s32.totalorder %s16, 0
    %p125 = por %p123, %p124
    %s126 = ssub.s32 %s17, %s29
    %s127 = ssub.s32 %s18, %s25
    %s128 = sor.u32 %s126, %s127
    %p129 = scmp.eq.s32.totalorder %s128, 0
    %s131 = sadd.s32 %s130, 1
    %s132 = scalar_select %p129, %s130, %s131
    %p135 = pneg %p129
    %p136 = scmp.eq.s32.totalorder %s10, 1
    %p137 = por %p135, %p136
    %p138 = scmp.ne.s32.totalorder %s130, %s133
    %p139 = scmp.eq.s32.totalorder %s10, 0
    %p140 = por %p138, %p139
    %p141 = scmp.ne.s32.totalorder %s130, %s133
    %p142 = scmp.eq.s32.totalorder %s15, 1
    %p143 = por %p141, %p142
    %p144 = scmp.ne.s32.totalorder %s133, %s134
    %p145 = scmp.eq.s32.totalorder %s15, 0
    %p146 = por %p144, %p145
    %p147 = scmp.ne.s32.totalorder %s133, %s134
    %p148 = scmp.eq.s32.totalorder %s16, 1
    %p149 = por %p147, %p148
    %p151 = scmp.ne.s32.totalorder %s134, %s150
    %p152 = scmp.eq.s32.totalorder %s16, 0
    %p153 = por %p151, %p152
    %p154 = scmp.le.s32.totalorder 1, %s10
    %p155 = scmp.lt.s32.totalorder %s10, 3
    %p156 = pnand %p154, %p155
    %p157 = pneg %p156
    // Predicated region
    $region9: #{encoder_forward.37} parent=5 // pred_check
      _
    $region10: #{encoder_forward.37} parent=5 // pred_check_branch
      %159 = sbr.rel (%p156) target = $region12
    $region11: #{encoder_forward.37} parent=5 // pred_region
      %s160 = ssub.s32 %s10, 1
      // Predicated region
      $region13: #{encoder_forward.37} parent=11 // pred_check
        %p161 = pneg %p97
      $region14: #{encoder_forward.37} parent=11 // pred_check_branch
        %163 = sbr.rel (%p161) target = $region16
      $region15: #{encoder_forward.37} parent=11 // pred_region
        _
      $region16: #{encoder_forward.37} parent=11 // pred_fallthru
        _
      // Predicated region
      $region17: #{encoder_forward.37} parent=11 // pred_check
        %p164 = pneg %p118
      $region18: #{encoder_forward.37} parent=11 // pred_check_branch
        %166 = sbr.rel (%p164) target = $region20
      $region19: #{encoder_forward.37} parent=11 // pred_region
        _
      $region20: #{encoder_forward.37} parent=11 // pred_fallthru
        _
    $region12: #{encoder_forward.37} parent=5 // pred_fallthru
      _
    %p167 = scmp.lt.s32.totalorder %s10, 2
    // Predicated region
    $region21: #{encoder_forward.37} parent=5 // pred_check
      %p168 = pneg %p167
    $region22: #{encoder_forward.37} parent=5 // pred_check_branch
      %170 = sbr.rel (%p168) target = $region24
    $region23: #{encoder_forward.37} parent=5 // pred_region
      // Predicated region
      $region25: #{encoder_forward.37} parent=23 // pred_check
        %p171 = pneg %p44
      $region26: #{encoder_forward.37} parent=23 // pred_check_branch
        %173 = sbr.rel (%p171) target = $region28
      $region27: #{encoder_forward.37} parent=23 // pred_region
        %p174 = scmp.lt.s32.totalorder %s17, 1
        %s175 = scalar_select %p174, %s17, 1
        %p176 = scmp.lt.s32.totalorder %s18, 0
        %s177 = scalar_select %p176, %s18, 0
        %s178 = sadd.s32 %s177, %s175
        %s179 = smul.addr %s178, 8
        %s180 = scalar_lea.vmem %s0, %s179
      $region28: #{encoder_forward.37} parent=23 // pred_fallthru
        _
      // Predicated region
      $region29: #{encoder_forward.37} parent=23 // pred_check
        %p181 = pneg %p70
      $region30: #{encoder_forward.37} parent=23 // pred_check_branch
        %183 = sbr.rel (%p181) target = $region32
      $region31: #{encoder_forward.37} parent=23 // pred_region
        %p184 = scmp.lt.s32.totalorder %s17, 1
        %s185 = scalar_select %p184, %s17, 1
        %s186 = smul.addr %s185, 8
        %s187 = scalar_lea.vmem %s1, %s186
      $region32: #{encoder_forward.37} parent=23 // pred_fallthru
        _
    $region24: #{encoder_forward.37} parent=5 // pred_fallthru
      _
    %p188 = scmp.le.s32.totalorder 1, %s10
    %p189 = scmp.lt.s32.totalorder %s10, 3
    %p190 = pnand %p188, %p189
    %p191 = pneg %p190
    // Predicated region
    $region33: #{encoder_forward.37} parent=5 // pred_check
      _
    $region34: #{encoder_forward.37} parent=5 // pred_check_branch
      %193 = sbr.rel (%p190) target = $region36
    $region35: #{encoder_forward.37} parent=5 // pred_region
      %s194 = ssub.s32 %s10, 1
      %p195 = scmp.lt.s32.totalorder %s19, 1
      %s196 = scalar_select %p195, %s19, 1
      %p197 = scmp.lt.s32.totalorder %s20, 0
      %s198 = scalar_select %p197, %s20, 0
      %s199 = sadd.s32 %s198, %s196
      %s200 = smul.addr %s199, 8
      %s201 = scalar_lea.vmem %s0, %s200
      %p202 = pneg %p50
      %p203 = pneg %p47
      %p204 = scmp.lt.s32.totalorder %s19, 1
      %s205 = scalar_select %p204, %s19, 1
      %s206 = smul.addr %s205, 8
      %s207 = scalar_lea.vmem %s1, %s206
      %p208 = pneg %p76
      %p209 = pneg %p73
      %p210 = pneg %p97
      %p211 = pneg %p94
      %p212 = pneg %p118
      %p213 = pneg %p115
      %p214 = pneg %p146
      %p215 = pneg %p143
      %p216 = scmp.lt.s32.totalorder %s19, 1
      %s217 = scalar_select %p216, %s19, 1
      %p218 = scmp.lt.s32.totalorder %s20, 0
      %s219 = scalar_select %p218, %s20, 0
      %s220 = sadd.s32 %s219, %s217
      %s221 = smul.addr %s220, 8
      %s222 = scalar_lea.vmem %s4, %s221
      %p223 = scmp.lt.s32.totalorder %s19, 1
      %s224 = scalar_select %p223, %s19, 1
      %p225 = scmp.lt.s32.totalorder %s20, 0
      %s226 = scalar_select %p225, %s20, 0
      %s227 = sadd.s32 %s226, %s224
      %s228 = smul.addr %s227, 8
      %s229 = scalar_lea.vmem %s0, %s228
      %p230 = scmp.lt.s32.totalorder %s19, 1
      %s231 = scalar_select %p230, %s19, 1
      %s232 = smul.addr %s231, 8
      %s233 = scalar_lea.vmem %s1, %s232
      %p234 = scmp.lt.s32.totalorder %s19, 1
      %s235 = scalar_select %p234, %s19, 1
      %p236 = scmp.lt.s32.totalorder %s20, 0
      %s237 = scalar_select %p236, %s20, 0
      %s238 = sadd.s32 %s237, %s235
      %s239 = smul.addr %s238, 8
      %s240 = scalar_lea.vmem %s4, %s239
      %v242 = vld [vmem:[%s229] sm:$0xff]
      %v243 = vld [vmem:[%s233] sm:$0xff]
      %v244 = vpack.c.bf16 %v242, %v242
      %v245 = vpack.c.bf16 %v243, %v243
      %vm246 = vcmask 64512
      %v248 = vsel %vm246, %v244, 0
      %v251 = vsel %vm246, %v245, 0
      %253 = vmatprep.subr.bf16.mxu0 0
      %254 = vmatpush1.bf16.xpose.msra.mxu0 %v251
      %255 = vmatprep.subr.bf16.mxu0 0
      %256 = vmatpush1.bf16.xpose.msra.mxu0 0
      %257 = vmatprep.subr.bf16.mxu0 0
      %258 = vmatpush1.bf16.xpose.msra.mxu0 0
      %259 = vmatprep.subr.bf16.mxu0 0
      %260 = vmatpush1.bf16.xpose.msra.mxu0 0
      %261 = vmatprep.subr.bf16.mxu0 0
      %262 = vmatpush1.bf16.xpose.msra.mxu0 0
      %263 = vmatprep.subr.bf16.mxu0 0
      %264 = vmatpush1.bf16.xpose.msra.mxu0 0
      %265 = vmatprep.subr.bf16.mxu0 0
      %266 = vmatpush1.bf16.xpose.msra.mxu0 0
      %267 = vmatprep.subr.bf16.mxu0 0
      %268 = vmatpush1.bf16.xpose.msra.mxu0 0
      %269 = vmatprep.subr.bf16.mxu0 0
      %270 = vmatpush1.bf16.xpose.msra.mxu0 0
      %271 = vmatprep.subr.bf16.mxu0 0
      %272 = vmatpush1.bf16.xpose.msra.mxu0 0
      %273 = vmatprep.subr.bf16.mxu0 0
      %274 = vmatpush1.bf16.xpose.msra.mxu0 0
      %275 = vmatprep.subr.bf16.mxu0 0
      %276 = vmatpush1.bf16.xpose.msra.mxu0 0
      %277 = vmatprep.subr.bf16.mxu0 0
      %278 = vmatpush1.bf16.xpose.msra.mxu0 0
      %279 = vmatprep.subr.bf16.mxu0 0
      %280 = vmatpush1.bf16.xpose.msra.mxu0 0
      %281 = vmatprep.subr.bf16.mxu0 0
      %282 = vmatpush1.bf16.xpose.msra.mxu0 0
      %283 = vmatprep.subr.bf16.mxu0 0
      %284 = vmatpush1.bf16.xpose.msra.mxu0 0
      %285 = vmatprep.mubr.bf16.mxu0 0
      %286 = vmatmul.mubr.bf16.gmra.mrb[0].mxu0 %v248
      %v287 = vpop.f32.mrb[0].mxu0
      %v288 = vadd.f32 0.0, %v287
      %v289 = vpop.f32.mrb[0].mxu0
      %v290 = vpop.f32.mrb[0].mxu0
      %v291 = vpop.f32.mrb[0].mxu0
      %292 = vdwg.mxu0
      %v293 = vmul.f32 %v288, 0.35355338
      %v294 = vsel %vm246, %v293, -inf
      %295 = vmax.xlane.f32.xlu0 %v294
      %v296 = vpop.xlane.xlu0 %295
      %v297 = vsub.f32 %v293, %v296
      %v298 = vmul.f32 %v297, 1.442695
      %v299 = vpow.pop %v298
      %v300 = vsel %vm246, %v299, 0.0
      %301 = vadd.xlane.f32.xlu0 %v300
      %v302 = vpop.xlane.xlu0 %301
      %v303 = vrcp.pop %v302
      %v304 = vmul.f32 %v299, %v303
      %v305 = vpack.c.bf16 %v304, %v304
      %307 = vrot.lane.b32.xlu0 %v245, 96
      %v308 = vpop.permute.xlu0 %307
      %v310 = vsel %vm246, %v305, 0
      %vm312 = vcmask 1043456
      %v314 = vsel %vm312, %v308, 0
      %316 = vmatprep.subr.bf16.mxu0 0
      %317 = vmatpush1.bf16.msra.mxu0 %v314
      %318 = vmatprep.subr.bf16.mxu0 0
      %319 = vmatpush1.bf16.msra.mxu0 0
      %320 = vmatprep.subr.bf16.mxu0 0
      %321 = vmatpush1.bf16.msra.mxu0 0
      %322 = vmatprep.subr.bf16.mxu0 0
      %323 = vmatpush1.bf16.msra.mxu0 0
      %324 = vmatprep.subr.bf16.mxu0 0
      %325 = vmatpush1.bf16.msra.mxu0 0
      %326 = vmatprep.subr.bf16.mxu0 0
      %327 = vmatpush1.bf16.msra.mxu0 0
      %328 = vmatprep.subr.bf16.mxu0 0
      %329 = vmatpush1.bf16.msra.mxu0 0
      %330 = vmatprep.subr.bf16.mxu0 0
      %331 = vmatpush1.bf16.msra.mxu0 0
      %332 = vmatprep.subr.bf16.mxu0 0
      %333 = vmatpush1.bf16.msra.mxu0 0
      %334 = vmatprep.subr.bf16.mxu0 0
      %335 = vmatpush1.bf16.msra.mxu0 0
      %336 = vmatprep.subr.bf16.mxu0 0
      %337 = vmatpush1.bf16.msra.mxu0 0
      %338 = vmatprep.subr.bf16.mxu0 0
      %339 = vmatpush1.bf16.msra.mxu0 0
      %340 = vmatprep.subr.bf16.mxu0 0
      %341 = vmatpush1.bf16.msra.mxu0 0
      %342 = vmatprep.subr.bf16.mxu0 0
      %343 = vmatpush1.bf16.msra.mxu0 0
      %344 = vmatprep.subr.bf16.mxu0 0
      %345 = vmatpush1.bf16.msra.mxu0 0
      %346 = vmatprep.subr.bf16.mxu0 0
      %347 = vmatpush1.bf16.msra.mxu0 0
      %348 = vmatprep.mubr.bf16.mxu0 0
      %349 = vmatmul.mubr.bf16.gmra.mrb[0].mxu0 %v310
      %v350 = vpop.f32.mrb[0].mxu0
      %v351 = vadd.f32 0.0, %v350
      %v352 = vpop.f32.mrb[0].mxu0
      %v353 = vpop.f32.mrb[0].mxu0
      %v354 = vpop.f32.mrb[0].mxu0
      %355 = vdwg.mxu0
      %356 = vst.msk [vmem:[#allocation2] sm:$0xff] %vm246, %v351
      %358 = vrot.lane.b32.xlu0 %v244, 120
      %v359 = vpop.permute.xlu0 %358
      %360 = vrot.lane.b32.xlu0 %v245, 120
      %v361 = vpop.permute.xlu0 %360
      %v363 = vsel %vm246, %v359, 0
      %v366 = vsel %vm246, %v361, 0
      %368 = vmatprep.subr.bf16.mxu0 0
      %369 = vmatpush1.bf16.xpose.msra.mxu0 %v366
      %370 = vmatprep.subr.bf16.mxu0 0
      %371 = vmatpush1.bf16.xpose.msra.mxu0 0
      %372 = vmatprep.subr.bf16.mxu0 0
      %373 = vmatpush1.bf16.xpose.msra.mxu0 0
      %374 = vmatprep.subr.bf16.mxu0 0
      %375 = vmatpush1.bf16.xpose.msra.mxu0 0
      %376 = vmatprep.subr.bf16.mxu0 0
      %377 = vmatpush1.bf16.xpose.msra.mxu0 0
      %378 = vmatprep.subr.bf16.mxu0 0
      %379 = vmatpush1.bf16.xpose.msra.mxu0 0
      %380 = vmatprep.subr.bf16.mxu0 0
      %381 = vmatpush1.bf16.xpose.msra.mxu0 0
      %382 = vmatprep.subr.bf16.mxu0 0
      %383 = vmatpush1.bf16.xpose.msra.mxu0 0
      %384 = vmatprep.subr.bf16.mxu0 0
      %385 = vmatpush1.bf16.xpose.msra.mxu0 0
      %386 = vmatprep.subr.bf16.mxu0 0
      %387 = vmatpush1.bf16.xpose.msra.mxu0 0
      %388 = vmatprep.subr.bf16.mxu0 0
      %389 = vmatpush1.bf16.xpose.msra.mxu0 0
      %390 = vmatprep.subr.bf16.mxu0 0
      %391 = vmatpush1.bf16.xpose.msra.mxu0 0
      %392 = vmatprep.subr.bf16.mxu0 0
      %393 = vmatpush1.bf16.xpose.msra.mxu0 0
      %394 = vmatprep.subr.bf16.mxu0 0
      %395 = vmatpush1.bf16.xpose.msra.mxu0 0
      %396 = vmatprep.subr.bf16.mxu0 0
      %397 = vmatpush1.bf16.xpose.msra.mxu0 0
      %398 = vmatprep.subr.bf16.mxu0 0
      %399 = vmatpush1.bf16.xpose.msra.mxu0 0
      %400 = vmatprep.mubr.bf16.mxu0 0
      %401 = vmatmul.mubr.bf16.gmra.mrb[0].mxu0 %v363
      %v402 = vpop.f32.mrb[0].mxu0
      %v403 = vadd.f32 0.0, %v402
      %v404 = vpop.f32.mrb[0].mxu0
      %v405 = vpop.f32.mrb[0].mxu0
      %v406 = vpop.f32.mrb[0].mxu0
      %407 = vdwg.mxu0
      %v408 = vmul.f32 %v403, 0.35355338
      %v409 = vsel %vm246, %v408, -inf
      %410 = vmax.xlane.f32.xlu0 %v409
      %v411 = vpop.xlane.xlu0 %410
      %v412 = vsub.f32 %v408, %v411
      %v413 = vmul.f32 %v412, 1.442695
      %v414 = vpow.pop %v413
      %v415 = vsel %vm246, %v414, 0.0
      %416 = vadd.xlane.f32.xlu0 %v415
      %v417 = vpop.xlane.xlu0 %416
      %v418 = vrcp.pop %v417
      %v419 = vmul.f32 %v414, %v418
      %v420 = vpack.c.bf16 %v419, %v419
      %421 = vrot.lane.b32.xlu0 %v245, 88
      %v422 = vpop.permute.xlu0 %421
      %v424 = vsel %vm246, %v420, 0
      %v427 = vsel %vm312, %v422, 0
      %429 = vmatprep.subr.bf16.mxu0 0
      %430 = vmatpush1.bf16.msra.mxu0 %v427
      %431 = vmatprep.subr.bf16.mxu0 0
      %432 = vmatpush1.bf16.msra.mxu0 0
      %433 = vmatprep.subr.bf16.mxu0 0
      %434 = vmatpush1.bf16.msra.mxu0 0
      %435 = vmatprep.subr.bf16.mxu0 0
      %436 = vmatpush1.bf16.msra.mxu0 0
      %437 = vmatprep.subr.bf16.mxu0 0
      %438 = vmatpush1.bf16.msra.mxu0 0
      %439 = vmatprep.subr.bf16.mxu0 0
      %440 = vmatpush1.bf16.msra.mxu0 0
      %441 = vmatprep.subr.bf16.mxu0 0
      %442 = vmatpush1.bf16.msra.mxu0 0
      %443 = vmatprep.subr.bf16.mxu0 0
      %444 = vmatpush1.bf16.msra.mxu0 0
      %445 = vmatprep.subr.bf16.mxu0 0
      %446 = vmatpush1.bf16.msra.mxu0 0
      %447 = vmatprep.subr.bf16.mxu0 0
      %448 = vmatpush1.bf16.msra.mxu0 0
      %449 = vmatprep.subr.bf16.mxu0 0
      %450 = vmatpush1.bf16.msra.mxu0 0
      %451 = vmatprep.subr.bf16.mxu0 0
      %452 = vmatpush1.bf16.msra.mxu0 0
      %453 = vmatprep.subr.bf16.mxu0 0
      %454 = vmatpush1.bf16.msra.mxu0 0
      %455 = vmatprep.subr.bf16.mxu0 0
      %456 = vmatpush1.bf16.msra.mxu0 0
      %457 = vmatprep.subr.bf16.mxu0 0
      %458 = vmatpush1.bf16.msra.mxu0 0
      %459 = vmatprep.subr.bf16.mxu0 0
      %460 = vmatpush1.bf16.msra.mxu0 0
      %461 = vmatprep.mubr.bf16.mxu0 0
      %462 = vmatmul.mubr.bf16.gmra.mrb[0].mxu0 %v424
      %v463 = vpop.f32.mrb[0].mxu0
      %v464 = vadd.f32 0.0, %v463
      %v465 = vpop.f32.mrb[0].mxu0
      %v466 = vpop.f32.mrb[0].mxu0
      %v467 = vpop.f32.mrb[0].mxu0
      %468 = vdwg.mxu0
      %470 = vrot.lane.b32.xlu0 %v464, 8
      %v471 = vpop.permute.xlu0 %470
      %vm473 = vcmask 130112
      %474 = vst.msk [vmem:[#allocation2] sm:$0xff] %vm473, %v471
      %475 = vrot.lane.b32.xlu0 %v244, 112
      %v476 = vpop.permute.xlu0 %475
      %477 = vrot.lane.b32.xlu0 %v245, 112
      %v478 = vpop.permute.xlu0 %477
      %v480 = vsel %vm246, %v476, 0
      %v483 = vsel %vm246, %v478, 0
      %485 = vmatprep.subr.bf16.mxu0 0
      %486 = vmatpush1.bf16.xpose.msra.mxu0 %v483
      %487 = vmatprep.subr.bf16.mxu0 0
      %488 = vmatpush1.bf16.xpose.msra.mxu0 0
      %489 = vmatprep.subr.bf16.mxu0 0
      %490 = vmatpush1.bf16.xpose.msra.mxu0 0
      %491 = vmatprep.subr.bf16.mxu0 0
      %492 = vmatpush1.bf16.xpose.msra.mxu0 0
      %493 = vmatprep.subr.bf16.mxu0 0
      %494 = vmatpush1.bf16.xpose.msra.mxu0 0
      %495 = vmatprep.subr.bf16.mxu0 0
      %496 = vmatpush1.bf16.xpose.msra.mxu0 0
      %497 = vmatprep.subr.bf16.mxu0 0
      %498 = vmatpush1.bf16.xpose.msra.mxu0 0
      %499 = vmatprep.subr.bf16.mxu0 0
      %500 = vmatpush1.bf16.xpose.msra.mxu0 0
      %501 = vmatprep.subr.bf16.mxu0 0
      %502 = vmatpush1.bf16.xpose.msra.mxu0 0
      %503 = vmatprep.subr.bf16.mxu0 0
      %504 = vmatpush1.bf16.xpose.msra.mxu0 0
      %505 = vmatprep.subr.bf16.mxu0 0
      %506 = vmatpush1.bf16.xpose.msra.mxu0 0
      %507 = vmatprep.subr.bf16.mxu0 0
      %508 = vmatpush1.bf16.xpose.msra.mxu0 0
      %509 = vmatprep.subr.bf16.mxu0 0
      %510 = vmatpush1.bf16.xpose.msra.mxu0 0
      %511 = vmatprep.subr.bf16.mxu0 0
      %512 = vmatpush1.bf16.xpose.msra.mxu0 0
      %513 = vmatprep.subr.bf16.mxu0 0
      %514 = vmatpush1.bf16.xpose.msra.mxu0 0
      %515 = vmatprep.subr.bf16.mxu0 0
      %516 = vmatpush1.bf16.xpose.msra.mxu0 0
      %517 = vmatprep.mubr.bf16.mxu0 0
      %518 = vmatmul.mubr.bf16.gmra.mrb[0].mxu0 %v480
      %v519 = vpop.f32.mrb[0].mxu0
      %v520 = vadd.f32 0.0, %v519
      %v521 = vpop.f32.mrb[0].mxu0
      %v522 = vpop.f32.mrb[0].mxu0
      %v523 = vpop.f32.mrb[0].mxu0
      %524 = vdwg.mxu0
      %v525 = vmul.f32 %v520, 0.35355338
      %v526 = vsel %vm246, %v525, -inf
      %527 = vmax.xlane.f32.xlu0 %v526
      %v528 = vpop.xlane.xlu0 %527
      %v529 = vsub.f32 %v525, %v528
      %v530 = vmul.f32 %v529, 1.442695
      %v531 = vpow.pop %v530
      %v532 = vsel %vm246, %v531, 0.0
      %533 = vadd.xlane.f32.xlu0 %v532
      %v534 = vpop.xlane.xlu0 %533
      %v535 = vrcp.pop %v534
      %v536 = vmul.f32 %v531, %v535
      %v537 = vpack.c.bf16 %v536, %v536
      %538 = vrot.lane.b32.xlu0 %v245, 80
      %v539 = vpop.permute.xlu0 %538
      %v541 = vsel %vm246, %v537, 0
      %v544 = vsel %vm312, %v539, 0
      %546 = vmatprep.subr.bf16.mxu0 0
      %547 = vmatpush1.bf16.msra.mxu0 %v544
      %548 = vmatprep.subr.bf16.mxu0 0
      %549 = vmatpush1.bf16.msra.mxu0 0
      %550 = vmatprep.subr.bf16.mxu0 0
      %551 = vmatpush1.bf16.msra.mxu0 0
      %552 = vmatprep.subr.bf16.mxu0 0
      %553 = vmatpush1.bf16.msra.mxu0 0
      %554 = vmatprep.subr.bf16.mxu0 0
      %555 = vmatpush1.bf16.msra.mxu0 0
      %556 = vmatprep.subr.bf16.mxu0 0
      %557 = vmatpush1.bf16.msra.mxu0 0
      %558 = vmatprep.subr.bf16.mxu0 0
      %559 = vmatpush1.bf16.msra.mxu0 0
      %560 = vmatprep.subr.bf16.mxu0 0
      %561 = vmatpush1.bf16.msra.mxu0 0
      %562 = vmatprep.subr.bf16.mxu0 0
      %563 = vmatpush1.bf16.msra.mxu0 0
      %564 = vmatprep.subr.bf16.mxu0 0
      %565 = vmatpush1.bf16.msra.mxu0 0
      %566 = vmatprep.subr.bf16.mxu0 0
      %567 = vmatpush1.bf16.msra.mxu0 0
      %568 = vmatprep.subr.bf16.mxu0 0
      %569 = vmatpush1.bf16.msra.mxu0 0
      %570 = vmatprep.subr.bf16.mxu0 0
      %571 = vmatpush1.bf16.msra.mxu0 0
      %572 = vmatprep.subr.bf16.mxu0 0
      %573 = vmatpush1.bf16.msra.mxu0 0
      %574 = vmatprep.subr.bf16.mxu0 0
      %575 = vmatpush1.bf16.msra.mxu0 0
      %576 = vmatprep.subr.bf16.mxu0 0
      %577 = vmatpush1.bf16.msra.mxu0 0
      %578 = vmatprep.mubr.bf16.mxu0 0
      %579 = vmatmul.mubr.bf16.gmra.mrb[0].mxu0 %v541
      %v580 = vpop.f32.mrb[0].mxu0
      %v581 = vadd.f32 0.0, %v580
      %v582 = vpop.f32.mrb[0].mxu0
      %v583 = vpop.f32.mrb[0].mxu0
      %v584 = vpop.f32.mrb[0].mxu0
      %585 = vdwg.mxu0
      %587 = vrot.lane.b32.xlu0 %v581, 16
      %v588 = vpop.permute.xlu0 %587
      %vm590 = vcmask 195712
      %591 = vst.msk [vmem:[#allocation2] sm:$0xff] %vm590, %v588
      %592 = vrot.lane.b32.xlu0 %v244, 104
      %v593 = vpop.permute.xlu0 %592
      %594 = vrot.lane.b32.xlu0 %v245, 104
      %v595 = vpop.permute.xlu0 %594
      %v597 = vsel %vm246, %v593, 0
      %v600 = vsel %vm246, %v595, 0
      %602 = vmatprep.subr.bf16.mxu0 0
      %603 = vmatpush1.bf16.xpose.msra.mxu0 %v600
      %604 = vmatprep.subr.bf16.mxu0 0
      %605 = vmatpush1.bf16.xpose.msra.mxu0 0
      %606 = vmatprep.subr.bf16.mxu0 0
      %607 = vmatpush1.bf16.xpose.msra.mxu0 0
      %608 = vmatprep.subr.bf16.mxu0 0
      %609 = vmatpush1.bf16.xpose.msra.mxu0 0
      %610 = vmatprep.subr.bf16.mxu0 0
      %611 = vmatpush1.bf16.xpose.msra.mxu0 0
      %612 = vmatprep.subr.bf16.mxu0 0
      %613 = vmatpush1.bf16.xpose.msra.mxu0 0
      %614 = vmatprep.subr.bf16.mxu0 0
      %615 = vmatpush1.bf16.xpose.msra.mxu0 0
      %616 = vmatprep.subr.bf16.mxu0 0
      %617 = vmatpush1.bf16.xpose.msra.mxu0 0
      %618 = vmatprep.subr.bf16.mxu0 0
      %619 = vmatpush1.bf16.xpose.msra.mxu0 0
      %620 = vmatprep.subr.bf16.mxu0 0
      %621 = vmatpush1.bf16.xpose.msra.mxu0 0
      %622 = vmatprep.subr.bf16.mxu0 0
      %623 = vmatpush1.bf16.xpose.msra.mxu0 0
      %624 = vmatprep.subr.bf16.mxu0 0
      %625 = vmatpush1.bf16.xpose.msra.mxu0 0
      %626 = vmatprep.subr.bf16.mxu0 0
      %627 = vmatpush1.bf16.xpose.msra.mxu0 0
      %628 = vmatprep.subr.bf16.mxu0 0
      %629 = vmatpush1.bf16.xpose.msra.mxu0 0
      %630 = vmatprep.subr.bf16.mxu0 0
      %631 = vmatpush1.bf16.xpose.msra.mxu0 0
      %632 = vmatprep.subr.bf16.mxu0 0
      %633 = vmatpush1.bf16.xpose.msra.mxu0 0
      %634 = vmatprep.mubr.bf16.mxu0 0
      %635 = vmatmul.mubr.bf16.gmra.mrb[0].mxu0 %v597
      %v636 = vpop.f32.mrb[0].mxu0
      %v637 = vadd.f32 0.0, %v636
      %v638 = vpop.f32.mrb[0].mxu0
      %v639 = vpop.f32.mrb[0].mxu0
      %v640 = vpop.f32.mrb[0].mxu0
      %641 = vdwg.mxu0
      %v642 = vmul.f32 %v637, 0.35355338
      %v643 = vsel %vm246, %v642, -inf
      %644 = vmax.xlane.f32.xlu0 %v643
      %v645 = vpop.xlane.xlu0 %644
      %v646 = vsub.f32 %v642, %v645
      %v647 = vmul.f32 %v646, 1.442695
      %v648 = vpow.pop %v647
      %v649 = vsel %vm246, %v648, 0.0
      %650 = vadd.xlane.f32.xlu0 %v649
      %v651 = vpop.xlane.xlu0 %650
      %v652 = vrcp.pop %v651
      %v653 = vmul.f32 %v648, %v652
      %v654 = vpack.c.bf16 %v653, %v653
      %655 = vrot.lane.b32.xlu0 %v245, 72
      %v656 = vpop.permute.xlu0 %655
      %v658 = vsel %vm246, %v654, 0
      %v661 = vsel %vm312, %v656, 0
      %663 = vmatprep.subr.bf16.mxu0 0
      %664 = vmatpush1.bf16.msra.mxu0 %v661
      %665 = vmatprep.subr.bf16.mxu0 0
      %666 = vmatpush1.bf16.msra.mxu0 0
      %667 = vmatprep.subr.bf16.mxu0 0
      %668 = vmatpush1.bf16.msra.mxu0 0
      %669 = vmatprep.subr.bf16.mxu0 0
      %670 = vmatpush1.bf16.msra.mxu0 0
      %671 = vmatprep.subr.bf16.mxu0 0
      %672 = vmatpush1.bf16.msra.mxu0 0
      %673 = vmatprep.subr.bf16.mxu0 0
      %674 = vmatpush1.bf16.msra.mxu0 0
      %675 = vmatprep.subr.bf16.mxu0 0
      %676 = vmatpush1.bf16.msra.mxu0 0
      %677 = vmatprep.subr.bf16.mxu0 0
      %678 = vmatpush1.bf16.msra.mxu0 0
      %679 = vmatprep.subr.bf16.mxu0 0
      %680 = vmatpush1.bf16.msra.mxu0 0
      %681 = vmatprep.subr.bf16.mxu0 0
      %682 = vmatpush1.bf16.msra.mxu0 0
      %683 = vmatprep.subr.bf16.mxu0 0
      %684 = vmatpush1.bf16.msra.mxu0 0
      %685 = vmatprep.subr.bf16.mxu0 0
      %686 = vmatpush1.bf16.msra.mxu0 0
      %687 = vmatprep.subr.bf16.mxu0 0
      %688 = vmatpush1.bf16.msra.mxu0 0
      %689 = vmatprep.subr.bf16.mxu0 0
      %690 = vmatpush1.bf16.msra.mxu0 0
      %691 = vmatprep.subr.bf16.mxu0 0
      %692 = vmatpush1.bf16.msra.mxu0 0
      %693 = vmatprep.subr.bf16.mxu0 0
      %694 = vmatpush1.bf16.msra.mxu0 0
      %695 = vmatprep.mubr.bf16.mxu0 0
      %696 = vmatmul.mubr.bf16.gmra.mrb[0].mxu0 %v658
      %v697 = vpop.f32.mrb[0].mxu0
      %v698 = vadd.f32 0.0, %v697
      %v699 = vpop.f32.mrb[0].mxu0
      %v700 = vpop.f32.mrb[0].mxu0
      %v701 = vpop.f32.mrb[0].mxu0
      %702 = vdwg.mxu0
      %704 = vrot.lane.b32.xlu0 %v698, 24
      %v705 = vpop.permute.xlu0 %704
      %vm707 = vcmask 261312
      %708 = vst.msk [vmem:[#allocation2] sm:$0xff] %vm707, %v705
      %v709 = vld [vmem:[#allocation2] sm:$0xff]
      %v710 = vld [vmem:[%s2] sm:$0xf]
      %v711 = vld [vmem:[%s2 + $0x4] sm:$0xf]
      %v712 = vld [vmem:[%s2 + $0x8] sm:$0xf]
      %v713 = vld [vmem:[%s2 + $0xc] sm:$0xf]
      %v714 = vpack.c.bf16 %v709, %v709
      %v715 = vld [vmem:[%s3] sm:$0x1]
      %v717 = vlaneseq
      %v718 = vshrl.u32 %v717, 7
      %v719 = vsub.s32 0, %v718
      %v720 = vrot.slane %v715, %v719
      %v726 = vunpack.c.l.b16 %v710
      %v727 = vunpack.c.l.b16 %v711
      %v728 = vunpack.c.l.b16 %v712
      %v729 = vunpack.c.l.b16 %v713
      %v730 = vpack.c.b16 %v727, %v726
      %v731 = vpack.c.b16 %v729, %v728
      %vm734 = vcmask 261120
      %v736 = vsel %vm734, %v714, 0
      %738 = vmatprep.subr.bf16.mxu0 0
      %739 = vmatpush1.bf16.msra.mxu0 %v730
      %740 = vmatprep.subr.bf16.mxu0 0
      %741 = vmatpush1.bf16.msra.mxu0 %v731
      %742 = vmatprep.subr.bf16.mxu0 0
      %743 = vmatpush1.bf16.msra.mxu0 0
      %744 = vmatprep.subr.bf16.mxu0 0
      %745 = vmatpush1.bf16.msra.mxu0 0
      %746 = vmatprep.subr.bf16.mxu0 0
      %747 = vmatpush1.bf16.msra.mxu0 0
      %748 = vmatprep.subr.bf16.mxu0 0
      %749 = vmatpush1.bf16.msra.mxu0 0
      %750 = vmatprep.subr.bf16.mxu0 0
      %751 = vmatpush1.bf16.msra.mxu0 0
      %752 = vmatprep.subr.bf16.mxu0 0
      %753 = vmatpush1.bf16.msra.mxu0 0
      %754 = vmatprep.subr.bf16.mxu0 0
      %755 = vmatpush1.bf16.msra.mxu0 0
      %756 = vmatprep.subr.bf16.mxu0 0
      %757 = vmatpush1.bf16.msra.mxu0 0
      %758 = vmatprep.subr.bf16.mxu0 0
      %759 = vmatpush1.bf16.msra.mxu0 0
      %760 = vmatprep.subr.bf16.mxu0 0
      %761 = vmatpush1.bf16.msra.mxu0 0
      %762 = vmatprep.subr.bf16.mxu0 0
      %763 = vmatpush1.bf16.msra.mxu0 0
      %764 = vmatprep.subr.bf16.mxu0 0
      %765 = vmatpush1.bf16.msra.mxu0 0
      %766 = vmatprep.subr.bf16.mxu0 0
      %767 = vmatpush1.bf16.msra.mxu0 0
      %768 = vmatprep.subr.bf16.mxu0 0
      %769 = vmatpush1.bf16.msra.mxu0 0
      %770 = vmatprep.mubr.bf16.mxu0 0
      %771 = vmatmul.mubr.bf16.gmra.mrb[0].mxu0 %v736
      %v772 = vpop.f32.mrb[0].mxu0
      %v773 = vadd.f32 %v720, %v772
      %v774 = vpop.f32.mrb[0].mxu0
      %v775 = vpop.f32.mrb[0].mxu0
      %v776 = vpop.f32.mrb[0].mxu0
      %777 = vdwg.mxu0
      %778 = vst.msk [vmem:[%s240] sm:$0xff] %vm734, %v773
      %p779 = scmp.lt.s32.totalorder %s19, 1
      %s780 = scalar_select %p779, %s19, 1
      %p781 = scmp.lt.s32.totalorder %s20, 0
      %s782 = scalar_select %p781, %s20, 0
      %s783 = sadd.s32 %s782, %s780
      %s784 = smul.addr %s783, 8
      %s785 = scalar_lea.vmem %s4, %s784
      // Predicated region
      $region37: #{encoder_forward.37} parent=35 // pred_check
        %p786 = pneg %p143
      $region38: #{encoder_forward.37} parent=35 // pred_check_branch
        %788 = sbr.rel (%p786) target = $region40
      $region39: #{encoder_forward.37} parent=35 // pred_region
        _
      $region40: #{encoder_forward.37} parent=35 // pred_fallthru
        _
    $region36: #{encoder_forward.37} parent=5 // pred_fallthru
      _
    %p789 = scmp.le.s32.totalorder 2, %s10
    // Predicated region
    $region41: #{encoder_forward.37} parent=5 // pred_check
      %p790 = pneg %p789
    $region42: #{encoder_forward.37} parent=5 // pred_check_branch
      %792 = sbr.rel (%p790) target = $region44
    $region43: #{encoder_forward.37} parent=5 // pred_region
      %s793 = ssub.s32 %s10, 2
      // Predicated region
      $region45: #{encoder_forward.37} parent=43 // pred_check
        %p794 = pneg %p149
      $region46: #{encoder_forward.37} parent=43 // pred_check_branch
        %796 = sbr.rel (%p794) target = $region48
      $region47: #{encoder_forward.37} parent=43 // pred_region
        %p797 = scmp.lt.s32.totalorder %s21, 1
        %s798 = scalar_select %p797, %s21, 1
        %p799 = scmp.lt.s32.totalorder %s22, 0
        %s800 = scalar_select %p799, %s22, 0
        %s801 = sadd.s32 %s800, %s798
        %s802 = smul.addr %s801, 8
        %s803 = scalar_lea.vmem %s4, %s802
      $region48: #{encoder_forward.37} parent=43 // pred_fallthru
        _
    $region44: #{encoder_forward.37} parent=5 // pred_fallthru
      _
  $region6: #{encoder_forward.37} parent=0 // loop_footer
    %s14 = sadd.s32 1, %s10
  $region7: #{encoder_forward.37} parent=0 // loop_footer_branch
    %9 = sbr.rel target = $region3
  $region8: #{encoder_forward.37} parent=0 // loop_exit
    _

</llo_original>
